<compile_context>
chip_gen: v7x
topology: tpu7x:2x2x1
jax: 0.10.0
libtpu: 0.0.40
codegen_flags: <defaults>
</compile_context>

<pallas_src>
import jax
import jax.numpy as jnp
import numpy as np
from jax.experimental import pallas as pl
from jax.experimental.pallas import tpu as pltpu

EPS = 1e-5       # PyTorch GroupNorm default eps
SLOPE = 0.01     # LeakyReLU negative slope


def _round_up(x, m):
    return (x + m - 1) // m * m


def _vmem_limit_bytes():
    # ~85% of physical per-core VMEM: ~109 MiB on v5e/v6e (128 MiB), ~54 MiB on v7x (64 MiB).
    try:
        cap = int(pltpu.get_tpu_info().vmem_capacity_bytes)
    except Exception:
        cap = 64 * 1024 * 1024          # conservative fallback
    return max(int(cap * 0.85), 32 * 1024 * 1024)


# ---------------------------------------------------------------------------
# Fused Pallas kernel (closure over static geometry)
# ---------------------------------------------------------------------------
def _make_kernel(Cin, Cout, P, Sp, SPAN, MARGIN, S, shifts):
    inv_n = 1.0 / float(S)

    def kernel(x_ref, mask_ref, wg1_ref, wg2_ref, ws_ref, pv_ref, out_ref,
               y1_ref, cs_ref):
        m = mask_ref[...] > 0.0                      # (1, Sp)  interior-voxel mask
        pv = pv_ref[...]                             # (Cout, 8) packed per-channel params
        b1, g1, be1 = pv[:, 0:1], pv[:, 1:2], pv[:, 2:3]
        b2, g2, be2 = pv[:, 3:4], pv[:, 4:5], pv[:, 5:6]
        bs = pv[:, 6:7]

        def gn_lrelu(h, gamma, beta):
            # GroupNorm with num_groups == C: per-channel stats over interior voxels,
            # single pass (sum / sumsq) in f32, variance clamped at 0.
            hm = jnp.where(m, h, 0.0)                # NaN-safe interior select
            s1 = jnp.sum(hm, axis=1, keepdims=True)
            s2 = jnp.sum(hm * hm, axis=1, keepdims=True)
            mean = s1 * inv_n
            var = jnp.maximum(s2 * inv_n - mean * mean, 0.0)
            hn = (h - mean) * jax.lax.rsqrt(var + EPS) * gamma + beta
            return jnp.where(hn > 0, hn, SLOPE * hn)

        def conv3x3x3(src_ref, w_ref, nrows):
            # Stack the 9 (kh,kw)-shifted copies of src along the contraction dim
            # (the only lane-misaligned copies, |shift| <= Wp+1), then 3 lane-aligned
            # MXU dots over kd with K = 9*nrows, accumulated in f32.
            for g, s in enumerate(shifts):           # static unroll
                cs_ref[g * nrows:(g + 1) * nrows, :] = src_ref[:, P + s:P + s + SPAN]
            acc = jnp.dot(w_ref[0], cs_ref[0:9 * nrows, 0:Sp],
                          preferred_element_type=jnp.float32)
            for kd in range(1, 3):                   # kd*P is a multiple of 128
                acc = acc + jnp.dot(w_ref[kd],
                                    cs_ref[0:9 * nrows, kd * P:kd * P + Sp],
                                    preferred_element_type=jnp.float32)
            return acc

        # ---- conv1 -> GN1 -> LeakyReLU ----
        h1 = gn_lrelu(conv3x3x3(x_ref, wg1_ref, Cin) + b1, g1, be1)
        # Interior mask doubles as conv2's zero padding (ring + plane-stride pad -> 0).
        y1_ref[:, MARGIN:MARGIN + Sp] = jnp.where(m, h1, 0.0).astype(y1_ref.dtype)
        # y1 margins are intentionally left uninitialized: conv2 only reads them when
        # producing non-interior output positions, which are masked out of the GN2
        # statistics and discarded by the wrapper's final interior slice.

        # ---- conv2 -> GN2 -> LeakyReLU (y1 never leaves VMEM) ----
        h2 = gn_lrelu(conv3x3x3(y1_ref, wg2_ref, Cout) + b2, g2, be2)

        # ---- 1x1x1 skip conv + residual add (aligned slice, lane-dense f32 store) ----
        sk = jnp.dot(ws_ref[...], x_ref[:, MARGIN:MARGIN + Sp],
                     preferred_element_type=jnp.float32) + bs
        out_ref[...] = (h2 + sk).astype(out_ref.dtype)

    return kernel


# ---------------------------------------------------------------------------
# Wrapper
# ---------------------------------------------------------------------------
def residual_block_pallas(x_ncdhw, params):
    N, Cin, D, H, W = x_ncdhw.shape
    Cout = params["b1"].shape[0]
    Dp, Hp, Wp = D + 2, H + 2, W + 2
    PLANE = Hp * Wp
    P = _round_up(PLANE, 128)           # 128-lane-aligned plane stride
    MARGIN = 2 * P                      # >= P + Wp + 1, multiple of P (and of 128)
    Sp = Dp * P                         # padded-volume span the kernel computes over
    SPAN = Sp + 2 * P                   # span of the stacked activation buffer
    L = Sp + 2 * MARGIN                 # flat buffer length per channel (== (Dp+4)*P)
    S = D * H * W                       # true voxel count (GroupNorm normalizer)
    Cmax = max(Cin, Cout)

    # TODO(synk): for volumes whose bf16 slabs exceed VMEM (large D,H,W with C >= 64),
    # add a depth-tiled grid axis with halos and a two-pass GroupNorm; on v7x (64 MiB
    # VMEM, 2 TCs) this fallback kicks in at ~half the volume of v5e/v6e and would
    # also give both TensorCores work when N == 1.

    # ---- flatten to the plane-strided layout: one ring pad + one joint pad ----
    xw = jnp.pad(x_ncdhw.astype(jnp.float32),
                 ((0, 0), (0, 0), (0, 0), (1, 1), (1, 1)))        # H/W ring only
    xflat = jnp.pad(xw.reshape(N, Cin, D, PLANE),
                    ((0, 0), (0, 0), (3, 3), (0, P - PLANE)))     # D-ring + margins + plane pad
    xflat = xflat.reshape(N, Cin, L).astype(jnp.bfloat16)

    # interior-voxel mask over the flat plane-strided domain (static -> numpy)
    mplane = np.zeros((Hp, Wp), np.float32)
    mplane[1:1 + H, 1:1 + W] = 1.0
    mvol = np.zeros((Dp, P), np.float32)
    mvol[1:1 + D, :PLANE] = mplane.reshape(-1)
    mask = jnp.asarray(mvol.reshape(1, Sp))

    # conv weights (Cout, C, 3,3,3) -> per-kd grouped (3, Cout, 9*C), g = kh*3 + kw
    wg1 = jnp.transpose(params["w1"], (2, 0, 3, 4, 1)).reshape(3, Cout, 9 * Cin)
    wg2 = jnp.transpose(params["w2"], (2, 0, 3, 4, 1)).reshape(3, Cout, 9 * Cout)
    ws = params["ws"].reshape(Cout, Cin)

    # pack the seven per-channel vectors into one (Cout, 8) array (single small DMA)
    pvec = jnp.stack([params["b1"], params["g1"], params["be1"],
                      params["b2"], params["g2"], params["be2"],
                      params["bs"], jnp.zeros_like(params["b1"])], axis=1)

    shifts = tuple((kh - 1) * Wp + (kw - 1) for kh in range(3) for kw in range(3))
    kernel = _make_kernel(Cin, Cout, P, Sp, SPAN, MARGIN, S, shifts)

    out_p = pl.pallas_call(
        kernel,
        out_shape=jax.ShapeDtypeStruct((N, Cout, Sp), jnp.float32),
        grid=(N,),
        in_specs=[
            pl.BlockSpec((None, Cin, L), lambda n: (n, 0, 0)),        # flat input (bf16)
            pl.BlockSpec((1, Sp), lambda n: (0, 0)),                  # interior mask
            pl.BlockSpec((3, Cout, 9 * Cin), lambda n: (0, 0, 0)),    # conv1 grouped taps
            pl.BlockSpec((3, Cout, 9 * Cout), lambda n: (0, 0, 0)),   # conv2 grouped taps
            pl.BlockSpec((Cout, Cin), lambda n: (0, 0)),              # skip 1x1x1 weight
            pl.BlockSpec((Cout, 8), lambda n: (0, 0)),                # packed channel params
        ],
        out_specs=pl.BlockSpec((None, Cout, Sp), lambda n: (n, 0, 0)),
        scratch_shapes=[
            pltpu.VMEM((Cout, L), jnp.bfloat16),            # resident y1 (with margins)
            pltpu.VMEM((9 * Cmax, SPAN), jnp.bfloat16),     # shared stacked-activation buffer
        ],
        compiler_params=pltpu.CompilerParams(
            dimension_semantics=("parallel",),
            vmem_limit_bytes=_vmem_limit_bytes()),
    )(xflat, mask,
      wg1.astype(jnp.bfloat16), wg2.astype(jnp.bfloat16),
      ws.astype(jnp.bfloat16), pvec.astype(jnp.float32))

    # drop margins / plane padding / ring -> (N, Cout, D, H, W), already NCDHW
    out = out_p.reshape(N, Cout, Dp, P)[:, :, 1:1 + D, :PLANE]
    out = out.reshape(N, Cout, D, Hp, Wp)[:, :, :, 1:1 + H, 1:1 + W]
    return out


# ---------------------------------------------------------------------------
# Pure-JAX reference (matches PyTorch semantics) for verification
# ---------------------------------------------------------------------------
def residual_block_ref(x, p):
    def conv3d(x, w, b, pad):
        y = jax.lax.conv_general_dilated(
            x, w, window_strides=(1, 1, 1), padding=[(pad, pad)] * 3,
            dimension_numbers=("NCDHW", "OIDHW", "NCDHW"),
            precision=jax.lax.Precision.HIGHEST)
        return y + b[None, :, None, None, None]

    def gn(x, g, be):
        mean = x.mean(axis=(2, 3, 4), keepdims=True)
        var = ((x - mean) ** 2).mean(axis=(2, 3, 4), keepdims=True)
        xn = (x - mean) * jax.lax.rsqrt(var + EPS)
        return xn * g[None, :, None, None, None] + be[None, :, None, None, None]

    lrelu = lambda v: jnp.where(v > 0, v, SLOPE * v)

    h = lrelu(gn(conv3d(x, p["w1"], p["b1"], 1), p["g1"], p["be1"]))
    h = lrelu(gn(conv3d(h, p["w2"], p["b2"], 1), p["g2"], p["be2"]))
    s = conv3d(x, p["ws"], p["bs"], 0)
    return h + s


# ---------------------------------------------------------------------------
if __name__ == "__main__":
    N, Cin, Cout = 2, 4, 8
    D = H = W = 8

    key = jax.random.PRNGKey(0)
    ks = jax.random.split(key, 12)
    # Pre-round x and conv weights to bf16 (the kernel stores them in bf16 anyway) so
    # the f32 reference sees identical operands; remaining divergence is the kernel's
    # bf16 storage of the intermediate activation y1.
    bf = lambda a: a.astype(jnp.bfloat16).astype(jnp.float32)
    params = {
        "w1": bf(0.1 * jax.random.normal(ks[0], (Cout, Cin, 3, 3, 3), jnp.float32)),
        "b1": 0.1 * jax.random.normal(ks[1], (Cout,), jnp.float32),
        "g1": 1.0 + 0.5 * jax.random.normal(ks[2], (Cout,), jnp.float32),
        "be1": 0.1 * jax.random.normal(ks[3], (Cout,), jnp.float32),
        "w2": bf(0.1 * jax.random.normal(ks[4], (Cout, Cout, 3, 3, 3), jnp.float32)),
        "b2": 0.1 * jax.random.normal(ks[5], (Cout,), jnp.float32),
        "g2": 1.0 + 0.5 * jax.random.normal(ks[6], (Cout,), jnp.float32),
        "be2": 0.1 * jax.random.normal(ks[7], (Cout,), jnp.float32),
        "ws": bf(0.1 * jax.random.normal(ks[8], (Cout, Cin, 1, 1, 1), jnp.float32)),
        "bs": 0.1 * jax.random.normal(ks[9], (Cout,), jnp.float32),
    }
    x = bf(jax.random.normal(ks[10], (N, Cin, D, H, W), jnp.float32))

    out = jax.block_until_ready(residual_block_pallas(x, params))
    ref = jax.block_until_ready(residual_block_ref(x, params))

    assert out.shape == (N, Cout, D, H, W), out.shape
    # bf16 storage of the intermediate activation inside the kernel vs f32 reference
    np.testing.assert_allclose(np.asarray(out), np.asarray(ref), rtol=3e-2, atol=3e-2)
    print("KERNEL_OK")
</pallas_src>

<mosaic_0001>
module attributes {stable_mosaic.version = 11 : i64} {
  func.func @kernel(%arg0: i32, %arg1: memref<1x4x1792xbf16, #tpu.memory_space<vmem>>, %arg2: memref<1x1280xf32, #tpu.memory_space<vmem>>, %arg3: memref<3x8x36xbf16, #tpu.memory_space<vmem>>, %arg4: memref<3x8x72xbf16, #tpu.memory_space<vmem>>, %arg5: memref<8x4xbf16, #tpu.memory_space<vmem>>, %arg6: memref<8x8xf32, #tpu.memory_space<vmem>>, %arg7: memref<1x8x1280xf32, #tpu.memory_space<vmem>>, %arg8: memref<8x1792xbf16, #tpu.memory_space<vmem>>, %arg9: memref<72x1536xbf16, #tpu.memory_space<vmem>>) attributes {dimension_semantics = [#tpu.dimension_semantics<parallel>], iteration_bounds = array<i64: 2>, scalar_prefetch = 0 : i64, scratch_operands = 2 : i64, tpu.core_type = #tpu.core_type<tc>, window_params = [{transform_indices = @transform_0, window_bounds = array<i64: 1, 4, 1792>}, {pipeline_mode = #tpu.pipeline_mode<synchronous>, transform_indices = @transform_1, window_bounds = array<i64: 1, 1280>}, {pipeline_mode = #tpu.pipeline_mode<synchronous>, transform_indices = @transform_2, window_bounds = array<i64: 3, 8, 36>}, {pipeline_mode = #tpu.pipeline_mode<synchronous>, transform_indices = @transform_3, window_bounds = array<i64: 3, 8, 72>}, {pipeline_mode = #tpu.pipeline_mode<synchronous>, transform_indices = @transform_4, window_bounds = array<i64: 8, 4>}, {pipeline_mode = #tpu.pipeline_mode<synchronous>, transform_indices = @transform_5, window_bounds = array<i64: 8, 8>}, {transform_indices = @transform_6, window_bounds = array<i64: 1, 8, 1280>}]} {
    %c0 = arith.constant 0 : index
    %c0_0 = arith.constant 0 : index
    %0 = vector.load %arg2[%c0, %c0_0] : memref<1x1280xf32, #tpu.memory_space<vmem>>, vector<1x1280xf32>
    %cst = arith.constant 0.000000e+00 : f32
    %1 = vector.broadcast %cst : f32 to vector<1x1280xf32>
    %2 = arith.cmpf ogt, %0, %1 : vector<1x1280xf32>
    %c0_1 = arith.constant 0 : index
    %c0_2 = arith.constant 0 : index
    %3 = vector.load %arg6[%c0_1, %c0_2] : memref<8x8xf32, #tpu.memory_space<vmem>>, vector<8x8xf32>
    %4 = vector.extract_strided_slice %3 {offsets = [0, 0], sizes = [8, 1], strides = [1, 1]} : vector<8x8xf32> to vector<8x1xf32>
    %5 = vector.extract_strided_slice %3 {offsets = [0, 1], sizes = [8, 1], strides = [1, 1]} : vector<8x8xf32> to vector<8x1xf32>
    %6 = vector.extract_strided_slice %3 {offsets = [0, 2], sizes = [8, 1], strides = [1, 1]} : vector<8x8xf32> to vector<8x1xf32>
    %7 = vector.extract_strided_slice %3 {offsets = [0, 3], sizes = [8, 1], strides = [1, 1]} : vector<8x8xf32> to vector<8x1xf32>
    %8 = vector.extract_strided_slice %3 {offsets = [0, 4], sizes = [8, 1], strides = [1, 1]} : vector<8x8xf32> to vector<8x1xf32>
    %9 = vector.extract_strided_slice %3 {offsets = [0, 5], sizes = [8, 1], strides = [1, 1]} : vector<8x8xf32> to vector<8x1xf32>
    %10 = vector.extract_strided_slice %3 {offsets = [0, 6], sizes = [8, 1], strides = [1, 1]} : vector<8x8xf32> to vector<8x1xf32>
    %c0_3 = arith.constant 0 : index
    %c0_4 = arith.constant 0 : index
    %c117 = arith.constant 117 : index
    %11 = vector.load %arg1[%c0_3, %c0_4, %c117] : memref<1x4x1792xbf16, #tpu.memory_space<vmem>>, vector<1x4x1536xbf16>
    %12 = vector.shape_cast %11 : vector<1x4x1536xbf16> to vector<4x1536xbf16>
    %c0_5 = arith.constant 0 : index
    %c0_6 = arith.constant 0 : index
    %13 = vector.load %arg9[%c0_5, %c0_6] : memref<72x1536xbf16, #tpu.memory_space<vmem>>, vector<4x1536xbf16>
    tpu.vector_store %arg9[%c0_5, %c0_6], %12 {strides = array<i32>} : memref<72x1536xbf16, #tpu.memory_space<vmem>>, vector<4x1536xbf16>,
    %c0_7 = arith.constant 0 : index
    %c0_8 = arith.constant 0 : index
    %c118 = arith.constant 118 : index
    %14 = vector.load %arg1[%c0_7, %c0_8, %c118] : memref<1x4x1792xbf16, #tpu.memory_space<vmem>>, vector<1x4x1536xbf16>
    %15 = vector.shape_cast %14 : vector<1x4x1536xbf16> to vector<4x1536xbf16>
    %c4 = arith.constant 4 : index
    %c0_9 = arith.constant 0 : index
    %16 = vector.load %arg9[%c4, %c0_9] : memref<72x1536xbf16, #tpu.memory_space<vmem>>, vector<4x1536xbf16>
    tpu.vector_store %arg9[%c4, %c0_9], %15 {strides = array<i32>} : memref<72x1536xbf16, #tpu.memory_space<vmem>>, vector<4x1536xbf16>,
    %c0_10 = arith.constant 0 : index
    %c0_11 = arith.constant 0 : index
    %c119 = arith.constant 119 : index
    %17 = vector.load %arg1[%c0_10, %c0_11, %c119] : memref<1x4x1792xbf16, #tpu.memory_space<vmem>>, vector<1x4x1536xbf16>
    %18 = vector.shape_cast %17 : vector<1x4x1536xbf16> to vector<4x1536xbf16>
    %c8 = arith.constant 8 : index
    %c0_12 = arith.constant 0 : index
    %19 = vector.load %arg9[%c8, %c0_12] : memref<72x1536xbf16, #tpu.memory_space<vmem>>, vector<4x1536xbf16>
    tpu.vector_store %arg9[%c8, %c0_12], %18 {strides = array<i32>} : memref<72x1536xbf16, #tpu.memory_space<vmem>>, vector<4x1536xbf16>,
    %c0_13 = arith.constant 0 : index
    %c0_14 = arith.constant 0 : index
    %c127 = arith.constant 127 : index
    %20 = vector.load %arg1[%c0_13, %c0_14, %c127] : memref<1x4x1792xbf16, #tpu.memory_space<vmem>>, vector<1x4x1536xbf16>
    %21 = vector.shape_cast %20 : vector<1x4x1536xbf16> to vector<4x1536xbf16>
    %c12 = arith.constant 12 : index
    %c0_15 = arith.constant 0 : index
    %22 = vector.load %arg9[%c12, %c0_15] : memref<72x1536xbf16, #tpu.memory_space<vmem>>, vector<4x1536xbf16>
    tpu.vector_store %arg9[%c12, %c0_15], %21 {strides = array<i32>} : memref<72x1536xbf16, #tpu.memory_space<vmem>>, vector<4x1536xbf16>,
    %c0_16 = arith.constant 0 : index
    %c0_17 = arith.constant 0 : index
    %c128 = arith.constant 128 : index
    %23 = vector.load %arg1[%c0_16, %c0_17, %c128] : memref<1x4x1792xbf16, #tpu.memory_space<vmem>>, vector<1x4x1536xbf16>
    %24 = vector.shape_cast %23 : vector<1x4x1536xbf16> to vector<4x1536xbf16>
    %c16 = arith.constant 16 : index
    %c0_18 = arith.constant 0 : index
    %25 = vector.load %arg9[%c16, %c0_18] : memref<72x1536xbf16, #tpu.memory_space<vmem>>, vector<4x1536xbf16>
    tpu.vector_store %arg9[%c16, %c0_18], %24 {strides = array<i32>} : memref<72x1536xbf16, #tpu.memory_space<vmem>>, vector<4x1536xbf16>,
    %c0_19 = arith.constant 0 : index
    %c0_20 = arith.constant 0 : index
    %c129 = arith.constant 129 : index
    %26 = vector.load %arg1[%c0_19, %c0_20, %c129] : memref<1x4x1792xbf16, #tpu.memory_space<vmem>>, vector<1x4x1536xbf16>
    %27 = vector.shape_cast %26 : vector<1x4x1536xbf16> to vector<4x1536xbf16>
    %c20 = arith.constant 20 : index
    %c0_21 = arith.constant 0 : index
    %28 = vector.load %arg9[%c20, %c0_21] : memref<72x1536xbf16, #tpu.memory_space<vmem>>, vector<4x1536xbf16>
    tpu.vector_store %arg9[%c20, %c0_21], %27 {strides = array<i32>} : memref<72x1536xbf16, #tpu.memory_space<vmem>>, vector<4x1536xbf16>,
    %c0_22 = arith.constant 0 : index
    %c0_23 = arith.constant 0 : index
    %c137 = arith.constant 137 : index
    %29 = vector.load %arg1[%c0_22, %c0_23, %c137] : memref<1x4x1792xbf16, #tpu.memory_space<vmem>>, vector<1x4x1536xbf16>
    %30 = vector.shape_cast %29 : vector<1x4x1536xbf16> to vector<4x1536xbf16>
    %c24 = arith.constant 24 : index
    %c0_24 = arith.constant 0 : index
    %31 = vector.load %arg9[%c24, %c0_24] : memref<72x1536xbf16, #tpu.memory_space<vmem>>, vector<4x1536xbf16>
    tpu.vector_store %arg9[%c24, %c0_24], %30 {strides = array<i32>} : memref<72x1536xbf16, #tpu.memory_space<vmem>>, vector<4x1536xbf16>,
    %c0_25 = arith.constant 0 : index
    %c0_26 = arith.constant 0 : index
    %c138 = arith.constant 138 : index
    %32 = vector.load %arg1[%c0_25, %c0_26, %c138] : memref<1x4x1792xbf16, #tpu.memory_space<vmem>>, vector<1x4x1536xbf16>
    %33 = vector.shape_cast %32 : vector<1x4x1536xbf16> to vector<4x1536xbf16>
    %c28 = arith.constant 28 : index
    %c0_27 = arith.constant 0 : index
    %34 = vector.load %arg9[%c28, %c0_27] : memref<72x1536xbf16, #tpu.memory_space<vmem>>, vector<4x1536xbf16>
    tpu.vector_store %arg9[%c28, %c0_27], %33 {strides = array<i32>} : memref<72x1536xbf16, #tpu.memory_space<vmem>>, vector<4x1536xbf16>,
    %c0_28 = arith.constant 0 : index
    %c0_29 = arith.constant 0 : index
    %c139 = arith.constant 139 : index
    %35 = vector.load %arg1[%c0_28, %c0_29, %c139] : memref<1x4x1792xbf16, #tpu.memory_space<vmem>>, vector<1x4x1536xbf16>
    %36 = vector.shape_cast %35 : vector<1x4x1536xbf16> to vector<4x1536xbf16>
    %c32 = arith.constant 32 : index
    %c0_30 = arith.constant 0 : index
    %37 = vector.load %arg9[%c32, %c0_30] : memref<72x1536xbf16, #tpu.memory_space<vmem>>, vector<4x1536xbf16>
    tpu.vector_store %arg9[%c32, %c0_30], %36 {strides = array<i32>} : memref<72x1536xbf16, #tpu.memory_space<vmem>>, vector<4x1536xbf16>,
    %c0_31 = arith.constant 0 : index
    %c0_32 = arith.constant 0 : index
    %c0_33 = arith.constant 0 : index
    %38 = vector.load %arg3[%c0_31, %c0_32, %c0_33] : memref<3x8x36xbf16, #tpu.memory_space<vmem>>, vector<1x8x36xbf16>
    %39 = vector.shape_cast %38 : vector<1x8x36xbf16> to vector<8x36xbf16>
    %c0_34 = arith.constant 0 : index
    %c0_35 = arith.constant 0 : index
    %40 = vector.load %arg9[%c0_34, %c0_35] : memref<72x1536xbf16, #tpu.memory_space<vmem>>, vector<36x1280xbf16>
    %cst_36 = arith.constant dense<0.000000e+00> : vector<8x1280xf32>
    %41 = tpu.matmul %39, %40, %cst_36 {dimension_numbers = #tpu.dot_dimension_numbers<[1], [0], [0], [1], [0, 0, 1, 1], [], []>} : vector<8x36xbf16>, vector<36x1280xbf16>, vector<8x1280xf32> -> vector<8x1280xf32>
    %c1 = arith.constant 1 : index
    %c0_37 = arith.constant 0 : index
    %c0_38 = arith.constant 0 : index
    %42 = vector.load %arg3[%c1, %c0_37, %c0_38] : memref<3x8x36xbf16, #tpu.memory_space<vmem>>, vector<1x8x36xbf16>
    %43 = vector.shape_cast %42 : vector<1x8x36xbf16> to vector<8x36xbf16>
    %c0_39 = arith.constant 0 : index
    %c128_40 = arith.constant 128 : index
    %44 = vector.load %arg9[%c0_39, %c128_40] : memref<72x1536xbf16, #tpu.memory_space<vmem>>, vector<36x1280xbf16>
    %cst_41 = arith.constant dense<0.000000e+00> : vector<8x1280xf32>
    %45 = tpu.matmul %43, %44, %cst_41 {dimension_numbers = #tpu.dot_dimension_numbers<[1], [0], [0], [1], [0, 0, 1, 1], [], []>} : vector<8x36xbf16>, vector<36x1280xbf16>, vector<8x1280xf32> -> vector<8x1280xf32>
    %46 = arith.addf %41, %45 : vector<8x1280xf32>
    %c2 = arith.constant 2 : index
    %c0_42 = arith.constant 0 : index
    %c0_43 = arith.constant 0 : index
    %47 = vector.load %arg3[%c2, %c0_42, %c0_43] : memref<3x8x36xbf16, #tpu.memory_space<vmem>>, vector<1x8x36xbf16>
    %48 = vector.shape_cast %47 : vector<1x8x36xbf16> to vector<8x36xbf16>
    %c0_44 = arith.constant 0 : index
    %c256 = arith.constant 256 : index
    %49 = vector.load %arg9[%c0_44, %c256] : memref<72x1536xbf16, #tpu.memory_space<vmem>>, vector<36x1280xbf16>
    %cst_45 = arith.constant dense<0.000000e+00> : vector<8x1280xf32>
    %50 = tpu.matmul %48, %49, %cst_45 {dimension_numbers = #tpu.dot_dimension_numbers<[1], [0], [0], [1], [0, 0, 1, 1], [], []>} : vector<8x36xbf16>, vector<36x1280xbf16>, vector<8x1280xf32> -> vector<8x1280xf32>
    %51 = arith.addf %46, %50 : vector<8x1280xf32>
    %52 = vector.broadcast %4 : vector<8x1xf32> to vector<8x1280xf32>
    %53 = arith.addf %51, %52 : vector<8x1280xf32>
    %cst_46 = arith.constant 0.000000e+00 : f32
    %54 = vector.shape_cast %2 : vector<1x1280xi1> to vector<1x1280xi1>
    %55 = vector.broadcast %54 : vector<1x1280xi1> to vector<8x1280xi1>
    %56 = vector.broadcast %cst_46 : f32 to vector<8x1280xf32>
    %57 = arith.select %55, %53, %56 : vector<8x1280xi1>, vector<8x1280xf32>
    %cst_47 = arith.constant dense<0.000000e+00> : vector<8xf32>
    %58 = vector.multi_reduction <add>, %57, %cst_47 [1] : vector<8x1280xf32> to vector<8xf32>
    %59 = vector.shape_cast %58 : vector<8xf32> to vector<8x1xf32>
    %60 = arith.mulf %57, %57 : vector<8x1280xf32>
    %cst_48 = arith.constant dense<0.000000e+00> : vector<8xf32>
    %61 = vector.multi_reduction <add>, %60, %cst_48 [1] : vector<8x1280xf32> to vector<8xf32>
    %62 = vector.shape_cast %61 : vector<8xf32> to vector<8x1xf32>
    %cst_49 = arith.constant 0.001953125 : f32
    %63 = vector.broadcast %cst_49 : f32 to vector<8x1xf32>
    %64 = arith.mulf %59, %63 : vector<8x1xf32>
    %cst_50 = arith.constant 0.001953125 : f32
    %65 = vector.broadcast %cst_50 : f32 to vector<8x1xf32>
    %66 = arith.mulf %62, %65 : vector<8x1xf32>
    %67 = arith.mulf %64, %64 : vector<8x1xf32>
    %68 = arith.subf %66, %67 : vector<8x1xf32>
    %cst_51 = arith.constant 0.000000e+00 : f32
    %69 = vector.broadcast %cst_51 : f32 to vector<8x1xf32>
    %70 = arith.maximumf %68, %69 : vector<8x1xf32>
    %71 = vector.broadcast %64 : vector<8x1xf32> to vector<8x1280xf32>
    %72 = arith.subf %53, %71 : vector<8x1280xf32>
    %cst_52 = arith.constant 9.99999974E-6 : f32
    %73 = vector.broadcast %cst_52 : f32 to vector<8x1xf32>
    %74 = arith.addf %70, %73 : vector<8x1xf32>
    %75 = math.rsqrt %74 : vector<8x1xf32>
    %76 = vector.broadcast %75 : vector<8x1xf32> to vector<8x1280xf32>
    %77 = arith.mulf %72, %76 : vector<8x1280xf32>
    %78 = vector.broadcast %5 : vector<8x1xf32> to vector<8x1280xf32>
    %79 = arith.mulf %77, %78 : vector<8x1280xf32>
    %80 = vector.broadcast %6 : vector<8x1xf32> to vector<8x1280xf32>
    %81 = arith.addf %79, %80 : vector<8x1280xf32>
    %cst_53 = arith.constant 0.000000e+00 : f32
    %82 = vector.broadcast %cst_53 : f32 to vector<8x1280xf32>
    %83 = arith.cmpf ogt, %81, %82 : vector<8x1280xf32>
    %cst_54 = arith.constant 0.00999999977 : f32
    %84 = vector.broadcast %cst_54 : f32 to vector<8x1280xf32>
    %85 = arith.mulf %84, %81 : vector<8x1280xf32>
    %86 = arith.select %83, %81, %85 : vector<8x1280xi1>, vector<8x1280xf32>
    %cst_55 = arith.constant 0.000000e+00 : f32
    %87 = vector.shape_cast %2 : vector<1x1280xi1> to vector<1x1280xi1>
    %88 = vector.broadcast %87 : vector<1x1280xi1> to vector<8x1280xi1>
    %89 = vector.broadcast %cst_55 : f32 to vector<8x1280xf32>
    %90 = arith.select %88, %86, %89 : vector<8x1280xi1>, vector<8x1280xf32>
    %91 = arith.truncf %90 : vector<8x1280xf32> to vector<8x1280xbf16>
    %c0_56 = arith.constant 0 : index
    %c256_57 = arith.constant 256 : index
    %92 = vector.load %arg8[%c0_56, %c256_57] : memref<8x1792xbf16, #tpu.memory_space<vmem>>, vector<8x1280xbf16>
    tpu.vector_store %arg8[%c0_56, %c256_57], %91 {strides = array<i32>} : memref<8x1792xbf16, #tpu.memory_space<vmem>>, vector<8x1280xbf16>,
    %c0_58 = arith.constant 0 : index
    %c117_59 = arith.constant 117 : index
    %93 = vector.load %arg8[%c0_58, %c117_59] : memref<8x1792xbf16, #tpu.memory_space<vmem>>, vector<8x1536xbf16>
    %c0_60 = arith.constant 0 : index
    %c0_61 = arith.constant 0 : index
    %94 = vector.load %arg9[%c0_60, %c0_61] : memref<72x1536xbf16, #tpu.memory_space<vmem>>, vector<8x1536xbf16>
    tpu.vector_store %arg9[%c0_60, %c0_61], %93 {strides = array<i32>} : memref<72x1536xbf16, #tpu.memory_space<vmem>>, vector<8x1536xbf16>,
    %c0_62 = arith.constant 0 : index
    %c118_63 = arith.constant 118 : index
    %95 = vector.load %arg8[%c0_62, %c118_63] : memref<8x1792xbf16, #tpu.memory_space<vmem>>, vector<8x1536xbf16>
    %c8_64 = arith.constant 8 : index
    %c0_65 = arith.constant 0 : index
    %96 = vector.load %arg9[%c8_64, %c0_65] : memref<72x1536xbf16, #tpu.memory_space<vmem>>, vector<8x1536xbf16>
    tpu.vector_store %arg9[%c8_64, %c0_65], %95 {strides = array<i32>} : memref<72x1536xbf16, #tpu.memory_space<vmem>>, vector<8x1536xbf16>,
    %c0_66 = arith.constant 0 : index
    %c119_67 = arith.constant 119 : index
    %97 = vector.load %arg8[%c0_66, %c119_67] : memref<8x1792xbf16, #tpu.memory_space<vmem>>, vector<8x1536xbf16>
    %c16_68 = arith.constant 16 : index
    %c0_69 = arith.constant 0 : index
    %98 = vector.load %arg9[%c16_68, %c0_69] : memref<72x1536xbf16, #tpu.memory_space<vmem>>, vector<8x1536xbf16>
    tpu.vector_store %arg9[%c16_68, %c0_69], %97 {strides = array<i32>} : memref<72x1536xbf16, #tpu.memory_space<vmem>>, vector<8x1536xbf16>,
    %c0_70 = arith.constant 0 : index
    %c127_71 = arith.constant 127 : index
    %99 = vector.load %arg8[%c0_70, %c127_71] : memref<8x1792xbf16, #tpu.memory_space<vmem>>, vector<8x1536xbf16>
    %c24_72 = arith.constant 24 : index
    %c0_73 = arith.constant 0 : index
    %100 = vector.load %arg9[%c24_72, %c0_73] : memref<72x1536xbf16, #tpu.memory_space<vmem>>, vector<8x1536xbf16>
    tpu.vector_store %arg9[%c24_72, %c0_73], %99 {strides = array<i32>} : memref<72x1536xbf16, #tpu.memory_space<vmem>>, vector<8x1536xbf16>,
    %c0_74 = arith.constant 0 : index
    %c128_75 = arith.constant 128 : index
    %101 = vector.load %arg8[%c0_74, %c128_75] : memref<8x1792xbf16, #tpu.memory_space<vmem>>, vector<8x1536xbf16>
    %c32_76 = arith.constant 32 : index
    %c0_77 = arith.constant 0 : index
    %102 = vector.load %arg9[%c32_76, %c0_77] : memref<72x1536xbf16, #tpu.memory_space<vmem>>, vector<8x1536xbf16>
    tpu.vector_store %arg9[%c32_76, %c0_77], %101 {strides = array<i32>} : memref<72x1536xbf16, #tpu.memory_space<vmem>>, vector<8x1536xbf16>,
    %c0_78 = arith.constant 0 : index
    %c129_79 = arith.constant 129 : index
    %103 = vector.load %arg8[%c0_78, %c129_79] : memref<8x1792xbf16, #tpu.memory_space<vmem>>, vector<8x1536xbf16>
    %c40 = arith.constant 40 : index
    %c0_80 = arith.constant 0 : index
    %104 = vector.load %arg9[%c40, %c0_80] : memref<72x1536xbf16, #tpu.memory_space<vmem>>, vector<8x1536xbf16>
    tpu.vector_store %arg9[%c40, %c0_80], %103 {strides = array<i32>} : memref<72x1536xbf16, #tpu.memory_space<vmem>>, vector<8x1536xbf16>,
    %c0_81 = arith.constant 0 : index
    %c137_82 = arith.constant 137 : index
    %105 = vector.load %arg8[%c0_81, %c137_82] : memref<8x1792xbf16, #tpu.memory_space<vmem>>, vector<8x1536xbf16>
    %c48 = arith.constant 48 : index
    %c0_83 = arith.constant 0 : index
    %106 = vector.load %arg9[%c48, %c0_83] : memref<72x1536xbf16, #tpu.memory_space<vmem>>, vector<8x1536xbf16>
    tpu.vector_store %arg9[%c48, %c0_83], %105 {strides = array<i32>} : memref<72x1536xbf16, #tpu.memory_space<vmem>>, vector<8x1536xbf16>,
    %c0_84 = arith.constant 0 : index
    %c138_85 = arith.constant 138 : index
    %107 = vector.load %arg8[%c0_84, %c138_85] : memref<8x1792xbf16, #tpu.memory_space<vmem>>, vector<8x1536xbf16>
    %c56 = arith.constant 56 : index
    %c0_86 = arith.constant 0 : index
    %108 = vector.load %arg9[%c56, %c0_86] : memref<72x1536xbf16, #tpu.memory_space<vmem>>, vector<8x1536xbf16>
    tpu.vector_store %arg9[%c56, %c0_86], %107 {strides = array<i32>} : memref<72x1536xbf16, #tpu.memory_space<vmem>>, vector<8x1536xbf16>,
    %c0_87 = arith.constant 0 : index
    %c139_88 = arith.constant 139 : index
    %109 = vector.load %arg8[%c0_87, %c139_88] : memref<8x1792xbf16, #tpu.memory_space<vmem>>, vector<8x1536xbf16>
    %c64 = arith.constant 64 : index
    %c0_89 = arith.constant 0 : index
    %110 = vector.load %arg9[%c64, %c0_89] : memref<72x1536xbf16, #tpu.memory_space<vmem>>, vector<8x1536xbf16>
    tpu.vector_store %arg9[%c64, %c0_89], %109 {strides = array<i32>} : memref<72x1536xbf16, #tpu.memory_space<vmem>>, vector<8x1536xbf16>,
    %c0_90 = arith.constant 0 : index
    %c0_91 = arith.constant 0 : index
    %c0_92 = arith.constant 0 : index
    %111 = vector.load %arg4[%c0_90, %c0_91, %c0_92] : memref<3x8x72xbf16, #tpu.memory_space<vmem>>, vector<1x8x72xbf16>
    %112 = vector.shape_cast %111 : vector<1x8x72xbf16> to vector<8x72xbf16>
    %c0_93 = arith.constant 0 : index
    %c0_94 = arith.constant 0 : index
    %113 = vector.load %arg9[%c0_93, %c0_94] : memref<72x1536xbf16, #tpu.memory_space<vmem>>, vector<72x1280xbf16>
    %cst_95 = arith.constant dense<0.000000e+00> : vector<8x1280xf32>
    %114 = tpu.matmul %112, %113, %cst_95 {dimension_numbers = #tpu.dot_dimension_numbers<[1], [0], [0], [1], [0, 0, 1, 1], [], []>} : vector<8x72xbf16>, vector<72x1280xbf16>, vector<8x1280xf32> -> vector<8x1280xf32>
    %c1_96 = arith.constant 1 : index
    %c0_97 = arith.constant 0 : index
    %c0_98 = arith.constant 0 : index
    %115 = vector.load %arg4[%c1_96, %c0_97, %c0_98] : memref<3x8x72xbf16, #tpu.memory_space<vmem>>, vector<1x8x72xbf16>
    %116 = vector.shape_cast %115 : vector<1x8x72xbf16> to vector<8x72xbf16>
    %c0_99 = arith.constant 0 : index
    %c128_100 = arith.constant 128 : index
    %117 = vector.load %arg9[%c0_99, %c128_100] : memref<72x1536xbf16, #tpu.memory_space<vmem>>, vector<72x1280xbf16>
    %cst_101 = arith.constant dense<0.000000e+00> : vector<8x1280xf32>
    %118 = tpu.matmul %116, %117, %cst_101 {dimension_numbers = #tpu.dot_dimension_numbers<[1], [0], [0], [1], [0, 0, 1, 1], [], []>} : vector<8x72xbf16>, vector<72x1280xbf16>, vector<8x1280xf32> -> vector<8x1280xf32>
    %119 = arith.addf %114, %118 : vector<8x1280xf32>
    %c2_102 = arith.constant 2 : index
    %c0_103 = arith.constant 0 : index
    %c0_104 = arith.constant 0 : index
    %120 = vector.load %arg4[%c2_102, %c0_103, %c0_104] : memref<3x8x72xbf16, #tpu.memory_space<vmem>>, vector<1x8x72xbf16>
    %121 = vector.shape_cast %120 : vector<1x8x72xbf16> to vector<8x72xbf16>
    %c0_105 = arith.constant 0 : index
    %c256_106 = arith.constant 256 : index
    %122 = vector.load %arg9[%c0_105, %c256_106] : memref<72x1536xbf16, #tpu.memory_space<vmem>>, vector<72x1280xbf16>
    %cst_107 = arith.constant dense<0.000000e+00> : vector<8x1280xf32>
    %123 = tpu.matmul %121, %122, %cst_107 {dimension_numbers = #tpu.dot_dimension_numbers<[1], [0], [0], [1], [0, 0, 1, 1], [], []>} : vector<8x72xbf16>, vector<72x1280xbf16>, vector<8x1280xf32> -> vector<8x1280xf32>
    %124 = arith.addf %119, %123 : vector<8x1280xf32>
    %125 = vector.broadcast %7 : vector<8x1xf32> to vector<8x1280xf32>
    %126 = arith.addf %124, %125 : vector<8x1280xf32>
    %cst_108 = arith.constant 0.000000e+00 : f32
    %127 = vector.shape_cast %2 : vector<1x1280xi1> to vector<1x1280xi1>
    %128 = vector.broadcast %127 : vector<1x1280xi1> to vector<8x1280xi1>
    %129 = vector.broadcast %cst_108 : f32 to vector<8x1280xf32>
    %130 = arith.select %128, %126, %129 : vector<8x1280xi1>, vector<8x1280xf32>
    %cst_109 = arith.constant dense<0.000000e+00> : vector<8xf32>
    %131 = vector.multi_reduction <add>, %130, %cst_109 [1] : vector<8x1280xf32> to vector<8xf32>
    %132 = vector.shape_cast %131 : vector<8xf32> to vector<8x1xf32>
    %133 = arith.mulf %130, %130 : vector<8x1280xf32>
    %cst_110 = arith.constant dense<0.000000e+00> : vector<8xf32>
    %134 = vector.multi_reduction <add>, %133, %cst_110 [1] : vector<8x1280xf32> to vector<8xf32>
    %135 = vector.shape_cast %134 : vector<8xf32> to vector<8x1xf32>
    %cst_111 = arith.constant 0.001953125 : f32
    %136 = vector.broadcast %cst_111 : f32 to vector<8x1xf32>
    %137 = arith.mulf %132, %136 : vector<8x1xf32>
    %cst_112 = arith.constant 0.001953125 : f32
    %138 = vector.broadcast %cst_112 : f32 to vector<8x1xf32>
    %139 = arith.mulf %135, %138 : vector<8x1xf32>
    %140 = arith.mulf %137, %137 : vector<8x1xf32>
    %141 = arith.subf %139, %140 : vector<8x1xf32>
    %cst_113 = arith.constant 0.000000e+00 : f32
    %142 = vector.broadcast %cst_113 : f32 to vector<8x1xf32>
    %143 = arith.maximumf %141, %142 : vector<8x1xf32>
    %144 = vector.broadcast %137 : vector<8x1xf32> to vector<8x1280xf32>
    %145 = arith.subf %126, %144 : vector<8x1280xf32>
    %cst_114 = arith.constant 9.99999974E-6 : f32
    %146 = vector.broadcast %cst_114 : f32 to vector<8x1xf32>
    %147 = arith.addf %143, %146 : vector<8x1xf32>
    %148 = math.rsqrt %147 : vector<8x1xf32>
    %149 = vector.broadcast %148 : vector<8x1xf32> to vector<8x1280xf32>
    %150 = arith.mulf %145, %149 : vector<8x1280xf32>
    %151 = vector.broadcast %8 : vector<8x1xf32> to vector<8x1280xf32>
    %152 = arith.mulf %150, %151 : vector<8x1280xf32>
    %153 = vector.broadcast %9 : vector<8x1xf32> to vector<8x1280xf32>
    %154 = arith.addf %152, %153 : vector<8x1280xf32>
    %cst_115 = arith.constant 0.000000e+00 : f32
    %155 = vector.broadcast %cst_115 : f32 to vector<8x1280xf32>
    %156 = arith.cmpf ogt, %154, %155 : vector<8x1280xf32>
    %cst_116 = arith.constant 0.00999999977 : f32
    %157 = vector.broadcast %cst_116 : f32 to vector<8x1280xf32>
    %158 = arith.mulf %157, %154 : vector<8x1280xf32>
    %159 = arith.select %156, %154, %158 : vector<8x1280xi1>, vector<8x1280xf32>
    %c0_117 = arith.constant 0 : index
    %c0_118 = arith.constant 0 : index
    %160 = vector.load %arg5[%c0_117, %c0_118] : memref<8x4xbf16, #tpu.memory_space<vmem>>, vector<8x4xbf16>
    %c0_119 = arith.constant 0 : index
    %c0_120 = arith.constant 0 : index
    %c256_121 = arith.constant 256 : index
    %161 = vector.load %arg1[%c0_119, %c0_120, %c256_121] : memref<1x4x1792xbf16, #tpu.memory_space<vmem>>, vector<1x4x1280xbf16>
    %162 = vector.shape_cast %161 : vector<1x4x1280xbf16> to vector<4x1280xbf16>
    %cst_122 = arith.constant dense<0.000000e+00> : vector<8x1280xf32>
    %163 = tpu.matmul %160, %162, %cst_122 {dimension_numbers = #tpu.dot_dimension_numbers<[1], [0], [0], [1], [0, 0, 1, 1], [], []>} : vector<8x4xbf16>, vector<4x1280xbf16>, vector<8x1280xf32> -> vector<8x1280xf32>
    %164 = vector.broadcast %10 : vector<8x1xf32> to vector<8x1280xf32>
    %165 = arith.addf %163, %164 : vector<8x1280xf32>
    %166 = arith.addf %159, %165 : vector<8x1280xf32>
    %c0_123 = arith.constant 0 : index
    %c0_124 = arith.constant 0 : index
    %c0_125 = arith.constant 0 : index
    %167 = vector.load %arg7[%c0_123, %c0_124, %c0_125] : memref<1x8x1280xf32, #tpu.memory_space<vmem>>, vector<1x8x1280xf32>
    %168 = vector.shape_cast %167 : vector<1x8x1280xf32> to vector<8x1280xf32>
    %169 = vector.shape_cast %166 : vector<8x1280xf32> to vector<1x8x1280xf32>
    tpu.vector_store %arg7[%c0_123, %c0_124, %c0_125], %169 {strides = array<i32>} : memref<1x8x1280xf32, #tpu.memory_space<vmem>>, vector<1x8x1280xf32>,
    return
  }
  func.func @transform_0(%arg0: i32) -> (i32, i32, i32) {
    %c0_i32 = arith.constant 0 : i32
    %c0_i32_0 = arith.constant 0 : i32
    %c0_i32_1 = arith.constant 0 : i32
    return %arg0, %c0_i32, %c0_i32_0 : i32, i32, i32
  }
  func.func @transform_1(%arg0: i32) -> (i32, i32) {
    %c0_i32 = arith.constant 0 : i32
    %c0_i32_0 = arith.constant 0 : i32
    %c0_i32_1 = arith.constant 0 : i32
    return %c0_i32, %c0_i32_0 : i32, i32
  }
  func.func @transform_2(%arg0: i32) -> (i32, i32, i32) {
    %c0_i32 = arith.constant 0 : i32
    %c0_i32_0 = arith.constant 0 : i32
    %c0_i32_1 = arith.constant 0 : i32
    %c0_i32_2 = arith.constant 0 : i32
    return %c0_i32, %c0_i32_0, %c0_i32_1 : i32, i32, i32
  }
  func.func @transform_3(%arg0: i32) -> (i32, i32, i32) {
    %c0_i32 = arith.constant 0 : i32
    %c0_i32_0 = arith.constant 0 : i32
    %c0_i32_1 = arith.constant 0 : i32
    %c0_i32_2 = arith.constant 0 : i32
    return %c0_i32, %c0_i32_0, %c0_i32_1 : i32, i32, i32
  }
  func.func @transform_4(%arg0: i32) -> (i32, i32) {
    %c0_i32 = arith.constant 0 : i32
    %c0_i32_0 = arith.constant 0 : i32
    %c0_i32_1 = arith.constant 0 : i32
    return %c0_i32, %c0_i32_0 : i32, i32
  }
  func.func @transform_5(%arg0: i32) -> (i32, i32) {
    %c0_i32 = arith.constant 0 : i32
    %c0_i32_0 = arith.constant 0 : i32
    %c0_i32_1 = arith.constant 0 : i32
    return %c0_i32, %c0_i32_0 : i32, i32
  }
  func.func @transform_6(%arg0: i32) -> (i32, i32, i32) {
    %c0_i32 = arith.constant 0 : i32
    %c0_i32_0 = arith.constant 0 : i32
    %c0_i32_1 = arith.constant 0 : i32
    return %arg0, %c0_i32, %c0_i32_0 : i32, i32, i32
  }
}

</mosaic_0001>

<llo_original>
// kernel: tpu_custom_call.1
$region0: #{tpu_custom_call.1}
  #allocation0 [shape = 'u32[]', space=smem, size = 0x4, offset = 0x4, fixed_abs, tag = 'smem constant byte address 0x4 - core index']
  #allocation1 [shape = 'u32[144,128]{1,0:T(1,128)}', space=vmem, size = 0x12000, scoped, tag = 'internal scratch']
  #allocation2 [shape = 'bf16[8,1792]{1,0:T(8,128)(2,1)}', space=vmem, size = 0x7000, scoped, tag = 'scratch operand']
  #allocation3 [shape = 'bf16[72,1536]{1,0:T(8,128)(2,1)}', space=vmem, size = 0x36000, scoped, tag = 'scratch operand']
  %s0 = inlined_call_operand.hbm [shape: bf16[2,4,1792], index: 0, kind: input, shape index: {}]
  %s1 = inlined_call_operand.hbm [shape: f32[1,1280], index: 1, kind: input, shape index: {}]
  %s2 = inlined_call_operand.vmem [shape: bf16[3,8,36], index: 2, kind: input, shape index: {}]
  %s3 = inlined_call_operand.hbm [shape: bf16[3,8,72], index: 3, kind: input, shape index: {}]
  %s4 = inlined_call_operand.vmem [shape: bf16[8,4], index: 4, kind: input, shape index: {}]
  %s5 = inlined_call_operand.vmem [shape: f32[8,8], index: 5, kind: input, shape index: {}]
  %s6 = inlined_call_operand.hbm [shape: f32[2,8,1280], index: 6, kind: output, shape index: {}]
  %s7 = sld [smem:[#allocation0]]
  $region69: #{tpu_custom_call.1} parent=0
    _
  %s9 = ssub.s32 1, %s7
  %s10 = scalar_select 0, %s9, %s7
  $region1: #{tpu_custom_call.1} parent=0
    #allocation4 [shape = 'u8[28672]{0}', space=vmem, size = 0x7000, scoped, tag = 'input window, operand 0']
    #allocation5 [shape = 's32[2]{0}', space=sflag, size = 0x8, scoped, tag = 'scoped memory for tpu_custom_call.1']
    #allocation6 [shape = 's32[2]{0}', space=sflag, size = 0x8, scoped, tag = 'scoped memory for tpu_custom_call.1']
    #allocation7 [shape = 'u8[5120]{0}', space=vmem, size = 0x1400, scoped, tag = 'input window, operand 1, single buffered']
    #allocation8 [shape = 's32[1]{0}', space=sflag, size = 0x4, scoped, tag = 'scoped memory for tpu_custom_call.1']
    #allocation9 [shape = 'u8[6144]{0}', space=vmem, size = 0x1800, scoped, tag = 'input window, operand 3, single buffered']
    #allocation10 [shape = 'u8[81920]{0}', space=vmem, size = 0x14000, scoped, tag = 'output window, operand 0']
    %11 = vsyncpa [#allocation5], 0
    %s12 = scalar_lea.sflag [#allocation5], 1
    %13 = vsyncpa %s12, 0
    %14 = vsyncpa [#allocation8], 0
    %15 = vsyncpa [#allocation6], 0
    %s16 = scalar_lea.sflag [#allocation6], 1
    %17 = vsyncpa %s16, 0
    loop: start=0, step=1, limit=4
    $region2: #{tpu_custom_call.1} parent=1 // loop_pre_header
      _
    $region3: #{tpu_custom_call.1} parent=1 // loop_header
      %s19 = sphi 0, %s23
      %p20 = scmp.ge.s32.totalorder %s19, 4
      %s29 = sphi 0, %s31
      %s32 = sphi 0, %s29
      %s33 = sphi 0, %s32
      %s49 = sphi 0, %s33
      %s53 = sphi 0, %s53
      %s55 = sphi 0, %s53
      %s56 = sphi 0, %s55
      %s70 = sphi 0, %s56
      %s74 = sphi 0, %s74
      %s76 = sphi 0, %s74
      %s77 = sphi 0, %s76
      %s91 = sphi 0, %s77
      %s95 = sphi 0, %s95
      %s97 = sphi 0, %s95
      %s98 = sphi 0, %s97
      %s112 = sphi 0, %s98
      %s116 = sphi 0, %s116
      %s118 = sphi 0, %s116
      %s119 = sphi 0, %s118
      %s133 = sphi 0, %s119
      %s137 = sphi 0, %s137
      %s139 = sphi 0, %s137
      %s140 = sphi 0, %s139
      %s154 = sphi 0, %s140
      %s160 = sphi 0, %s162
      %s163 = sphi 0, %s160
      %s164 = sphi 0, %s163
      %s180 = sphi 0, %s164
    $region4: #{tpu_custom_call.1} parent=1 // loop_header_branch
      %22 = sbr.rel (%p20) target = $region8
    $region5: #{tpu_custom_call.1} parent=1 // loop_body
      %s24 = ssub.s32 %s19, 1
      %s25 = ssub.s32 %s19, 2
      %s26 = sadd.s32 %s19, 1
      %s27 = ssub.s32 %s19, %s26
      %p28 = scmp.eq.s32.totalorder %s27, 0
      %s30 = sadd.s32 %s29, 1
      %s31 = scalar_select %p28, %s29, %s30
      %p34 = pneg %p28
      %p35 = scmp.eq.s32.totalorder %s19, 1
      %p36 = por %p34, %p35
      %p37 = scmp.ne.s32.totalorder %s29, %s32
      %p38 = scmp.eq.s32.totalorder %s19, 0
      %p39 = por %p37, %p38
      %p40 = scmp.ne.s32.totalorder %s29, %s32
      %p41 = scmp.eq.s32.totalorder %s24, 1
      %p42 = por %p40, %p41
      %p43 = scmp.ne.s32.totalorder %s32, %s33
      %p44 = scmp.eq.s32.totalorder %s24, 0
      %p45 = por %p43, %p44
      %p46 = scmp.ne.s32.totalorder %s32, %s33
      %p47 = scmp.eq.s32.totalorder %s25, 1
      %p48 = por %p46, %p47
      %p50 = scmp.ne.s32.totalorder %s33, %s49
      %p51 = scmp.eq.s32.totalorder %s25, 0
      %p52 = por %p50, %p51
      %s54 = sadd.s32 %s53, 1
      %p57 = scmp.eq.s32.totalorder %s19, 1
      %p58 = scmp.ne.s32.totalorder %s53, %s55
      %p59 = scmp.eq.s32.totalorder %s19, 0
      %p60 = por %p58, %p59
      %p61 = scmp.ne.s32.totalorder %s53, %s55
      %p62 = scmp.eq.s32.totalorder %s24, 1
      %p63 = por %p61, %p62
      %p64 = scmp.ne.s32.totalorder %s55, %s56
      %p65 = scmp.eq.s32.totalorder %s24, 0
      %p66 = por %p64, %p65
      %p67 = scmp.ne.s32.totalorder %s55, %s56
      %p68 = scmp.eq.s32.totalorder %s25, 1
      %p69 = por %p67, %p68
      %p71 = scmp.ne.s32.totalorder %s56, %s70
      %p72 = scmp.eq.s32.totalorder %s25, 0
      %p73 = por %p71, %p72
      %s75 = sadd.s32 %s74, 1
      %p78 = scmp.eq.s32.totalorder %s19, 1
      %p79 = scmp.ne.s32.totalorder %s74, %s76
      %p80 = scmp.eq.s32.totalorder %s19, 0
      %p81 = por %p79, %p80
      %p82 = scmp.ne.s32.totalorder %s74, %s76
      %p83 = scmp.eq.s32.totalorder %s24, 1
      %p84 = por %p82, %p83
      %p85 = scmp.ne.s32.totalorder %s76, %s77
      %p86 = scmp.eq.s32.totalorder %s24, 0
      %p87 = por %p85, %p86
      %p88 = scmp.ne.s32.totalorder %s76, %s77
      %p89 = scmp.eq.s32.totalorder %s25, 1
      %p90 = por %p88, %p89
      %p92 = scmp.ne.s32.totalorder %s77, %s91
      %p93 = scmp.eq.s32.totalorder %s25, 0
      %p94 = por %p92, %p93
      %s96 = sadd.s32 %s95, 1
      %p99 = scmp.eq.s32.totalorder %s19, 1
      %p100 = scmp.ne.s32.totalorder %s95, %s97
      %p101 = scmp.eq.s32.totalorder %s19, 0
      %p102 = por %p100, %p101
      %p103 = scmp.ne.s32.totalorder %s95, %s97
      %p104 = scmp.eq.s32.totalorder %s24, 1
      %p105 = por %p103, %p104
      %p106 = scmp.ne.s32.totalorder %s97, %s98
      %p107 = scmp.eq.s32.totalorder %s24, 0
      %p108 = por %p106, %p107
      %p109 = scmp.ne.s32.totalorder %s97, %s98
      %p110 = scmp.eq.s32.totalorder %s25, 1
      %p111 = por %p109, %p110
      %p113 = scmp.ne.s32.totalorder %s98, %s112
      %p114 = scmp.eq.s32.totalorder %s25, 0
      %p115 = por %p113, %p114
      %s117 = sadd.s32 %s116, 1
      %p120 = scmp.eq.s32.totalorder %s19, 1
      %p121 = scmp.ne.s32.totalorder %s116, %s118
      %p122 = scmp.eq.s32.totalorder %s19, 0
      %p123 = por %p121, %p122
      %p124 = scmp.ne.s32.totalorder %s116, %s118
      %p125 = scmp.eq.s32.totalorder %s24, 1
      %p126 = por %p124, %p125
      %p127 = scmp.ne.s32.totalorder %s118, %s119
      %p128 = scmp.eq.s32.totalorder %s24, 0
      %p129 = por %p127, %p128
      %p130 = scmp.ne.s32.totalorder %s118, %s119
      %p131 = scmp.eq.s32.totalorder %s25, 1
      %p132 = por %p130, %p131
      %p134 = scmp.ne.s32.totalorder %s119, %s133
      %p135 = scmp.eq.s32.totalorder %s25, 0
      %p136 = por %p134, %p135
      %s138 = sadd.s32 %s137, 1
      %p141 = scmp.eq.s32.totalorder %s19, 1
      %p142 = scmp.ne.s32.totalorder %s137, %s139
      %p143 = scmp.eq.s32.totalorder %s19, 0
      %p144 = por %p142, %p143
      %p145 = scmp.ne.s32.totalorder %s137, %s139
      %p146 = scmp.eq.s32.totalorder %s24, 1
      %p147 = por %p145, %p146
      %p148 = scmp.ne.s32.totalorder %s139, %s140
      %p149 = scmp.eq.s32.totalorder %s24, 0
      %p150 = por %p148, %p149
      %p151 = scmp.ne.s32.totalorder %s139, %s140
      %p152 = scmp.eq.s32.totalorder %s25, 1
      %p153 = por %p151, %p152
      %p155 = scmp.ne.s32.totalorder %s140, %s154
      %p156 = scmp.eq.s32.totalorder %s25, 0
      %p157 = por %p155, %p156
      %s158 = ssub.s32 %s19, %s26
      %p159 = scmp.eq.s32.totalorder %s158, 0
      %s161 = sadd.s32 %s160, 1
      %s162 = scalar_select %p159, %s160, %s161
      %p165 = pneg %p159
      %p166 = scmp.eq.s32.totalorder %s19, 1
      %p167 = por %p165, %p166
      %p168 = scmp.ne.s32.totalorder %s160, %s163
      %p169 = scmp.eq.s32.totalorder %s19, 0
      %p170 = por %p168, %p169
      %p171 = scmp.ne.s32.totalorder %s160, %s163
      %p172 = scmp.eq.s32.totalorder %s24, 1
      %p173 = por %p171, %p172
      %p174 = scmp.ne.s32.totalorder %s163, %s164
      %p175 = scmp.eq.s32.totalorder %s24, 0
      %p176 = por %p174, %p175
      %p177 = scmp.ne.s32.totalorder %s163, %s164
      %p178 = scmp.eq.s32.totalorder %s25, 1
      %p179 = por %p177, %p178
      %p181 = scmp.ne.s32.totalorder %s164, %s180
      %p182 = scmp.eq.s32.totalorder %s25, 0
      %p183 = por %p181, %p182
      %p184 = scmp.le.s32.totalorder 1, %s19
      %p185 = scmp.lt.s32.totalorder %s19, 3
      %p186 = pnand %p184, %p185
      %p187 = pneg %p186
      // Predicated region
      $region9: #{tpu_custom_call.1} parent=5 // pred_check
        _
      $region10: #{tpu_custom_call.1} parent=5 // pred_check_branch
        %189 = sbr.rel (%p186) target = $region12
      $region11: #{tpu_custom_call.1} parent=5 // pred_region
        %s190 = ssub.s32 %s19, 1
        // Predicated region
        $region13: #{tpu_custom_call.1} parent=11 // pred_check
          %p191 = pneg %p66
        $region14: #{tpu_custom_call.1} parent=11 // pred_check_branch
          %193 = sbr.rel (%p191) target = $region16
        $region15: #{tpu_custom_call.1} parent=11 // pred_region
          %s195 = ssub.s32 160, 160
          %196 = vsyncadd [#allocation8], %s195
          %s198 = sshll.u32 [#allocation7], 4
          %s199 = int_to_ptr.vmem [resolvable:$true] %s198
          %201 = dma.hbm_to_vmem [thread:$0]  %s1, 160, %s199, [#allocation8]
        $region16: #{tpu_custom_call.1} parent=11 // pred_fallthru
          _
        // Predicated region
        $region17: #{tpu_custom_call.1} parent=11 // pred_check
          %p202 = pneg %p87
        $region18: #{tpu_custom_call.1} parent=11 // pred_check_branch
          %204 = sbr.rel (%p202) target = $region20
        $region19: #{tpu_custom_call.1} parent=11 // pred_region
          _
        $region20: #{tpu_custom_call.1} parent=11 // pred_fallthru
          _
        // Predicated region
        $region21: #{tpu_custom_call.1} parent=11 // pred_check
          %p205 = pneg %p108
        $region22: #{tpu_custom_call.1} parent=11 // pred_check_branch
          %207 = sbr.rel (%p205) target = $region24
        $region23: #{tpu_custom_call.1} parent=11 // pred_region
          %s209 = ssub.s32 192, 192
          %210 = vsyncadd [#allocation8], %s209
          %s211 = sshll.u32 [#allocation9], 4
          %s212 = int_to_ptr.vmem [resolvable:$true] %s211
          %217 = dma.hbm_to_vmem [thread:$0]  %s3, 192, %s212, [#allocation8], 64, 64, 4
        $region24: #{tpu_custom_call.1} parent=11 // pred_fallthru
          _
        // Predicated region
        $region25: #{tpu_custom_call.1} parent=11 // pred_check
          %p218 = pneg %p129
        $region26: #{tpu_custom_call.1} parent=11 // pred_check_branch
          %220 = sbr.rel (%p218) target = $region28
        $region27: #{tpu_custom_call.1} parent=11 // pred_region
          _
        $region28: #{tpu_custom_call.1} parent=11 // pred_fallthru
          _
        // Predicated region
        $region29: #{tpu_custom_call.1} parent=11 // pred_check
          %p221 = pneg %p150
        $region30: #{tpu_custom_call.1} parent=11 // pred_check_branch
          %223 = sbr.rel (%p221) target = $region32
        $region31: #{tpu_custom_call.1} parent=11 // pred_region
          _
        $region32: #{tpu_custom_call.1} parent=11 // pred_fallthru
          _
      $region12: #{tpu_custom_call.1} parent=5 // pred_fallthru
        _
      %p224 = scmp.lt.s32.totalorder %s19, 2
      // Predicated region
      $region33: #{tpu_custom_call.1} parent=5 // pred_check
        %p225 = pneg %p224
      $region34: #{tpu_custom_call.1} parent=5 // pred_check_branch
        %227 = sbr.rel (%p225) target = $region36
      $region35: #{tpu_custom_call.1} parent=5 // pred_region
        // Predicated region
        $region37: #{tpu_custom_call.1} parent=35 // pred_check
          %p228 = pneg %p39
        $region38: #{tpu_custom_call.1} parent=35 // pred_check_branch
          %230 = sbr.rel (%p228) target = $region40
        $region39: #{tpu_custom_call.1} parent=35 // pred_region
          %s231 = sand.u32 %s29, 1
          %s232 = scalar_lea.sflag [#allocation5], %s231
          %s233 = sand.u32 %s29, 1
          %s234 = smul.addr %s233, 28
          %s235 = scalar_lea.vmem [#allocation4], %s234
          %s237 = ssub.s32 448, 448
          %238 = vsyncadd %s232, %s237
          %s239 = smul.addr %s19, 14
          %s240 = smul.addr %s239, 32
          %s241 = scalar_lea.hbm %s0, %s240
          %s243 = sshll.u32 %s235, 4
          %s244 = int_to_ptr.vmem [resolvable:$true] %s243
          %246 = dma.hbm_to_vmem [thread:$0]  %s241, 448, %s244, %s232
        $region40: #{tpu_custom_call.1} parent=35 // pred_fallthru
          _
      $region36: #{tpu_custom_call.1} parent=5 // pred_fallthru
        _
      %p247 = scmp.le.s32.totalorder 1, %s19
      %p248 = scmp.lt.s32.totalorder %s19, 3
      %p249 = pnand %p247, %p248
      %p250 = pneg %p249
      // Predicated region
      $region41: #{tpu_custom_call.1} parent=5 // pred_check
        _
      $region42: #{tpu_custom_call.1} parent=5 // pred_check_branch
        %252 = sbr.rel (%p249) target = $region44
      $region43: #{tpu_custom_call.1} parent=5 // pred_region
        %s253 = ssub.s32 %s19, 1
        %s254 = sand.u32 %s32, 1
        %s255 = scalar_lea.sflag [#allocation5], %s254
        %s256 = sand.u32 %s32, 1
        %s257 = smul.addr %s256, 28
        %s258 = scalar_lea.vmem [#allocation4], %s257
        // Predicated region
        $region45: #{tpu_custom_call.1} parent=43 // pred_check
          %p259 = pneg %p45
        $region46: #{tpu_custom_call.1} parent=43 // pred_check_branch
          %261 = sbr.rel (%p259) target = $region48
        $region47: #{tpu_custom_call.1} parent=43 // pred_region
          %262 = dma.done %s255, 448
        $region48: #{tpu_custom_call.1} parent=43 // pred_fallthru
          _
        // Predicated region
        $region49: #{tpu_custom_call.1} parent=43 // pred_check
          %p263 = pneg %p66
        $region50: #{tpu_custom_call.1} parent=43 // pred_check_branch
          %265 = sbr.rel (%p263) target = $region52
        $region51: #{tpu_custom_call.1} parent=43 // pred_region
          %266 = dma.done [#allocation8], 160
        $region52: #{tpu_custom_call.1} parent=43 // pred_fallthru
          _
        // Predicated region
        $region53: #{tpu_custom_call.1} parent=43 // pred_check
          %p267 = pneg %p108
        $region54: #{tpu_custom_call.1} parent=43 // pred_check_branch
          %269 = sbr.rel (%p267) target = $region56
        $region55: #{tpu_custom_call.1} parent=43 // pred_region
          %270 = dma.done [#allocation8], 192
        $region56: #{tpu_custom_call.1} parent=43 // pred_fallthru
          _
        %s271 = sand.u32 %s32, 1
        %s272 = scalar_lea.sflag [#allocation5], %s271
        %s273 = sand.u32 %s32, 1
        %s274 = smul.addr %s273, 28
        %s275 = scalar_lea.vmem [#allocation4], %s274
        %p276 = pneg %p45
        %p277 = pneg %p42
        %p278 = pneg %p66
        %p279 = pneg %p63
        %p280 = pneg %p87
        %p281 = pneg %p84
        %p282 = pneg %p108
        %p283 = pneg %p105
        %p284 = pneg %p129
        %p285 = pneg %p126
        %p286 = pneg %p150
        %p287 = pneg %p147
        %p288 = pneg %p176
        %p289 = pneg %p173
        %s290 = sand.u32 %s163, 1
        %s291 = scalar_lea.sflag [#allocation6], %s290
        %s292 = sand.u32 %s163, 1
        %s293 = smul.addr %s292, 80
        %s294 = scalar_lea.vmem [#allocation10], %s293
        %v296 = vld [vmem:[#allocation7] sm:$0xff]
        %v297 = vld [vmem:[#allocation7 + $0x8] sm:$0x3]
        %vm298 = vcmp.gt.f32.partialorder %v296, 0.0
        %vm299 = vcmp.gt.f32.partialorder %v297, 0.0
        %v300 = vld [vmem:[%s5] sm:$0xff]
        %v301 = vld [vmem:[%s258] sm:$0xff]
        %v302 = vld [vmem:[%s258 + $0x8] sm:$0xff]
        %v303 = vld [vmem:[%s258 + $0x10] sm:$0xff]
        %v304 = vld [vmem:[%s258 + $0x18] sm:$0x3]
        %v309 = vcombine.high %v301, %v301
        %v311 = vunpack.c.l.s4 1983009808
        %v312 = vunpack.c.0.s8 %v311
        %v313 = vlaneseq
        %v314 = vshrl.u32 %v313, 7
        %v315 = vsub.s32 %v312, %v314
        %v316 = vrot.slane %v301, %v315
        %v318 = vunpack.c.l.s4 1983009808
        %v319 = vunpack.c.0.s8 %v318
        %v320 = vlaneseq
        %v321 = vshrl.u32 %v320, 7
        %v322 = vsub.s32 %v319, %v321
        %v323 = vrot.slane %v309, %v322
        %v324 = vcombine.high %v302, %v302
        %v326 = vunpack.c.l.s4 1983009808
        %v327 = vunpack.c.0.s8 %v326
        %v328 = vlaneseq
        %v329 = vshrl.u32 %v328, 7
        %v330 = vsub.s32 %v327, %v329
        %v331 = vrot.slane %v302, %v330
        %v333 = vunpack.c.l.s4 1983009808
        %v334 = vunpack.c.0.s8 %v333
        %v335 = vlaneseq
        %v336 = vshrl.u32 %v335, 7
        %v337 = vsub.s32 %v334, %v336
        %v338 = vrot.slane %v324, %v337
        %v339 = vcombine.high %v303, %v303
        %v341 = vunpack.c.l.s4 1983009808
        %v342 = vunpack.c.0.s8 %v341
        %v343 = vlaneseq
        %v344 = vshrl.u32 %v343, 7
        %v345 = vsub.s32 %v342, %v344
        %v346 = vrot.slane %v303, %v345
        %v348 = vunpack.c.l.s4 1983009808
        %v349 = vunpack.c.0.s8 %v348
        %v350 = vlaneseq
        %v351 = vshrl.u32 %v350, 7
        %v352 = vsub.s32 %v349, %v351
        %v353 = vrot.slane %v339, %v352
        %v355 = vunpack.c.l.s4 1983009808
        %v356 = vunpack.c.0.s8 %v355
        %v357 = vlaneseq
        %v358 = vshrl.u32 %v357, 7
        %v359 = vsub.s32 %v356, %v358
        %v360 = vrot.slane %v304, %v359
        %361 = vrot.lane.b32.xlu0 %v316, 11
        %v362 = vpop.permute.xlu0 %361
        %363 = vrot.lane.b32.xlu0 %v323, 11
        %v364 = vpop.permute.xlu0 %363
        %365 = vrot.lane.b32.xlu0 %v331, 11
        %v366 = vpop.permute.xlu0 %365
        %367 = vrot.lane.b32.xlu0 %v338, 11
        %v368 = vpop.permute.xlu0 %367
        %369 = vrot.lane.b32.xlu0 %v346, 11
        %v370 = vpop.permute.xlu0 %369
        %371 = vrot.lane.b32.xlu0 %v353, 11
        %v372 = vpop.permute.xlu0 %371
        %373 = vrot.lane.b32.xlu0 %v360, 11
        %v374 = vpop.permute.xlu0 %373
        %v375 = vrot.slane %v362, 4
        %v376 = vrot.slane %v364, 4
        %v377 = vrot.slane %v366, 4
        %v378 = vrot.slane %v368, 4
        %v379 = vrot.slane %v370, 4
        %v380 = vrot.slane %v372, 4
        %v381 = vrot.slane %v374, 4
        %vm382 = vcmask 1043456
        %v383 = vsel %vm382, %v375, %v376
        %vm384 = vcmask 89088
        %v385 = vsel %vm384, %v362, %v383
        %v386 = vsel %vm382, %v376, %v377
        %v387 = vsel %vm384, %v364, %v386
        %v388 = vsel %vm382, %v377, %v378
        %v389 = vsel %vm384, %v366, %v388
        %v390 = vsel %vm382, %v378, %v379
        %v391 = vsel %vm384, %v368, %v390
        %v392 = vsel %vm382, %v379, %v380
        %v393 = vsel %vm384, %v370, %v392
        %v394 = vsel %vm382, %v380, %v381
        %v395 = vsel %vm384, %v372, %v394
        %402 = vst [vmem:[#allocation3] sm:$0x33] %v385
        %403 = vst [vmem:[#allocation3 + $0x8] sm:$0x33] %v387
        %404 = vst [vmem:[#allocation3 + $0x10] sm:$0x33] %v389
        %405 = vst [vmem:[#allocation3 + $0x18] sm:$0x33] %v391
        %406 = vst [vmem:[#allocation3 + $0x20] sm:$0x33] %v393
        %407 = vst [vmem:[#allocation3 + $0x28] sm:$0x33] %v395
        %v408 = vld [vmem:[%s258] sm:$0xff]
        %v409 = vld [vmem:[%s258 + $0x8] sm:$0xff]
        %v410 = vld [vmem:[%s258 + $0x10] sm:$0xff]
        %v411 = vld [vmem:[%s258 + $0x18] sm:$0x3]
        %v416 = vcombine.low %v408, %v408
        %v418 = vunpack.c.l.s4 1983009808
        %v419 = vunpack.c.0.s8 %v418
        %v420 = vlaneseq
        %v421 = vshrl.u32 %v420, 7
        %v422 = vsub.s32 %v419, %v421
        %v423 = vrot.slane %v416, %v422
        %v425 = vunpack.c.l.s4 1983009808
        %v426 = vunpack.c.0.s8 %v425
        %v427 = vlaneseq
        %v428 = vshrl.u32 %v427, 7
        %v429 = vsub.s32 %v426, %v428
        %v430 = vrot.slane %v408, %v429
        %v431 = vcombine.low %v409, %v409
        %v433 = vunpack.c.l.s4 1983009808
        %v434 = vunpack.c.0.s8 %v433
        %v435 = vlaneseq
        %v436 = vshrl.u32 %v435, 7
        %v437 = vsub.s32 %v434, %v436
        %v438 = vrot.slane %v431, %v437
        %v440 = vunpack.c.l.s4 1983009808
        %v441 = vunpack.c.0.s8 %v440
        %v442 = vlaneseq
        %v443 = vshrl.u32 %v442, 7
        %v444 = vsub.s32 %v441, %v443
        %v445 = vrot.slane %v409, %v444
        %v446 = vcombine.low %v410, %v410
        %v448 = vunpack.c.l.s4 1983009808
        %v449 = vunpack.c.0.s8 %v448
        %v450 = vlaneseq
        %v451 = vshrl.u32 %v450, 7
        %v452 = vsub.s32 %v449, %v451
        %v453 = vrot.slane %v446, %v452
        %v455 = vunpack.c.l.s4 1983009808
        %v456 = vunpack.c.0.s8 %v455
        %v457 = vlaneseq
        %v458 = vshrl.u32 %v457, 7
        %v459 = vsub.s32 %v456, %v458
        %v460 = vrot.slane %v410, %v459
        %v461 = vcombine.low %v411, %v411
        %v463 = vunpack.c.l.s4 1983009808
        %v464 = vunpack.c.0.s8 %v463
        %v465 = vlaneseq
        %v466 = vshrl.u32 %v465, 7
        %v467 = vsub.s32 %v464, %v466
        %v468 = vrot.slane %v461, %v467
        %469 = vrot.lane.b32.xlu0 %v423, 10
        %v470 = vpop.permute.xlu0 %469
        %471 = vrot.lane.b32.xlu0 %v430, 10
        %v472 = vpop.permute.xlu0 %471
        %473 = vrot.lane.b32.xlu0 %v438, 10
        %v474 = vpop.permute.xlu0 %473
        %475 = vrot.lane.b32.xlu0 %v445, 10
        %v476 = vpop.permute.xlu0 %475
        %477 = vrot.lane.b32.xlu0 %v453, 10
        %v478 = vpop.permute.xlu0 %477
        %479 = vrot.lane.b32.xlu0 %v460, 10
        %v480 = vpop.permute.xlu0 %479
        %481 = vrot.lane.b32.xlu0 %v468, 10
        %v482 = vpop.permute.xlu0 %481
        %v483 = vrot.slane %v470, 4
        %v484 = vrot.slane %v472, 4
        %v485 = vrot.slane %v474, 4
        %v486 = vrot.slane %v476, 4
        %v487 = vrot.slane %v478, 4
        %v488 = vrot.slane %v480, 4
        %v489 = vrot.slane %v482, 4
        %v490 = vsel %vm382, %v483, %v484
        %vm491 = vcmask 80896
        %v492 = vsel %vm491, %v470, %v490
        %v493 = vsel %vm382, %v484, %v485
        %v494 = vsel %vm491, %v472, %v493
        %v495 = vsel %vm382, %v485, %v486
        %v496 = vsel %vm491, %v474, %v495
        %v497 = vsel %vm382, %v486, %v487
        %v498 = vsel %vm491, %v476, %v497
        %v499 = vsel %vm382, %v487, %v488
        %v500 = vsel %vm491, %v478, %v499
        %v501 = vsel %vm382, %v488, %v489
        %v502 = vsel %vm491, %v480, %v501
        %509 = vst [vmem:[#allocation3] sm:$0xcc] %v492
        %510 = vst [vmem:[#allocation3 + $0x8] sm:$0xcc] %v494
        %511 = vst [vmem:[#allocation3 + $0x10] sm:$0xcc] %v496
        %512 = vst [vmem:[#allocation3 + $0x18] sm:$0xcc] %v498
        %513 = vst [vmem:[#allocation3 + $0x20] sm:$0xcc] %v500
        %514 = vst [vmem:[#allocation3 + $0x28] sm:$0xcc] %v502
        %v515 = vld [vmem:[%s258] sm:$0xff]
        %v516 = vld [vmem:[%s258 + $0x8] sm:$0xff]
        %v517 = vld [vmem:[%s258 + $0x10] sm:$0xff]
        %v518 = vld [vmem:[%s258 + $0x18] sm:$0x3]
        %v523 = vcombine.high %v515, %v515
        %v525 = vunpack.c.l.s4 1983009808
        %v526 = vunpack.c.0.s8 %v525
        %v527 = vlaneseq
        %v528 = vshrl.u32 %v527, 7
        %v529 = vsub.s32 %v526, %v528
        %v530 = vrot.slane %v515, %v529
        %v532 = vunpack.c.l.s4 1983009808
        %v533 = vunpack.c.0.s8 %v532
        %v534 = vlaneseq
        %v535 = vshrl.u32 %v534, 7
        %v536 = vsub.s32 %v533, %v535
        %v537 = vrot.slane %v523, %v536
        %v538 = vcombine.high %v516, %v516
        %v540 = vunpack.c.l.s4 1983009808
        %v541 = vunpack.c.0.s8 %v540
        %v542 = vlaneseq
        %v543 = vshrl.u32 %v542, 7
        %v544 = vsub.s32 %v541, %v543
        %v545 = vrot.slane %v516, %v544
        %v547 = vunpack.c.l.s4 1983009808
        %v548 = vunpack.c.0.s8 %v547
        %v549 = vlaneseq
        %v550 = vshrl.u32 %v549, 7
        %v551 = vsub.s32 %v548, %v550
        %v552 = vrot.slane %v538, %v551
        %v553 = vcombine.high %v517, %v517
        %v555 = vunpack.c.l.s4 1983009808
        %v556 = vunpack.c.0.s8 %v555
        %v557 = vlaneseq
        %v558 = vshrl.u32 %v557, 7
        %v559 = vsub.s32 %v556, %v558
        %v560 = vrot.slane %v517, %v559
        %v562 = vunpack.c.l.s4 1983009808
        %v563 = vunpack.c.0.s8 %v562
        %v564 = vlaneseq
        %v565 = vshrl.u32 %v564, 7
        %v566 = vsub.s32 %v563, %v565
        %v567 = vrot.slane %v553, %v566
        %v569 = vunpack.c.l.s4 1983009808
        %v570 = vunpack.c.0.s8 %v569
        %v571 = vlaneseq
        %v572 = vshrl.u32 %v571, 7
        %v573 = vsub.s32 %v570, %v572
        %v574 = vrot.slane %v518, %v573
        %575 = vrot.lane.b32.xlu0 %v530, 9
        %v576 = vpop.permute.xlu0 %575
        %577 = vrot.lane.b32.xlu0 %v537, 9
        %v578 = vpop.permute.xlu0 %577
        %579 = vrot.lane.b32.xlu0 %v545, 9
        %v580 = vpop.permute.xlu0 %579
        %581 = vrot.lane.b32.xlu0 %v552, 9
        %v582 = vpop.permute.xlu0 %581
        %583 = vrot.lane.b32.xlu0 %v560, 9
        %v584 = vpop.permute.xlu0 %583
        %585 = vrot.lane.b32.xlu0 %v567, 9
        %v586 = vpop.permute.xlu0 %585
        %587 = vrot.lane.b32.xlu0 %v574, 9
        %v588 = vpop.permute.xlu0 %587
        %v589 = vrot.slane %v576, 4
        %v590 = vrot.slane %v578, 4
        %v591 = vrot.slane %v580, 4
        %v592 = vrot.slane %v582, 4
        %v593 = vrot.slane %v584, 4
        %v594 = vrot.slane %v586, 4
        %v595 = vrot.slane %v588, 4
        %v596 = vsel %vm382, %v589, %v590
        %vm597 = vcmask 72704
        %v598 = vsel %vm597, %v576, %v596
        %v599 = vsel %vm382, %v590, %v591
        %v600 = vsel %vm597, %v578, %v599
        %v601 = vsel %vm382, %v591, %v592
        %v602 = vsel %vm597, %v580, %v601
        %v603 = vsel %vm382, %v592, %v593
        %v604 = vsel %vm597, %v582, %v603
        %v605 = vsel %vm382, %v593, %v594
        %v606 = vsel %vm597, %v584, %v605
        %v607 = vsel %vm382, %v594, %v595
        %v608 = vsel %vm597, %v586, %v607
        %615 = vst [vmem:[#allocation3 + $0x30] sm:$0x33] %v598
        %616 = vst [vmem:[#allocation3 + $0x38] sm:$0x33] %v600
        %617 = vst [vmem:[#allocation3 + $0x40] sm:$0x33] %v602
        %618 = vst [vmem:[#allocation3 + $0x48] sm:$0x33] %v604
        %619 = vst [vmem:[#allocation3 + $0x50] sm:$0x33] %v606
        %620 = vst [vmem:[#allocation3 + $0x58] sm:$0x33] %v608
        %v621 = vld [vmem:[%s258] sm:$0xff]
        %v622 = vld [vmem:[%s258 + $0x8] sm:$0xff]
        %v623 = vld [vmem:[%s258 + $0x10] sm:$0xff]
        %v624 = vld [vmem:[%s258 + $0x18] sm:$0x3]
        %v629 = vcombine.low %v621, %v621
        %v631 = vunpack.c.l.s4 1983009808
        %v632 = vunpack.c.0.s8 %v631
        %v633 = vlaneseq
        %v634 = vshrl.u32 %v633, 7
        %v635 = vsub.s32 %v632, %v634
        %v636 = vrot.slane %v629, %v635
        %v638 = vunpack.c.l.s4 1983009808
        %v639 = vunpack.c.0.s8 %v638
        %v640 = vlaneseq
        %v641 = vshrl.u32 %v640, 7
        %v642 = vsub.s32 %v639, %v641
        %v643 = vrot.slane %v621, %v642
        %v644 = vcombine.low %v622, %v622
        %v646 = vunpack.c.l.s4 1983009808
        %v647 = vunpack.c.0.s8 %v646
        %v648 = vlaneseq
        %v649 = vshrl.u32 %v648, 7
        %v650 = vsub.s32 %v647, %v649
        %v651 = vrot.slane %v644, %v650
        %v653 = vunpack.c.l.s4 1983009808
        %v654 = vunpack.c.0.s8 %v653
        %v655 = vlaneseq
        %v656 = vshrl.u32 %v655, 7
        %v657 = vsub.s32 %v654, %v656
        %v658 = vrot.slane %v622, %v657
        %v659 = vcombine.low %v623, %v623
        %v661 = vunpack.c.l.s4 1983009808
        %v662 = vunpack.c.0.s8 %v661
        %v663 = vlaneseq
        %v664 = vshrl.u32 %v663, 7
        %v665 = vsub.s32 %v662, %v664
        %v666 = vrot.slane %v659, %v665
        %v668 = vunpack.c.l.s4 1983009808
        %v669 = vunpack.c.0.s8 %v668
        %v670 = vlaneseq
        %v671 = vshrl.u32 %v670, 7
        %v672 = vsub.s32 %v669, %v671
        %v673 = vrot.slane %v623, %v672
        %v674 = vcombine.low %v624, %v624
        %v676 = vunpack.c.l.s4 1983009808
        %v677 = vunpack.c.0.s8 %v676
        %v678 = vlaneseq
        %v679 = vshrl.u32 %v678, 7
        %v680 = vsub.s32 %v677, %v679
        %v681 = vrot.slane %v674, %v680
        %682 = vrot.lane.b32.xlu0 %v636, 1
        %v683 = vpop.permute.xlu0 %682
        %684 = vrot.lane.b32.xlu0 %v643, 1
        %v685 = vpop.permute.xlu0 %684
        %686 = vrot.lane.b32.xlu0 %v651, 1
        %v687 = vpop.permute.xlu0 %686
        %688 = vrot.lane.b32.xlu0 %v658, 1
        %v689 = vpop.permute.xlu0 %688
        %690 = vrot.lane.b32.xlu0 %v666, 1
        %v691 = vpop.permute.xlu0 %690
        %692 = vrot.lane.b32.xlu0 %v673, 1
        %v693 = vpop.permute.xlu0 %692
        %694 = vrot.lane.b32.xlu0 %v681, 1
        %v695 = vpop.permute.xlu0 %694
        %v696 = vrot.slane %v683, 4
        %v697 = vrot.slane %v685, 4
        %v698 = vrot.slane %v687, 4
        %v699 = vrot.slane %v689, 4
        %v700 = vrot.slane %v691, 4
        %v701 = vrot.slane %v693, 4
        %v702 = vrot.slane %v695, 4
        %v703 = vsel %vm382, %v696, %v697
        %vm704 = vcmask 7168
        %v705 = vsel %vm704, %v683, %v703
        %v706 = vsel %vm382, %v697, %v698
        %v707 = vsel %vm704, %v685, %v706
        %v708 = vsel %vm382, %v698, %v699
        %v709 = vsel %vm704, %v687, %v708
        %v710 = vsel %vm382, %v699, %v700
        %v711 = vsel %vm704, %v689, %v710
        %v712 = vsel %vm382, %v700, %v701
        %v713 = vsel %vm704, %v691, %v712
        %v714 = vsel %vm382, %v701, %v702
        %v715 = vsel %vm704, %v693, %v714
        %722 = vst [vmem:[#allocation3 + $0x30] sm:$0xcc] %v705
        %723 = vst [vmem:[#allocation3 + $0x38] sm:$0xcc] %v707
        %724 = vst [vmem:[#allocation3 + $0x40] sm:$0xcc] %v709
        %725 = vst [vmem:[#allocation3 + $0x48] sm:$0xcc] %v711
        %726 = vst [vmem:[#allocation3 + $0x50] sm:$0xcc] %v713
        %727 = vst [vmem:[#allocation3 + $0x58] sm:$0xcc] %v715
        %v728 = vld [vmem:[%s258 + $0x2] sm:$0xff]
        %v729 = vld [vmem:[%s258 + $0xa] sm:$0xff]
        %v730 = vld [vmem:[%s258 + $0x12] sm:$0xff]
        %v734 = vcombine.high %v728, %v728
        %v736 = vunpack.c.l.s4 1983009808
        %v737 = vunpack.c.0.s8 %v736
        %v738 = vlaneseq
        %v739 = vshrl.u32 %v738, 7
        %v740 = vsub.s32 %v737, %v739
        %v741 = vrot.slane %v728, %v740
        %v743 = vunpack.c.l.s4 1983009808
        %v744 = vunpack.c.0.s8 %v743
        %v745 = vlaneseq
        %v746 = vshrl.u32 %v745, 7
        %v747 = vsub.s32 %v744, %v746
        %v748 = vrot.slane %v734, %v747
        %v749 = vcombine.high %v729, %v729
        %v751 = vunpack.c.l.s4 1983009808
        %v752 = vunpack.c.0.s8 %v751
        %v753 = vlaneseq
        %v754 = vshrl.u32 %v753, 7
        %v755 = vsub.s32 %v752, %v754
        %v756 = vrot.slane %v729, %v755
        %v758 = vunpack.c.l.s4 1983009808
        %v759 = vunpack.c.0.s8 %v758
        %v760 = vlaneseq
        %v761 = vshrl.u32 %v760, 7
        %v762 = vsub.s32 %v759, %v761
        %v763 = vrot.slane %v749, %v762
        %v764 = vcombine.high %v730, %v730
        %v766 = vunpack.c.l.s4 1983009808
        %v767 = vunpack.c.0.s8 %v766
        %v768 = vlaneseq
        %v769 = vshrl.u32 %v768, 7
        %v770 = vsub.s32 %v767, %v769
        %v771 = vrot.slane %v730, %v770
        %v773 = vunpack.c.l.s4 1983009808
        %v774 = vunpack.c.0.s8 %v773
        %v775 = vlaneseq
        %v776 = vshrl.u32 %v775, 7
        %v777 = vsub.s32 %v774, %v776
        %v778 = vrot.slane %v764, %v777
        %785 = vst [vmem:[#allocation3 + $0x60] sm:$0x33] %v741
        %786 = vst [vmem:[#allocation3 + $0x68] sm:$0x33] %v748
        %787 = vst [vmem:[#allocation3 + $0x70] sm:$0x33] %v756
        %788 = vst [vmem:[#allocation3 + $0x78] sm:$0x33] %v763
        %789 = vst [vmem:[#allocation3 + $0x80] sm:$0x33] %v771
        %790 = vst [vmem:[#allocation3 + $0x88] sm:$0x33] %v778
        %v791 = vld [vmem:[%s258 + $0x2] sm:$0xff]
        %v792 = vld [vmem:[%s258 + $0xa] sm:$0xff]
        %v793 = vld [vmem:[%s258 + $0x12] sm:$0xff]
        %v794 = vld [vmem:[%s258 + $0x1a] sm:$0x3]
        %v799 = vcombine.low %v791, %v791
        %v801 = vunpack.c.l.s4 1983009808
        %v802 = vunpack.c.0.s8 %v801
        %v803 = vlaneseq
        %v804 = vshrl.u32 %v803, 7
        %v805 = vsub.s32 %v802, %v804
        %v806 = vrot.slane %v799, %v805
        %v808 = vunpack.c.l.s4 1983009808
        %v809 = vunpack.c.0.s8 %v808
        %v810 = vlaneseq
        %v811 = vshrl.u32 %v810, 7
        %v812 = vsub.s32 %v809, %v811
        %v813 = vrot.slane %v791, %v812
        %v814 = vcombine.low %v792, %v792
        %v816 = vunpack.c.l.s4 1983009808
        %v817 = vunpack.c.0.s8 %v816
        %v818 = vlaneseq
        %v819 = vshrl.u32 %v818, 7
        %v820 = vsub.s32 %v817, %v819
        %v821 = vrot.slane %v814, %v820
        %v823 = vunpack.c.l.s4 1983009808
        %v824 = vunpack.c.0.s8 %v823
        %v825 = vlaneseq
        %v826 = vshrl.u32 %v825, 7
        %v827 = vsub.s32 %v824, %v826
        %v828 = vrot.slane %v792, %v827
        %v829 = vcombine.low %v793, %v793
        %v831 = vunpack.c.l.s4 1983009808
        %v832 = vunpack.c.0.s8 %v831
        %v833 = vlaneseq
        %v834 = vshrl.u32 %v833, 7
        %v835 = vsub.s32 %v832, %v834
        %v836 = vrot.slane %v829, %v835
        %v838 = vunpack.c.l.s4 1983009808
        %v839 = vunpack.c.0.s8 %v838
        %v840 = vlaneseq
        %v841 = vshrl.u32 %v840, 7
        %v842 = vsub.s32 %v839, %v841
        %v843 = vrot.slane %v793, %v842
        %v844 = vcombine.low %v794, %v794
        %v846 = vunpack.c.l.s4 1983009808
        %v847 = vunpack.c.0.s8 %v846
        %v848 = vlaneseq
        %v849 = vshrl.u32 %v848, 7
        %v850 = vsub.s32 %v847, %v849
        %v851 = vrot.slane %v844, %v850
        %852 = vrot.lane.b32.xlu0 %v806, 127
        %v853 = vpop.permute.xlu0 %852
        %854 = vrot.lane.b32.xlu0 %v813, 127
        %v855 = vpop.permute.xlu0 %854
        %856 = vrot.lane.b32.xlu0 %v821, 127
        %v857 = vpop.permute.xlu0 %856
        %858 = vrot.lane.b32.xlu0 %v828, 127
        %v859 = vpop.permute.xlu0 %858
        %860 = vrot.lane.b32.xlu0 %v836, 127
        %v861 = vpop.permute.xlu0 %860
        %862 = vrot.lane.b32.xlu0 %v843, 127
        %v863 = vpop.permute.xlu0 %862
        %864 = vrot.lane.b32.xlu0 %v851, 127
        %v865 = vpop.permute.xlu0 %864
        %v866 = vrot.slane %v853, 4
        %v867 = vrot.slane %v855, 4
        %v868 = vrot.slane %v857, 4
        %v869 = vrot.slane %v859, 4
        %v870 = vrot.slane %v861, 4
        %v871 = vrot.slane %v863, 4
        %v872 = vrot.slane %v865, 4
        %v873 = vsel %vm382, %v866, %v867
        %vm874 = vcmask 1039360
        %v875 = vsel %vm874, %v853, %v873
        %v876 = vsel %vm382, %v867, %v868
        %v877 = vsel %vm874, %v855, %v876
        %v878 = vsel %vm382, %v868, %v869
        %v879 = vsel %vm874, %v857, %v878
        %v880 = vsel %vm382, %v869, %v870
        %v881 = vsel %vm874, %v859, %v880
        %v882 = vsel %vm382, %v870, %v871
        %v883 = vsel %vm874, %v861, %v882
        %v884 = vsel %vm382, %v871, %v872
        %v885 = vsel %vm874, %v863, %v884
        %892 = vst [vmem:[#allocation3 + $0x60] sm:$0xcc] %v875
        %893 = vst [vmem:[#allocation3 + $0x68] sm:$0xcc] %v877
        %894 = vst [vmem:[#allocation3 + $0x70] sm:$0xcc] %v879
        %895 = vst [vmem:[#allocation3 + $0x78] sm:$0xcc] %v881
        %896 = vst [vmem:[#allocation3 + $0x80] sm:$0xcc] %v883
        %897 = vst [vmem:[#allocation3 + $0x88] sm:$0xcc] %v885
        %v898 = vld [vmem:[%s258 + $0x2] sm:$0xff]
        %v899 = vld [vmem:[%s258 + $0xa] sm:$0xff]
        %v900 = vld [vmem:[%s258 + $0x12] sm:$0xff]
        %v901 = vld [vmem:[%s258 + $0x1a] sm:$0x3]
        %v906 = vcombine.high %v898, %v898
        %v908 = vunpack.c.l.s4 1983009808
        %v909 = vunpack.c.0.s8 %v908
        %v910 = vlaneseq
        %v911 = vshrl.u32 %v910, 7
        %v912 = vsub.s32 %v909, %v911
        %v913 = vrot.slane %v898, %v912
        %v915 = vunpack.c.l.s4 1983009808
        %v916 = vunpack.c.0.s8 %v915
        %v917 = vlaneseq
        %v918 = vshrl.u32 %v917, 7
        %v919 = vsub.s32 %v916, %v918
        %v920 = vrot.slane %v906, %v919
        %v921 = vcombine.high %v899, %v899
        %v923 = vunpack.c.l.s4 1983009808
        %v924 = vunpack.c.0.s8 %v923
        %v925 = vlaneseq
        %v926 = vshrl.u32 %v925, 7
        %v927 = vsub.s32 %v924, %v926
        %v928 = vrot.slane %v899, %v927
        %v930 = vunpack.c.l.s4 1983009808
        %v931 = vunpack.c.0.s8 %v930
        %v932 = vlaneseq
        %v933 = vshrl.u32 %v932, 7
        %v934 = vsub.s32 %v931, %v933
        %v935 = vrot.slane %v921, %v934
        %v936 = vcombine.high %v900, %v900
        %v938 = vunpack.c.l.s4 1983009808
        %v939 = vunpack.c.0.s8 %v938
        %v940 = vlaneseq
        %v941 = vshrl.u32 %v940, 7
        %v942 = vsub.s32 %v939, %v941
        %v943 = vrot.slane %v900, %v942
        %v945 = vunpack.c.l.s4 1983009808
        %v946 = vunpack.c.0.s8 %v945
        %v947 = vlaneseq
        %v948 = vshrl.u32 %v947, 7
        %v949 = vsub.s32 %v946, %v948
        %v950 = vrot.slane %v936, %v949
        %v952 = vunpack.c.l.s4 1983009808
        %v953 = vunpack.c.0.s8 %v952
        %v954 = vlaneseq
        %v955 = vshrl.u32 %v954, 7
        %v956 = vsub.s32 %v953, %v955
        %v957 = vrot.slane %v901, %v956
        %958 = vrot.lane.b32.xlu0 %v913, 119
        %v959 = vpop.permute.xlu0 %958
        %960 = vrot.lane.b32.xlu0 %v920, 119
        %v961 = vpop.permute.xlu0 %960
        %962 = vrot.lane.b32.xlu0 %v928, 119
        %v963 = vpop.permute.xlu0 %962
        %964 = vrot.lane.b32.xlu0 %v935, 119
        %v965 = vpop.permute.xlu0 %964
        %966 = vrot.lane.b32.xlu0 %v943, 119
        %v967 = vpop.permute.xlu0 %966
        %968 = vrot.lane.b32.xlu0 %v950, 119
        %v969 = vpop.permute.xlu0 %968
        %970 = vrot.lane.b32.xlu0 %v957, 119
        %v971 = vpop.permute.xlu0 %970
        %v972 = vrot.slane %v959, 4
        %v973 = vrot.slane %v961, 4
        %v974 = vrot.slane %v963, 4
        %v975 = vrot.slane %v965, 4
        %v976 = vrot.slane %v967, 4
        %v977 = vrot.slane %v969, 4
        %v978 = vrot.slane %v971, 4
        %v979 = vsel %vm382, %v972, %v973
        %vm980 = vcmask 973824
        %v981 = vsel %vm980, %v959, %v979
        %v982 = vsel %vm382, %v973, %v974
        %v983 = vsel %vm980, %v961, %v982
        %v984 = vsel %vm382, %v974, %v975
        %v985 = vsel %vm980, %v963, %v984
        %v986 = vsel %vm382, %v975, %v976
        %v987 = vsel %vm980, %v965, %v986
        %v988 = vsel %vm382, %v976, %v977
        %v989 = vsel %vm980, %v967, %v988
        %v990 = vsel %vm382, %v977, %v978
        %v991 = vsel %vm980, %v969, %v990
        %998 = vst [vmem:[#allocation3 + $0x90] sm:$0x33] %v981
        %999 = vst [vmem:[#allocation3 + $0x98] sm:$0x33] %v983
        %1000 = vst [vmem:[#allocation3 + $0xa0] sm:$0x33] %v985
        %1001 = vst [vmem:[#allocation3 + $0xa8] sm:$0x33] %v987
        %1002 = vst [vmem:[#allocation3 + $0xb0] sm:$0x33] %v989
        %1003 = vst [vmem:[#allocation3 + $0xb8] sm:$0x33] %v991
        %v1004 = vld [vmem:[%s258 + $0x2] sm:$0xff]
        %v1005 = vld [vmem:[%s258 + $0xa] sm:$0xff]
        %v1006 = vld [vmem:[%s258 + $0x12] sm:$0xff]
        %v1007 = vld [vmem:[%s258 + $0x1a] sm:$0x3]
        %v1012 = vcombine.low %v1004, %v1004
        %v1014 = vunpack.c.l.s4 1983009808
        %v1015 = vunpack.c.0.s8 %v1014
        %v1016 = vlaneseq
        %v1017 = vshrl.u32 %v1016, 7
        %v1018 = vsub.s32 %v1015, %v1017
        %v1019 = vrot.slane %v1012, %v1018
        %v1021 = vunpack.c.l.s4 1983009808
        %v1022 = vunpack.c.0.s8 %v1021
        %v1023 = vlaneseq
        %v1024 = vshrl.u32 %v1023, 7
        %v1025 = vsub.s32 %v1022, %v1024
        %v1026 = vrot.slane %v1004, %v1025
        %v1027 = vcombine.low %v1005, %v1005
        %v1029 = vunpack.c.l.s4 1983009808
        %v1030 = vunpack.c.0.s8 %v1029
        %v1031 = vlaneseq
        %v1032 = vshrl.u32 %v1031, 7
        %v1033 = vsub.s32 %v1030, %v1032
        %v1034 = vrot.slane %v1027, %v1033
        %v1036 = vunpack.c.l.s4 1983009808
        %v1037 = vunpack.c.0.s8 %v1036
        %v1038 = vlaneseq
        %v1039 = vshrl.u32 %v1038, 7
        %v1040 = vsub.s32 %v1037, %v1039
        %v1041 = vrot.slane %v1005, %v1040
        %v1042 = vcombine.low %v1006, %v1006
        %v1044 = vunpack.c.l.s4 1983009808
        %v1045 = vunpack.c.0.s8 %v1044
        %v1046 = vlaneseq
        %v1047 = vshrl.u32 %v1046, 7
        %v1048 = vsub.s32 %v1045, %v1047
        %v1049 = vrot.slane %v1042, %v1048
        %v1051 = vunpack.c.l.s4 1983009808
        %v1052 = vunpack.c.0.s8 %v1051
        %v1053 = vlaneseq
        %v1054 = vshrl.u32 %v1053, 7
        %v1055 = vsub.s32 %v1052, %v1054
        %v1056 = vrot.slane %v1006, %v1055
        %v1057 = vcombine.low %v1007, %v1007
        %v1059 = vunpack.c.l.s4 1983009808
        %v1060 = vunpack.c.0.s8 %v1059
        %v1061 = vlaneseq
        %v1062 = vshrl.u32 %v1061, 7
        %v1063 = vsub.s32 %v1060, %v1062
        %v1064 = vrot.slane %v1057, %v1063
        %1065 = vrot.lane.b32.xlu0 %v1019, 118
        %v1066 = vpop.permute.xlu0 %1065
        %1067 = vrot.lane.b32.xlu0 %v1026, 118
        %v1068 = vpop.permute.xlu0 %1067
        %1069 = vrot.lane.b32.xlu0 %v1034, 118
        %v1070 = vpop.permute.xlu0 %1069
        %1071 = vrot.lane.b32.xlu0 %v1041, 118
        %v1072 = vpop.permute.xlu0 %1071
        %1073 = vrot.lane.b32.xlu0 %v1049, 118
        %v1074 = vpop.permute.xlu0 %1073
        %1075 = vrot.lane.b32.xlu0 %v1056, 118
        %v1076 = vpop.permute.xlu0 %1075
        %1077 = vrot.lane.b32.xlu0 %v1064, 118
        %v1078 = vpop.permute.xlu0 %1077
        %v1079 = vrot.slane %v1066, 4
        %v1080 = vrot.slane %v1068, 4
        %v1081 = vrot.slane %v1070, 4
        %v1082 = vrot.slane %v1072, 4
        %v1083 = vrot.slane %v1074, 4
        %v1084 = vrot.slane %v1076, 4
        %v1085 = vrot.slane %v1078, 4
        %v1086 = vsel %vm382, %v1079, %v1080
        %vm1087 = vcmask 965632
        %v1088 = vsel %vm1087, %v1066, %v1086
        %v1089 = vsel %vm382, %v1080, %v1081
        %v1090 = vsel %vm1087, %v1068, %v1089
        %v1091 = vsel %vm382, %v1081, %v1082
        %v1092 = vsel %vm1087, %v1070, %v1091
        %v1093 = vsel %vm382, %v1082, %v1083
        %v1094 = vsel %vm1087, %v1072, %v1093
        %v1095 = vsel %vm382, %v1083, %v1084
        %v1096 = vsel %vm1087, %v1074, %v1095
        %v1097 = vsel %vm382, %v1084, %v1085
        %v1098 = vsel %vm1087, %v1076, %v1097
        %1105 = vst [vmem:[#allocation3 + $0x90] sm:$0xcc] %v1088
        %1106 = vst [vmem:[#allocation3 + $0x98] sm:$0xcc] %v1090
        %1107 = vst [vmem:[#allocation3 + $0xa0] sm:$0xcc] %v1092
        %1108 = vst [vmem:[#allocation3 + $0xa8] sm:$0xcc] %v1094
        %1109 = vst [vmem:[#allocation3 + $0xb0] sm:$0xcc] %v1096
        %1110 = vst [vmem:[#allocation3 + $0xb8] sm:$0xcc] %v1098
        %v1111 = vld [vmem:[%s258 + $0x2] sm:$0xff]
        %v1112 = vld [vmem:[%s258 + $0xa] sm:$0xff]
        %v1113 = vld [vmem:[%s258 + $0x12] sm:$0xff]
        %v1114 = vld [vmem:[%s258 + $0x1a] sm:$0x3]
        %v1119 = vcombine.high %v1111, %v1111
        %v1121 = vunpack.c.l.s4 1983009808
        %v1122 = vunpack.c.0.s8 %v1121
        %v1123 = vlaneseq
        %v1124 = vshrl.u32 %v1123, 7
        %v1125 = vsub.s32 %v1122, %v1124
        %v1126 = vrot.slane %v1111, %v1125
        %v1128 = vunpack.c.l.s4 1983009808
        %v1129 = vunpack.c.0.s8 %v1128
        %v1130 = vlaneseq
        %v1131 = vshrl.u32 %v1130, 7
        %v1132 = vsub.s32 %v1129, %v1131
        %v1133 = vrot.slane %v1119, %v1132
        %v1134 = vcombine.high %v1112, %v1112
        %v1136 = vunpack.c.l.s4 1983009808
        %v1137 = vunpack.c.0.s8 %v1136
        %v1138 = vlaneseq
        %v1139 = vshrl.u32 %v1138, 7
        %v1140 = vsub.s32 %v1137, %v1139
        %v1141 = vrot.slane %v1112, %v1140
        %v1143 = vunpack.c.l.s4 1983009808
        %v1144 = vunpack.c.0.s8 %v1143
        %v1145 = vlaneseq
        %v1146 = vshrl.u32 %v1145, 7
        %v1147 = vsub.s32 %v1144, %v1146
        %v1148 = vrot.slane %v1134, %v1147
        %v1149 = vcombine.high %v1113, %v1113
        %v1151 = vunpack.c.l.s4 1983009808
        %v1152 = vunpack.c.0.s8 %v1151
        %v1153 = vlaneseq
        %v1154 = vshrl.u32 %v1153, 7
        %v1155 = vsub.s32 %v1152, %v1154
        %v1156 = vrot.slane %v1113, %v1155
        %v1158 = vunpack.c.l.s4 1983009808
        %v1159 = vunpack.c.0.s8 %v1158
        %v1160 = vlaneseq
        %v1161 = vshrl.u32 %v1160, 7
        %v1162 = vsub.s32 %v1159, %v1161
        %v1163 = vrot.slane %v1149, %v1162
        %v1165 = vunpack.c.l.s4 1983009808
        %v1166 = vunpack.c.0.s8 %v1165
        %v1167 = vlaneseq
        %v1168 = vshrl.u32 %v1167, 7
        %v1169 = vsub.s32 %v1166, %v1168
        %v1170 = vrot.slane %v1114, %v1169
        %1171 = vrot.lane.b32.xlu0 %v1126, 117
        %v1172 = vpop.permute.xlu0 %1171
        %1173 = vrot.lane.b32.xlu0 %v1133, 117
        %v1174 = vpop.permute.xlu0 %1173
        %1175 = vrot.lane.b32.xlu0 %v1141, 117
        %v1176 = vpop.permute.xlu0 %1175
        %1177 = vrot.lane.b32.xlu0 %v1148, 117
        %v1178 = vpop.permute.xlu0 %1177
        %1179 = vrot.lane.b32.xlu0 %v1156, 117
        %v1180 = vpop.permute.xlu0 %1179
        %1181 = vrot.lane.b32.xlu0 %v1163, 117
        %v1182 = vpop.permute.xlu0 %1181
        %1183 = vrot.lane.b32.xlu0 %v1170, 117
        %v1184 = vpop.permute.xlu0 %1183
        %v1185 = vrot.slane %v1172, 4
        %v1186 = vrot.slane %v1174, 4
        %v1187 = vrot.slane %v1176, 4
        %v1188 = vrot.slane %v1178, 4
        %v1189 = vrot.slane %v1180, 4
        %v1190 = vrot.slane %v1182, 4
        %v1191 = vrot.slane %v1184, 4
        %v1192 = vsel %vm382, %v1185, %v1186
        %vm1193 = vcmask 957440
        %v1194 = vsel %vm1193, %v1172, %v1192
        %v1195 = vsel %vm382, %v1186, %v1187
        %v1196 = vsel %vm1193, %v1174, %v1195
        %v1197 = vsel %vm382, %v1187, %v1188
        %v1198 = vsel %vm1193, %v1176, %v1197
        %v1199 = vsel %vm382, %v1188, %v1189
        %v1200 = vsel %vm1193, %v1178, %v1199
        %v1201 = vsel %vm382, %v1189, %v1190
        %v1202 = vsel %vm1193, %v1180, %v1201
        %v1203 = vsel %vm382, %v1190, %v1191
        %v1204 = vsel %vm1193, %v1182, %v1203
        %1211 = vst [vmem:[#allocation3 + $0xc0] sm:$0x33] %v1194
        %1212 = vst [vmem:[#allocation3 + $0xc8] sm:$0x33] %v1196
        %1213 = vst [vmem:[#allocation3 + $0xd0] sm:$0x33] %v1198
        %1214 = vst [vmem:[#allocation3 + $0xd8] sm:$0x33] %v1200
        %1215 = vst [vmem:[#allocation3 + $0xe0] sm:$0x33] %v1202
        %1216 = vst [vmem:[#allocation3 + $0xe8] sm:$0x33] %v1204
        %v1217 = vld [vmem:[%s2] sm:$0xf]
        %v1218 = vld [vmem:[#allocation3] sm:$0xff]
        %v1219 = vld [vmem:[#allocation3 + $0x8] sm:$0xff]
        %v1220 = vld [vmem:[#allocation3 + $0x10] sm:$0xff]
        %v1221 = vld [vmem:[#allocation3 + $0x18] sm:$0xff]
        %v1222 = vld [vmem:[#allocation3 + $0x20] sm:$0xff]
        %v1223 = vld [vmem:[#allocation3 + $0x30] sm:$0xff]
        %v1224 = vld [vmem:[#allocation3 + $0x38] sm:$0xff]
        %v1225 = vld [vmem:[#allocation3 + $0x40] sm:$0xff]
        %v1226 = vld [vmem:[#allocation3 + $0x48] sm:$0xff]
        %v1227 = vld [vmem:[#allocation3 + $0x50] sm:$0xff]
        %v1228 = vld [vmem:[#allocation3 + $0x60] sm:$0xff]
        %v1229 = vld [vmem:[#allocation3 + $0x68] sm:$0xff]
        %v1230 = vld [vmem:[#allocation3 + $0x70] sm:$0xff]
        %v1231 = vld [vmem:[#allocation3 + $0x78] sm:$0xff]
        %v1232 = vld [vmem:[#allocation3 + $0x80] sm:$0xff]
        %v1233 = vld [vmem:[#allocation3 + $0x90] sm:$0xff]
        %v1234 = vld [vmem:[#allocation3 + $0x98] sm:$0xff]
        %v1235 = vld [vmem:[#allocation3 + $0xa0] sm:$0xff]
        %v1236 = vld [vmem:[#allocation3 + $0xa8] sm:$0xff]
        %v1237 = vld [vmem:[#allocation3 + $0xb0] sm:$0xff]
        %v1238 = vld [vmem:[#allocation3 + $0xc0] sm:$0x33]
        %v1239 = vld [vmem:[#allocation3 + $0xc8] sm:$0x33]
        %v1240 = vld [vmem:[#allocation3 + $0xd0] sm:$0x33]
        %v1241 = vld [vmem:[#allocation3 + $0xd8] sm:$0x33]
        %v1242 = vld [vmem:[#allocation3 + $0xe0] sm:$0x33]
        %s1243 = scalar_lea.vmem %s2, 4
        %v1244 = vld [vmem:[%s1243] sm:$0xf]
        %v1245 = vld [vmem:[#allocation3 + $0x4] sm:$0xff]
        %v1246 = vld [vmem:[#allocation3 + $0xc] sm:$0xff]
        %v1247 = vld [vmem:[#allocation3 + $0x14] sm:$0xff]
        %v1248 = vld [vmem:[#allocation3 + $0x1c] sm:$0xff]
        %v1249 = vld [vmem:[#allocation3 + $0x24] sm:$0xff]
        %v1250 = vld [vmem:[#allocation3 + $0x34] sm:$0xff]
        %v1251 = vld [vmem:[#allocation3 + $0x3c] sm:$0xff]
        %v1252 = vld [vmem:[#allocation3 + $0x44] sm:$0xff]
        %v1253 = vld [vmem:[#allocation3 + $0x4c] sm:$0xff]
        %v1254 = vld [vmem:[#allocation3 + $0x54] sm:$0xff]
        %v1255 = vld [vmem:[#allocation3 + $0x64] sm:$0xff]
        %v1256 = vld [vmem:[#allocation3 + $0x6c] sm:$0xff]
        %v1257 = vld [vmem:[#allocation3 + $0x74] sm:$0xff]
        %v1258 = vld [vmem:[#allocation3 + $0x7c] sm:$0xff]
        %v1259 = vld [vmem:[#allocation3 + $0x84] sm:$0xff]
        %v1260 = vld [vmem:[#allocation3 + $0x94] sm:$0xff]
        %v1261 = vld [vmem:[#allocation3 + $0x9c] sm:$0xff]
        %v1262 = vld [vmem:[#allocation3 + $0xa4] sm:$0xff]
        %v1263 = vld [vmem:[#allocation3 + $0xac] sm:$0xff]
        %v1264 = vld [vmem:[#allocation3 + $0xb4] sm:$0xff]
        %v1265 = vld [vmem:[#allocation3 + $0xc4] sm:$0x33]
        %v1266 = vld [vmem:[#allocation3 + $0xcc] sm:$0x33]
        %v1267 = vld [vmem:[#allocation3 + $0xd4] sm:$0x33]
        %v1268 = vld [vmem:[#allocation3 + $0xdc] sm:$0x33]
        %v1269 = vld [vmem:[#allocation3 + $0xe4] sm:$0x33]
        %v1295 = vunpack.c.l.b16 %v1245
        %v1296 = vunpack.c.h.b16 %v1245
        %v1297 = vunpack.c.l.b16 %v1246
        %v1298 = vunpack.c.h.b16 %v1246
        %v1299 = vunpack.c.l.b16 %v1247
        %v1300 = vunpack.c.h.b16 %v1247
        %v1301 = vunpack.c.l.b16 %v1248
        %v1302 = vunpack.c.h.b16 %v1248
        %v1303 = vunpack.c.l.b16 %v1249
        %v1304 = vunpack.c.h.b16 %v1249
        %v1305 = vunpack.c.l.b16 %v1250
        %v1306 = vunpack.c.h.b16 %v1250
        %v1307 = vunpack.c.l.b16 %v1251
        %v1308 = vunpack.c.h.b16 %v1251
        %v1309 = vunpack.c.l.b16 %v1252
        %v1310 = vunpack.c.h.b16 %v1252
        %v1311 = vunpack.c.l.b16 %v1253
        %v1312 = vunpack.c.h.b16 %v1253
        %v1313 = vunpack.c.l.b16 %v1254
        %v1314 = vunpack.c.h.b16 %v1254
        %v1315 = vunpack.c.l.b16 %v1255
        %v1316 = vunpack.c.h.b16 %v1255
        %v1317 = vunpack.c.l.b16 %v1256
        %v1318 = vunpack.c.h.b16 %v1256
        %v1319 = vunpack.c.l.b16 %v1257
        %v1320 = vunpack.c.h.b16 %v1257
        %v1321 = vunpack.c.l.b16 %v1258
        %v1322 = vunpack.c.h.b16 %v1258
        %v1323 = vunpack.c.l.b16 %v1259
        %v1324 = vunpack.c.h.b16 %v1259
        %v1325 = vunpack.c.l.b16 %v1260
        %v1326 = vunpack.c.h.b16 %v1260
        %v1327 = vunpack.c.l.b16 %v1261
        %v1328 = vunpack.c.h.b16 %v1261
        %v1329 = vunpack.c.l.b16 %v1262
        %v1330 = vunpack.c.h.b16 %v1262
        %v1331 = vunpack.c.l.b16 %v1263
        %v1332 = vunpack.c.h.b16 %v1263
        %v1333 = vunpack.c.l.b16 %v1264
        %v1334 = vunpack.c.h.b16 %v1264
        %v1335 = vunpack.c.l.b16 %v1265
        %v1336 = vunpack.c.h.b16 %v1265
        %v1337 = vunpack.c.l.b16 %v1266
        %v1338 = vunpack.c.h.b16 %v1266
        %v1339 = vunpack.c.l.b16 %v1267
        %v1340 = vunpack.c.h.b16 %v1267
        %v1341 = vunpack.c.l.b16 %v1268
        %v1342 = vunpack.c.h.b16 %v1268
        %v1343 = vunpack.c.l.b16 %v1269
        %v1344 = vunpack.c.h.b16 %v1269
        %v1345 = vpack.c.b16 %v1305, %v1295
        %v1346 = vpack.c.b16 %v1306, %v1296
        %v1347 = vpack.c.b16 %v1307, %v1297
        %v1348 = vpack.c.b16 %v1308, %v1298
        %v1349 = vpack.c.b16 %v1309, %v1299
        %v1350 = vpack.c.b16 %v1310, %v1300
        %v1351 = vpack.c.b16 %v1311, %v1301
        %v1352 = vpack.c.b16 %v1312, %v1302
        %v1353 = vpack.c.b16 %v1313, %v1303
        %v1354 = vpack.c.b16 %v1314, %v1304
        %v1355 = vpack.c.b16 %v1325, %v1315
        %v1356 = vpack.c.b16 %v1326, %v1316
        %v1357 = vpack.c.b16 %v1327, %v1317
        %v1358 = vpack.c.b16 %v1328, %v1318
        %v1359 = vpack.c.b16 %v1329, %v1319
        %v1360 = vpack.c.b16 %v1330, %v1320
        %v1361 = vpack.c.b16 %v1331, %v1321
        %v1362 = vpack.c.b16 %v1332, %v1322
        %v1363 = vpack.c.b16 %v1333, %v1323
        %v1364 = vpack.c.b16 %v1334, %v1324
        %v1365 = vpack.c.b16 %v1335, %v1335
        %v1366 = vpack.c.b16 %v1336, %v1336
        %v1367 = vpack.c.b16 %v1337, %v1337
        %v1368 = vpack.c.b16 %v1338, %v1338
        %v1369 = vpack.c.b16 %v1339, %v1339
        %v1370 = vpack.c.b16 %v1340, %v1340
        %v1371 = vpack.c.b16 %v1341, %v1341
        %v1372 = vpack.c.b16 %v1342, %v1342
        %v1373 = vpack.c.b16 %v1343, %v1343
        %v1374 = vpack.c.b16 %v1344, %v1344
        %vm1395 = vcmask 293888
        %v1397 = vsel %vm1395, %v1244, 0
        %vm1399 = vcmask 1041408
        %v1401 = vsel %vm1399, %v1365, 0
        %v1404 = vsel %vm1399, %v1366, 0
        %v1407 = vsel %vm1399, %v1367, 0
        %v1410 = vsel %vm1399, %v1368, 0
        %v1413 = vsel %vm1399, %v1369, 0
        %v1416 = vsel %vm1399, %v1370, 0
        %v1419 = vsel %vm1399, %v1371, 0
        %v1422 = vsel %vm1399, %v1372, 0
        %v1425 = vsel %vm1399, %v1373, 0
        %v1428 = vsel %vm1399, %v1374, 0
        %1430 = vmatprep.subr.bf16.mxu0 %v1346
        %1431 = vmatpush1.bf16.msra.mxu0 %v1345
        %1432 = vmatprep.subr.bf16.mxu0 %v1356
        %1433 = vmatpush1.bf16.msra.mxu0 %v1355
        %1434 = vmatprep.subr.bf16.mxu0 %v1404
        %1435 = vmatpush1.bf16.msra.mxu0 %v1401
        %1436 = vmatprep.subr.bf16.mxu0 0
        %1437 = vmatpush1.bf16.msra.mxu0 0
        %1438 = vmatprep.subr.bf16.mxu0 0
        %1439 = vmatpush1.bf16.msra.mxu0 0
        %1440 = vmatprep.subr.bf16.mxu0 0
        %1441 = vmatpush1.bf16.msra.mxu0 0
        %1442 = vmatprep.subr.bf16.mxu0 0
        %1443 = vmatpush1.bf16.msra.mxu0 0
        %1444 = vmatprep.subr.bf16.mxu0 0
        %1445 = vmatpush1.bf16.msra.mxu0 0
        %1446 = vmatprep.subr.bf16.mxu0 0
        %1447 = vmatpush1.bf16.msra.mxu0 0
        %1448 = vmatprep.subr.bf16.mxu0 0
        %1449 = vmatpush1.bf16.msra.mxu0 0
        %1450 = vmatprep.subr.bf16.mxu0 0
        %1451 = vmatpush1.bf16.msra.mxu0 0
        %1452 = vmatprep.subr.bf16.mxu0 0
        %1453 = vmatpush1.bf16.msra.mxu0 0
        %1454 = vmatprep.subr.bf16.mxu0 0
        %1455 = vmatpush1.bf16.msra.mxu0 0
        %1456 = vmatprep.subr.bf16.mxu0 0
        %1457 = vmatpush1.bf16.msra.mxu0 0
        %1458 = vmatprep.subr.bf16.mxu0 0
        %1459 = vmatpush1.bf16.msra.mxu0 0
        %1460 = vmatprep.subr.bf16.mxu0 0
        %1461 = vmatpush1.bf16.msra.mxu0 0
        %1462 = vmatprep.mubr.bf16.mxu0 0
        %1463 = vmatmul.mubr.bf16.gmra.mrb[0].mxu0 %v1397
        %v1464 = vpop.f32.mrb[0].mxu0
        %v1465 = vadd.f32 0.0, %v1464
        %v1466 = vpop.f32.mrb[0].mxu0
        %v1467 = vadd.f32 0.0, %v1466
        %v1468 = vpop.f32.mrb[0].mxu0
        %v1469 = vpop.f32.mrb[0].mxu0
        %1470 = vdwg.mxu0
        %1471 = vmatprep.subr.bf16.mxu0 %v1348
        %1472 = vmatpush1.bf16.msra.mxu0 %v1347
        %1473 = vmatprep.subr.bf16.mxu0 %v1358
        %1474 = vmatpush1.bf16.msra.mxu0 %v1357
        %1475 = vmatprep.subr.bf16.mxu0 %v1410
        %1476 = vmatpush1.bf16.msra.mxu0 %v1407
        %1477 = vmatprep.subr.bf16.mxu0 0
        %1478 = vmatpush1.bf16.msra.mxu0 0
        %1479 = vmatprep.subr.bf16.mxu0 0
        %1480 = vmatpush1.bf16.msra.mxu0 0
        %1481 = vmatprep.subr.bf16.mxu0 0
        %1482 = vmatpush1.bf16.msra.mxu0 0
        %1483 = vmatprep.subr.bf16.mxu0 0
        %1484 = vmatpush1.bf16.msra.mxu0 0
        %1485 = vmatprep.subr.bf16.mxu0 0
        %1486 = vmatpush1.bf16.msra.mxu0 0
        %1487 = vmatprep.subr.bf16.mxu0 0
        %1488 = vmatpush1.bf16.msra.mxu0 0
        %1489 = vmatprep.subr.bf16.mxu0 0
        %1490 = vmatpush1.bf16.msra.mxu0 0
        %1491 = vmatprep.subr.bf16.mxu0 0
        %1492 = vmatpush1.bf16.msra.mxu0 0
        %1493 = vmatprep.subr.bf16.mxu0 0
        %1494 = vmatpush1.bf16.msra.mxu0 0
        %1495 = vmatprep.subr.bf16.mxu0 0
        %1496 = vmatpush1.bf16.msra.mxu0 0
        %1497 = vmatprep.subr.bf16.mxu0 0
        %1498 = vmatpush1.bf16.msra.mxu0 0
        %1499 = vmatprep.subr.bf16.mxu0 0
        %1500 = vmatpush1.bf16.msra.mxu0 0
        %1501 = vmatprep.subr.bf16.mxu0 0
        %1502 = vmatpush1.bf16.msra.mxu0 0
        %1503 = vmatprep.mubr.bf16.mxu0 0
        %1504 = vmatmul.mubr.bf16.gmra.mrb[0].mxu0 %v1397
        %v1505 = vpop.f32.mrb[0].mxu0
        %v1506 = vadd.f32 0.0, %v1505
        %v1507 = vpop.f32.mrb[0].mxu0
        %v1508 = vadd.f32 0.0, %v1507
        %v1509 = vpop.f32.mrb[0].mxu0
        %v1510 = vpop.f32.mrb[0].mxu0
        %1511 = vdwg.mxu0
        %1512 = vmatprep.subr.bf16.mxu0 %v1350
        %1513 = vmatpush1.bf16.msra.mxu0 %v1349
        %1514 = vmatprep.subr.bf16.mxu0 %v1360
        %1515 = vmatpush1.bf16.msra.mxu0 %v1359
        %1516 = vmatprep.subr.bf16.mxu0 %v1416
        %1517 = vmatpush1.bf16.msra.mxu0 %v1413
        %1518 = vmatprep.subr.bf16.mxu0 0
        %1519 = vmatpush1.bf16.msra.mxu0 0
        %1520 = vmatprep.subr.bf16.mxu0 0
        %1521 = vmatpush1.bf16.msra.mxu0 0
        %1522 = vmatprep.subr.bf16.mxu0 0
        %1523 = vmatpush1.bf16.msra.mxu0 0
        %1524 = vmatprep.subr.bf16.mxu0 0
        %1525 = vmatpush1.bf16.msra.mxu0 0
        %1526 = vmatprep.subr.bf16.mxu0 0
        %1527 = vmatpush1.bf16.msra.mxu0 0
        %1528 = vmatprep.subr.bf16.mxu0 0
        %1529 = vmatpush1.bf16.msra.mxu0 0
        %1530 = vmatprep.subr.bf16.mxu0 0
        %1531 = vmatpush1.bf16.msra.mxu0 0
        %1532 = vmatprep.subr.bf16.mxu0 0
        %1533 = vmatpush1.bf16.msra.mxu0 0
        %1534 = vmatprep.subr.bf16.mxu0 0
        %1535 = vmatpush1.bf16.msra.mxu0 0
        %1536 = vmatprep.subr.bf16.mxu0 0
        %1537 = vmatpush1.bf16.msra.mxu0 0
        %1538 = vmatprep.subr.bf16.mxu0 0
        %1539 = vmatpush1.bf16.msra.mxu0 0
        %1540 = vmatprep.subr.bf16.mxu0 0
        %1541 = vmatpush1.bf16.msra.mxu0 0
        %1542 = vmatprep.subr.bf16.mxu0 0
        %1543 = vmatpush1.bf16.msra.mxu0 0
        %1544 = vmatprep.mubr.bf16.mxu0 0
        %1545 = vmatmul.mubr.bf16.gmra.mrb[0].mxu0 %v1397
        %v1546 = vpop.f32.mrb[0].mxu0
        %v1547 = vadd.f32 0.0, %v1546
        %v1548 = vpop.f32.mrb[0].mxu0
        %v1549 = vadd.f32 0.0, %v1548
        %v1550 = vpop.f32.mrb[0].mxu0
        %v1551 = vpop.f32.mrb[0].mxu0
        %1552 = vdwg.mxu0
        %1553 = vmatprep.subr.bf16.mxu0 %v1352
        %1554 = vmatpush1.bf16.msra.mxu0 %v1351
        %1555 = vmatprep.subr.bf16.mxu0 %v1362
        %1556 = vmatpush1.bf16.msra.mxu0 %v1361
        %1557 = vmatprep.subr.bf16.mxu0 %v1422
        %1558 = vmatpush1.bf16.msra.mxu0 %v1419
        %1559 = vmatprep.subr.bf16.mxu0 0
        %1560 = vmatpush1.bf16.msra.mxu0 0
        %1561 = vmatprep.subr.bf16.mxu0 0
        %1562 = vmatpush1.bf16.msra.mxu0 0
        %1563 = vmatprep.subr.bf16.mxu0 0
        %1564 = vmatpush1.bf16.msra.mxu0 0
        %1565 = vmatprep.subr.bf16.mxu0 0
        %1566 = vmatpush1.bf16.msra.mxu0 0
        %1567 = vmatprep.subr.bf16.mxu0 0
        %1568 = vmatpush1.bf16.msra.mxu0 0
        %1569 = vmatprep.subr.bf16.mxu0 0
        %1570 = vmatpush1.bf16.msra.mxu0 0
        %1571 = vmatprep.subr.bf16.mxu0 0
        %1572 = vmatpush1.bf16.msra.mxu0 0
        %1573 = vmatprep.subr.bf16.mxu0 0
        %1574 = vmatpush1.bf16.msra.mxu0 0
        %1575 = vmatprep.subr.bf16.mxu0 0
        %1576 = vmatpush1.bf16.msra.mxu0 0
        %1577 = vmatprep.subr.bf16.mxu0 0
        %1578 = vmatpush1.bf16.msra.mxu0 0
        %1579 = vmatprep.subr.bf16.mxu0 0
        %1580 = vmatpush1.bf16.msra.mxu0 0
        %1581 = vmatprep.subr.bf16.mxu0 0
        %1582 = vmatpush1.bf16.msra.mxu0 0
        %1583 = vmatprep.subr.bf16.mxu0 0
        %1584 = vmatpush1.bf16.msra.mxu0 0
        %1585 = vmatprep.mubr.bf16.mxu0 0
        %1586 = vmatmul.mubr.bf16.gmra.mrb[0].mxu0 %v1397
        %v1587 = vpop.f32.mrb[0].mxu0
        %v1588 = vadd.f32 0.0, %v1587
        %v1589 = vpop.f32.mrb[0].mxu0
        %v1590 = vadd.f32 0.0, %v1589
        %v1591 = vpop.f32.mrb[0].mxu0
        %v1592 = vpop.f32.mrb[0].mxu0
        %1593 = vdwg.mxu0
        %1594 = vmatprep.subr.bf16.mxu0 %v1354
        %1595 = vmatpush1.bf16.msra.mxu0 %v1353
        %1596 = vmatprep.subr.bf16.mxu0 %v1364
        %1597 = vmatpush1.bf16.msra.mxu0 %v1363
        %1598 = vmatprep.subr.bf16.mxu0 %v1428
        %1599 = vmatpush1.bf16.msra.mxu0 %v1425
        %1600 = vmatprep.subr.bf16.mxu0 0
        %1601 = vmatpush1.bf16.msra.mxu0 0
        %1602 = vmatprep.subr.bf16.mxu0 0
        %1603 = vmatpush1.bf16.msra.mxu0 0
        %1604 = vmatprep.subr.bf16.mxu0 0
        %1605 = vmatpush1.bf16.msra.mxu0 0
        %1606 = vmatprep.subr.bf16.mxu0 0
        %1607 = vmatpush1.bf16.msra.mxu0 0
        %1608 = vmatprep.subr.bf16.mxu0 0
        %1609 = vmatpush1.bf16.msra.mxu0 0
        %1610 = vmatprep.subr.bf16.mxu0 0
        %1611 = vmatpush1.bf16.msra.mxu0 0
        %1612 = vmatprep.subr.bf16.mxu0 0
        %1613 = vmatpush1.bf16.msra.mxu0 0
        %1614 = vmatprep.subr.bf16.mxu0 0
        %1615 = vmatpush1.bf16.msra.mxu0 0
        %1616 = vmatprep.subr.bf16.mxu0 0
        %1617 = vmatpush1.bf16.msra.mxu0 0
        %1618 = vmatprep.subr.bf16.mxu0 0
        %1619 = vmatpush1.bf16.msra.mxu0 0
        %1620 = vmatprep.subr.bf16.mxu0 0
        %1621 = vmatpush1.bf16.msra.mxu0 0
        %1622 = vmatprep.subr.bf16.mxu0 0
        %1623 = vmatpush1.bf16.msra.mxu0 0
        %1624 = vmatprep.subr.bf16.mxu0 0
        %1625 = vmatpush1.bf16.msra.mxu0 0
        %1626 = vmatprep.mubr.bf16.mxu0 0
        %1627 = vmatmul.mubr.bf16.gmra.mrb[0].mxu0 %v1397
        %v1628 = vpop.f32.mrb[0].mxu0
        %v1629 = vadd.f32 0.0, %v1628
        %v1630 = vpop.f32.mrb[0].mxu0
        %v1631 = vadd.f32 0.0, %v1630
        %v1632 = vpop.f32.mrb[0].mxu0
        %v1633 = vpop.f32.mrb[0].mxu0
        %1634 = vdwg.mxu0
        %v1660 = vunpack.c.l.b16 %v1218
        %v1661 = vunpack.c.h.b16 %v1218
        %v1662 = vunpack.c.l.b16 %v1219
        %v1663 = vunpack.c.h.b16 %v1219
        %v1664 = vunpack.c.l.b16 %v1220
        %v1665 = vunpack.c.h.b16 %v1220
        %v1666 = vunpack.c.l.b16 %v1221
        %v1667 = vunpack.c.h.b16 %v1221
        %v1668 = vunpack.c.l.b16 %v1222
        %v1669 = vunpack.c.h.b16 %v1222
        %v1670 = vunpack.c.l.b16 %v1223
        %v1671 = vunpack.c.h.b16 %v1223
        %v1672 = vunpack.c.l.b16 %v1224
        %v1673 = vunpack.c.h.b16 %v1224
        %v1674 = vunpack.c.l.b16 %v1225
        %v1675 = vunpack.c.h.b16 %v1225
        %v1676 = vunpack.c.l.b16 %v1226
        %v1677 = vunpack.c.h.b16 %v1226
        %v1678 = vunpack.c.l.b16 %v1227
        %v1679 = vunpack.c.h.b16 %v1227
        %v1680 = vunpack.c.l.b16 %v1228
        %v1681 = vunpack.c.h.b16 %v1228
        %v1682 = vunpack.c.l.b16 %v1229
        %v1683 = vunpack.c.h.b16 %v1229
        %v1684 = vunpack.c.l.b16 %v1230
        %v1685 = vunpack.c.h.b16 %v1230
        %v1686 = vunpack.c.l.b16 %v1231
        %v1687 = vunpack.c.h.b16 %v1231
        %v1688 = vunpack.c.l.b16 %v1232
        %v1689 = vunpack.c.h.b16 %v1232
        %v1690 = vunpack.c.l.b16 %v1233
        %v1691 = vunpack.c.h.b16 %v1233
        %v1692 = vunpack.c.l.b16 %v1234
        %v1693 = vunpack.c.h.b16 %v1234
        %v1694 = vunpack.c.l.b16 %v1235
        %v1695 = vunpack.c.h.b16 %v1235
        %v1696 = vunpack.c.l.b16 %v1236
        %v1697 = vunpack.c.h.b16 %v1236
        %v1698 = vunpack.c.l.b16 %v1237
        %v1699 = vunpack.c.h.b16 %v1237
        %v1700 = vunpack.c.l.b16 %v1238
        %v1701 = vunpack.c.h.b16 %v1238
        %v1702 = vunpack.c.l.b16 %v1239
        %v1703 = vunpack.c.h.b16 %v1239
        %v1704 = vunpack.c.l.b16 %v1240
        %v1705 = vunpack.c.h.b16 %v1240
        %v1706 = vunpack.c.l.b16 %v1241
        %v1707 = vunpack.c.h.b16 %v1241
        %v1708 = vunpack.c.l.b16 %v1242
        %v1709 = vunpack.c.h.b16 %v1242
        %v1710 = vpack.c.b16 %v1670, %v1660
        %v1711 = vpack.c.b16 %v1671, %v1661
        %v1712 = vpack.c.b16 %v1672, %v1662
        %v1713 = vpack.c.b16 %v1673, %v1663
        %v1714 = vpack.c.b16 %v1674, %v1664
        %v1715 = vpack.c.b16 %v1675, %v1665
        %v1716 = vpack.c.b16 %v1676, %v1666
        %v1717 = vpack.c.b16 %v1677, %v1667
        %v1718 = vpack.c.b16 %v1678, %v1668
        %v1719 = vpack.c.b16 %v1679, %v1669
        %v1720 = vpack.c.b16 %v1690, %v1680
        %v1721 = vpack.c.b16 %v1691, %v1681
        %v1722 = vpack.c.b16 %v1692, %v1682
        %v1723 = vpack.c.b16 %v1693, %v1683
        %v1724 = vpack.c.b16 %v1694, %v1684
        %v1725 = vpack.c.b16 %v1695, %v1685
        %v1726 = vpack.c.b16 %v1696, %v1686
        %v1727 = vpack.c.b16 %v1697, %v1687
        %v1728 = vpack.c.b16 %v1698, %v1688
        %v1729 = vpack.c.b16 %v1699, %v1689
        %v1730 = vpack.c.b16 %v1700, %v1700
        %v1731 = vpack.c.b16 %v1701, %v1701
        %v1732 = vpack.c.b16 %v1702, %v1702
        %v1733 = vpack.c.b16 %v1703, %v1703
        %v1734 = vpack.c.b16 %v1704, %v1704
        %v1735 = vpack.c.b16 %v1705, %v1705
        %v1736 = vpack.c.b16 %v1706, %v1706
        %v1737 = vpack.c.b16 %v1707, %v1707
        %v1738 = vpack.c.b16 %v1708, %v1708
        %v1739 = vpack.c.b16 %v1709, %v1709
        %v1761 = vsel %vm1395, %v1217, 0
        %v1764 = vsel %vm1399, %v1730, 0
        %v1767 = vsel %vm1399, %v1731, 0
        %v1770 = vsel %vm1399, %v1732, 0
        %v1773 = vsel %vm1399, %v1733, 0
        %v1776 = vsel %vm1399, %v1734, 0
        %v1779 = vsel %vm1399, %v1735, 0
        %v1782 = vsel %vm1399, %v1736, 0
        %v1785 = vsel %vm1399, %v1737, 0
        %v1788 = vsel %vm1399, %v1738, 0
        %v1791 = vsel %vm1399, %v1739, 0
        %1793 = vmatprep.subr.bf16.mxu0 %v1711
        %1794 = vmatpush1.bf16.msra.mxu0 %v1710
        %1795 = vmatprep.subr.bf16.mxu0 %v1721
        %1796 = vmatpush1.bf16.msra.mxu0 %v1720
        %1797 = vmatprep.subr.bf16.mxu0 %v1767
        %1798 = vmatpush1.bf16.msra.mxu0 %v1764
        %1799 = vmatprep.subr.bf16.mxu0 0
        %1800 = vmatpush1.bf16.msra.mxu0 0
        %1801 = vmatprep.subr.bf16.mxu0 0
        %1802 = vmatpush1.bf16.msra.mxu0 0
        %1803 = vmatprep.subr.bf16.mxu0 0
        %1804 = vmatpush1.bf16.msra.mxu0 0
        %1805 = vmatprep.subr.bf16.mxu0 0
        %1806 = vmatpush1.bf16.msra.mxu0 0
        %1807 = vmatprep.subr.bf16.mxu0 0
        %1808 = vmatpush1.bf16.msra.mxu0 0
        %1809 = vmatprep.subr.bf16.mxu0 0
        %1810 = vmatpush1.bf16.msra.mxu0 0
        %1811 = vmatprep.subr.bf16.mxu0 0
        %1812 = vmatpush1.bf16.msra.mxu0 0
        %1813 = vmatprep.subr.bf16.mxu0 0
        %1814 = vmatpush1.bf16.msra.mxu0 0
        %1815 = vmatprep.subr.bf16.mxu0 0
        %1816 = vmatpush1.bf16.msra.mxu0 0
        %1817 = vmatprep.subr.bf16.mxu0 0
        %1818 = vmatpush1.bf16.msra.mxu0 0
        %1819 = vmatprep.subr.bf16.mxu0 0
        %1820 = vmatpush1.bf16.msra.mxu0 0
        %1821 = vmatprep.subr.bf16.mxu0 0
        %1822 = vmatpush1.bf16.msra.mxu0 0
        %1823 = vmatprep.subr.bf16.mxu0 0
        %1824 = vmatpush1.bf16.msra.mxu0 0
        %1825 = vmatprep.mubr.bf16.mxu0 0
        %1826 = vmatmul.mubr.bf16.gmra.mrb[0].mxu0 %v1761
        %v1827 = vpop.f32.mrb[0].mxu0
        %v1828 = vadd.f32 %v1465, %v1827
        %v1829 = vpop.f32.mrb[0].mxu0
        %v1830 = vadd.f32 %v1467, %v1829
        %v1831 = vpop.f32.mrb[0].mxu0
        %v1832 = vpop.f32.mrb[0].mxu0
        %1833 = vdwg.mxu0
        %1834 = vmatprep.subr.bf16.mxu0 %v1713
        %1835 = vmatpush1.bf16.msra.mxu0 %v1712
        %1836 = vmatprep.subr.bf16.mxu0 %v1723
        %1837 = vmatpush1.bf16.msra.mxu0 %v1722
        %1838 = vmatprep.subr.bf16.mxu0 %v1773
        %1839 = vmatpush1.bf16.msra.mxu0 %v1770
        %1840 = vmatprep.subr.bf16.mxu0 0
        %1841 = vmatpush1.bf16.msra.mxu0 0
        %1842 = vmatprep.subr.bf16.mxu0 0
        %1843 = vmatpush1.bf16.msra.mxu0 0
        %1844 = vmatprep.subr.bf16.mxu0 0
        %1845 = vmatpush1.bf16.msra.mxu0 0
        %1846 = vmatprep.subr.bf16.mxu0 0
        %1847 = vmatpush1.bf16.msra.mxu0 0
        %1848 = vmatprep.subr.bf16.mxu0 0
        %1849 = vmatpush1.bf16.msra.mxu0 0
        %1850 = vmatprep.subr.bf16.mxu0 0
        %1851 = vmatpush1.bf16.msra.mxu0 0
        %1852 = vmatprep.subr.bf16.mxu0 0
        %1853 = vmatpush1.bf16.msra.mxu0 0
        %1854 = vmatprep.subr.bf16.mxu0 0
        %1855 = vmatpush1.bf16.msra.mxu0 0
        %1856 = vmatprep.subr.bf16.mxu0 0
        %1857 = vmatpush1.bf16.msra.mxu0 0
        %1858 = vmatprep.subr.bf16.mxu0 0
        %1859 = vmatpush1.bf16.msra.mxu0 0
        %1860 = vmatprep.subr.bf16.mxu0 0
        %1861 = vmatpush1.bf16.msra.mxu0 0
        %1862 = vmatprep.subr.bf16.mxu0 0
        %1863 = vmatpush1.bf16.msra.mxu0 0
        %1864 = vmatprep.subr.bf16.mxu0 0
        %1865 = vmatpush1.bf16.msra.mxu0 0
        %1866 = vmatprep.mubr.bf16.mxu0 0
        %1867 = vmatmul.mubr.bf16.gmra.mrb[0].mxu0 %v1761
        %v1868 = vpop.f32.mrb[0].mxu0
        %v1869 = vadd.f32 %v1506, %v1868
        %v1870 = vpop.f32.mrb[0].mxu0
        %v1871 = vadd.f32 %v1508, %v1870
        %v1872 = vpop.f32.mrb[0].mxu0
        %v1873 = vpop.f32.mrb[0].mxu0
        %1874 = vdwg.mxu0
        %1875 = vmatprep.subr.bf16.mxu0 %v1715
        %1876 = vmatpush1.bf16.msra.mxu0 %v1714
        %1877 = vmatprep.subr.bf16.mxu0 %v1725
        %1878 = vmatpush1.bf16.msra.mxu0 %v1724
        %1879 = vmatprep.subr.bf16.mxu0 %v1779
        %1880 = vmatpush1.bf16.msra.mxu0 %v1776
        %1881 = vmatprep.subr.bf16.mxu0 0
        %1882 = vmatpush1.bf16.msra.mxu0 0
        %1883 = vmatprep.subr.bf16.mxu0 0
        %1884 = vmatpush1.bf16.msra.mxu0 0
        %1885 = vmatprep.subr.bf16.mxu0 0
        %1886 = vmatpush1.bf16.msra.mxu0 0
        %1887 = vmatprep.subr.bf16.mxu0 0
        %1888 = vmatpush1.bf16.msra.mxu0 0
        %1889 = vmatprep.subr.bf16.mxu0 0
        %1890 = vmatpush1.bf16.msra.mxu0 0
        %1891 = vmatprep.subr.bf16.mxu0 0
        %1892 = vmatpush1.bf16.msra.mxu0 0
        %1893 = vmatprep.subr.bf16.mxu0 0
        %1894 = vmatpush1.bf16.msra.mxu0 0
        %1895 = vmatprep.subr.bf16.mxu0 0
        %1896 = vmatpush1.bf16.msra.mxu0 0
        %1897 = vmatprep.subr.bf16.mxu0 0
        %1898 = vmatpush1.bf16.msra.mxu0 0
        %1899 = vmatprep.subr.bf16.mxu0 0
        %1900 = vmatpush1.bf16.msra.mxu0 0
        %1901 = vmatprep.subr.bf16.mxu0 0
        %1902 = vmatpush1.bf16.msra.mxu0 0
        %1903 = vmatprep.subr.bf16.mxu0 0
        %1904 = vmatpush1.bf16.msra.mxu0 0
        %1905 = vmatprep.subr.bf16.mxu0 0
        %1906 = vmatpush1.bf16.msra.mxu0 0
        %1907 = vmatprep.mubr.bf16.mxu0 0
        %1908 = vmatmul.mubr.bf16.gmra.mrb[0].mxu0 %v1761
        %v1909 = vpop.f32.mrb[0].mxu0
        %v1910 = vadd.f32 %v1547, %v1909
        %v1911 = vpop.f32.mrb[0].mxu0
        %v1912 = vadd.f32 %v1549, %v1911
        %v1913 = vpop.f32.mrb[0].mxu0
        %v1914 = vpop.f32.mrb[0].mxu0
        %1915 = vdwg.mxu0
        %1916 = vmatprep.subr.bf16.mxu0 %v1717
        %1917 = vmatpush1.bf16.msra.mxu0 %v1716
        %1918 = vmatprep.subr.bf16.mxu0 %v1727
        %1919 = vmatpush1.bf16.msra.mxu0 %v1726
        %1920 = vmatprep.subr.bf16.mxu0 %v1785
        %1921 = vmatpush1.bf16.msra.mxu0 %v1782
        %1922 = vmatprep.subr.bf16.mxu0 0
        %1923 = vmatpush1.bf16.msra.mxu0 0
        %1924 = vmatprep.subr.bf16.mxu0 0
        %1925 = vmatpush1.bf16.msra.mxu0 0
        %1926 = vmatprep.subr.bf16.mxu0 0
        %1927 = vmatpush1.bf16.msra.mxu0 0
        %1928 = vmatprep.subr.bf16.mxu0 0
        %1929 = vmatpush1.bf16.msra.mxu0 0
        %1930 = vmatprep.subr.bf16.mxu0 0
        %1931 = vmatpush1.bf16.msra.mxu0 0
        %1932 = vmatprep.subr.bf16.mxu0 0
        %1933 = vmatpush1.bf16.msra.mxu0 0
        %1934 = vmatprep.subr.bf16.mxu0 0
        %1935 = vmatpush1.bf16.msra.mxu0 0
        %1936 = vmatprep.subr.bf16.mxu0 0
        %1937 = vmatpush1.bf16.msra.mxu0 0
        %1938 = vmatprep.subr.bf16.mxu0 0
        %1939 = vmatpush1.bf16.msra.mxu0 0
        %1940 = vmatprep.subr.bf16.mxu0 0
        %1941 = vmatpush1.bf16.msra.mxu0 0
        %1942 = vmatprep.subr.bf16.mxu0 0
        %1943 = vmatpush1.bf16.msra.mxu0 0
        %1944 = vmatprep.subr.bf16.mxu0 0
        %1945 = vmatpush1.bf16.msra.mxu0 0
        %1946 = vmatprep.subr.bf16.mxu0 0
        %1947 = vmatpush1.bf16.msra.mxu0 0
        %1948 = vmatprep.mubr.bf16.mxu0 0
        %1949 = vmatmul.mubr.bf16.gmra.mrb[0].mxu0 %v1761
        %v1950 = vpop.f32.mrb[0].mxu0
        %v1951 = vadd.f32 %v1588, %v1950
        %v1952 = vpop.f32.mrb[0].mxu0
        %v1953 = vadd.f32 %v1590, %v1952
        %v1954 = vpop.f32.mrb[0].mxu0
        %v1955 = vpop.f32.mrb[0].mxu0
        %1956 = vdwg.mxu0
        %1957 = vmatprep.subr.bf16.mxu0 %v1719
        %1958 = vmatpush1.bf16.msra.mxu0 %v1718
        %1959 = vmatprep.subr.bf16.mxu0 %v1729
        %1960 = vmatpush1.bf16.msra.mxu0 %v1728
        %1961 = vmatprep.subr.bf16.mxu0 %v1791
        %1962 = vmatpush1.bf16.msra.mxu0 %v1788
        %1963 = vmatprep.subr.bf16.mxu0 0
        %1964 = vmatpush1.bf16.msra.mxu0 0
        %1965 = vmatprep.subr.bf16.mxu0 0
        %1966 = vmatpush1.bf16.msra.mxu0 0
        %1967 = vmatprep.subr.bf16.mxu0 0
        %1968 = vmatpush1.bf16.msra.mxu0 0
        %1969 = vmatprep.subr.bf16.mxu0 0
        %1970 = vmatpush1.bf16.msra.mxu0 0
        %1971 = vmatprep.subr.bf16.mxu0 0
        %1972 = vmatpush1.bf16.msra.mxu0 0
        %1973 = vmatprep.subr.bf16.mxu0 0
        %1974 = vmatpush1.bf16.msra.mxu0 0
        %1975 = vmatprep.subr.bf16.mxu0 0
        %1976 = vmatpush1.bf16.msra.mxu0 0
        %1977 = vmatprep.subr.bf16.mxu0 0
        %1978 = vmatpush1.bf16.msra.mxu0 0
        %1979 = vmatprep.subr.bf16.mxu0 0
        %1980 = vmatpush1.bf16.msra.mxu0 0
        %1981 = vmatprep.subr.bf16.mxu0 0
        %1982 = vmatpush1.bf16.msra.mxu0 0
        %1983 = vmatprep.subr.bf16.mxu0 0
        %1984 = vmatpush1.bf16.msra.mxu0 0
        %1985 = vmatprep.subr.bf16.mxu0 0
        %1986 = vmatpush1.bf16.msra.mxu0 0
        %1987 = vmatprep.subr.bf16.mxu0 0
        %1988 = vmatpush1.bf16.msra.mxu0 0
        %1989 = vmatprep.mubr.bf16.mxu0 0
        %1990 = vmatmul.mubr.bf16.gmra.mrb[0].mxu0 %v1761
        %v1991 = vpop.f32.mrb[0].mxu0
        %v1992 = vadd.f32 %v1629, %v1991
        %v1993 = vpop.f32.mrb[0].mxu0
        %v1994 = vadd.f32 %v1631, %v1993
        %v1995 = vpop.f32.mrb[0].mxu0
        %v1996 = vpop.f32.mrb[0].mxu0
        %1997 = vdwg.mxu0
        %s1998 = scalar_lea.vmem %s2, 8
        %v1999 = vld [vmem:[%s1998] sm:$0xf]
        %v2000 = vld [vmem:[#allocation3 + $0x8] sm:$0xff]
        %v2001 = vld [vmem:[#allocation3 + $0x10] sm:$0xff]
        %v2002 = vld [vmem:[#allocation3 + $0x18] sm:$0xff]
        %v2003 = vld [vmem:[#allocation3 + $0x20] sm:$0xff]
        %v2004 = vld [vmem:[#allocation3 + $0x28] sm:$0xff]
        %v2005 = vld [vmem:[#allocation3 + $0x38] sm:$0xff]
        %v2006 = vld [vmem:[#allocation3 + $0x40] sm:$0xff]
        %v2007 = vld [vmem:[#allocation3 + $0x48] sm:$0xff]
        %v2008 = vld [vmem:[#allocation3 + $0x50] sm:$0xff]
        %v2009 = vld [vmem:[#allocation3 + $0x58] sm:$0xff]
        %v2010 = vld [vmem:[#allocation3 + $0x68] sm:$0xff]
        %v2011 = vld [vmem:[#allocation3 + $0x70] sm:$0xff]
        %v2012 = vld [vmem:[#allocation3 + $0x78] sm:$0xff]
        %v2013 = vld [vmem:[#allocation3 + $0x80] sm:$0xff]
        %v2014 = vld [vmem:[#allocation3 + $0x88] sm:$0xff]
        %v2015 = vld [vmem:[#allocation3 + $0x98] sm:$0xff]
        %v2016 = vld [vmem:[#allocation3 + $0xa0] sm:$0xff]
        %v2017 = vld [vmem:[#allocation3 + $0xa8] sm:$0xff]
        %v2018 = vld [vmem:[#allocation3 + $0xb0] sm:$0xff]
        %v2019 = vld [vmem:[#allocation3 + $0xb8] sm:$0xff]
        %v2020 = vld [vmem:[#allocation3 + $0xc8] sm:$0x33]
        %v2021 = vld [vmem:[#allocation3 + $0xd0] sm:$0x33]
        %v2022 = vld [vmem:[#allocation3 + $0xd8] sm:$0x33]
        %v2023 = vld [vmem:[#allocation3 + $0xe0] sm:$0x33]
        %v2024 = vld [vmem:[#allocation3 + $0xe8] sm:$0x33]
        %v2050 = vunpack.c.l.b16 %v2000
        %v2051 = vunpack.c.h.b16 %v2000
        %v2052 = vunpack.c.l.b16 %v2001
        %v2053 = vunpack.c.h.b16 %v2001
        %v2054 = vunpack.c.l.b16 %v2002
        %v2055 = vunpack.c.h.b16 %v2002
        %v2056 = vunpack.c.l.b16 %v2003
        %v2057 = vunpack.c.h.b16 %v2003
        %v2058 = vunpack.c.l.b16 %v2004
        %v2059 = vunpack.c.h.b16 %v2004
        %v2060 = vunpack.c.l.b16 %v2005
        %v2061 = vunpack.c.h.b16 %v2005
        %v2062 = vunpack.c.l.b16 %v2006
        %v2063 = vunpack.c.h.b16 %v2006
        %v2064 = vunpack.c.l.b16 %v2007
        %v2065 = vunpack.c.h.b16 %v2007
        %v2066 = vunpack.c.l.b16 %v2008
        %v2067 = vunpack.c.h.b16 %v2008
        %v2068 = vunpack.c.l.b16 %v2009
        %v2069 = vunpack.c.h.b16 %v2009
        %v2070 = vunpack.c.l.b16 %v2010
        %v2071 = vunpack.c.h.b16 %v2010
        %v2072 = vunpack.c.l.b16 %v2011
        %v2073 = vunpack.c.h.b16 %v2011
        %v2074 = vunpack.c.l.b16 %v2012
        %v2075 = vunpack.c.h.b16 %v2012
        %v2076 = vunpack.c.l.b16 %v2013
        %v2077 = vunpack.c.h.b16 %v2013
        %v2078 = vunpack.c.l.b16 %v2014
        %v2079 = vunpack.c.h.b16 %v2014
        %v2080 = vunpack.c.l.b16 %v2015
        %v2081 = vunpack.c.h.b16 %v2015
        %v2082 = vunpack.c.l.b16 %v2016
        %v2083 = vunpack.c.h.b16 %v2016
        %v2084 = vunpack.c.l.b16 %v2017
        %v2085 = vunpack.c.h.b16 %v2017
        %v2086 = vunpack.c.l.b16 %v2018
        %v2087 = vunpack.c.h.b16 %v2018
        %v2088 = vunpack.c.l.b16 %v2019
        %v2089 = vunpack.c.h.b16 %v2019
        %v2090 = vunpack.c.l.b16 %v2020
        %v2091 = vunpack.c.h.b16 %v2020
        %v2092 = vunpack.c.l.b16 %v2021
        %v2093 = vunpack.c.h.b16 %v2021
        %v2094 = vunpack.c.l.b16 %v2022
        %v2095 = vunpack.c.h.b16 %v2022
        %v2096 = vunpack.c.l.b16 %v2023
        %v2097 = vunpack.c.h.b16 %v2023
        %v2098 = vunpack.c.l.b16 %v2024
        %v2099 = vunpack.c.h.b16 %v2024
        %v2100 = vpack.c.b16 %v2060, %v2050
        %v2101 = vpack.c.b16 %v2061, %v2051
        %v2102 = vpack.c.b16 %v2062, %v2052
        %v2103 = vpack.c.b16 %v2063, %v2053
        %v2104 = vpack.c.b16 %v2064, %v2054
        %v2105 = vpack.c.b16 %v2065, %v2055
        %v2106 = vpack.c.b16 %v2066, %v2056
        %v2107 = vpack.c.b16 %v2067, %v2057
        %v2108 = vpack.c.b16 %v2068, %v2058
        %v2109 = vpack.c.b16 %v2069, %v2059
        %v2110 = vpack.c.b16 %v2080, %v2070
        %v2111 = vpack.c.b16 %v2081, %v2071
        %v2112 = vpack.c.b16 %v2082, %v2072
        %v2113 = vpack.c.b16 %v2083, %v2073
        %v2114 = vpack.c.b16 %v2084, %v2074
        %v2115 = vpack.c.b16 %v2085, %v2075
        %v2116 = vpack.c.b16 %v2086, %v2076
        %v2117 = vpack.c.b16 %v2087, %v2077
        %v2118 = vpack.c.b16 %v2088, %v2078
        %v2119 = vpack.c.b16 %v2089, %v2079
        %v2120 = vpack.c.b16 %v2090, %v2090
        %v2121 = vpack.c.b16 %v2091, %v2091
        %v2122 = vpack.c.b16 %v2092, %v2092
        %v2123 = vpack.c.b16 %v2093, %v2093
        %v2124 = vpack.c.b16 %v2094, %v2094
        %v2125 = vpack.c.b16 %v2095, %v2095
        %v2126 = vpack.c.b16 %v2096, %v2096
        %v2127 = vpack.c.b16 %v2097, %v2097
        %v2128 = vpack.c.b16 %v2098, %v2098
        %v2129 = vpack.c.b16 %v2099, %v2099
        %v2151 = vsel %vm1395, %v1999, 0
        %v2154 = vsel %vm1399, %v2120, 0
        %v2157 = vsel %vm1399, %v2121, 0
        %v2160 = vsel %vm1399, %v2122, 0
        %v2163 = vsel %vm1399, %v2123, 0
        %v2166 = vsel %vm1399, %v2124, 0
        %v2169 = vsel %vm1399, %v2125, 0
        %v2172 = vsel %vm1399, %v2126, 0
        %v2175 = vsel %vm1399, %v2127, 0
        %v2178 = vsel %vm1399, %v2128, 0
        %v2181 = vsel %vm1399, %v2129, 0
        %2183 = vmatprep.subr.bf16.mxu0 %v2101
        %2184 = vmatpush1.bf16.msra.mxu0 %v2100
        %2185 = vmatprep.subr.bf16.mxu0 %v2111
        %2186 = vmatpush1.bf16.msra.mxu0 %v2110
        %2187 = vmatprep.subr.bf16.mxu0 %v2157
        %2188 = vmatpush1.bf16.msra.mxu0 %v2154
        %2189 = vmatprep.subr.bf16.mxu0 0
        %2190 = vmatpush1.bf16.msra.mxu0 0
        %2191 = vmatprep.subr.bf16.mxu0 0
        %2192 = vmatpush1.bf16.msra.mxu0 0
        %2193 = vmatprep.subr.bf16.mxu0 0
        %2194 = vmatpush1.bf16.msra.mxu0 0
        %2195 = vmatprep.subr.bf16.mxu0 0
        %2196 = vmatpush1.bf16.msra.mxu0 0
        %2197 = vmatprep.subr.bf16.mxu0 0
        %2198 = vmatpush1.bf16.msra.mxu0 0
        %2199 = vmatprep.subr.bf16.mxu0 0
        %2200 = vmatpush1.bf16.msra.mxu0 0
        %2201 = vmatprep.subr.bf16.mxu0 0
        %2202 = vmatpush1.bf16.msra.mxu0 0
        %2203 = vmatprep.subr.bf16.mxu0 0
        %2204 = vmatpush1.bf16.msra.mxu0 0
        %2205 = vmatprep.subr.bf16.mxu0 0
        %2206 = vmatpush1.bf16.msra.mxu0 0
        %2207 = vmatprep.subr.bf16.mxu0 0
        %2208 = vmatpush1.bf16.msra.mxu0 0
        %2209 = vmatprep.subr.bf16.mxu0 0
        %2210 = vmatpush1.bf16.msra.mxu0 0
        %2211 = vmatprep.subr.bf16.mxu0 0
        %2212 = vmatpush1.bf16.msra.mxu0 0
        %2213 = vmatprep.subr.bf16.mxu0 0
        %2214 = vmatpush1.bf16.msra.mxu0 0
        %2215 = vmatprep.mubr.bf16.mxu0 0
        %2216 = vmatmul.mubr.bf16.gmra.mrb[0].mxu0 %v2151
        %v2217 = vpop.f32.mrb[0].mxu0
        %v2218 = vadd.f32 0.0, %v2217
        %v2219 = vpop.f32.mrb[0].mxu0
        %v2220 = vadd.f32 0.0, %v2219
        %v2221 = vpop.f32.mrb[0].mxu0
        %v2222 = vpop.f32.mrb[0].mxu0
        %2223 = vdwg.mxu0
        %2224 = vmatprep.subr.bf16.mxu0 %v2103
        %2225 = vmatpush1.bf16.msra.mxu0 %v2102
        %2226 = vmatprep.subr.bf16.mxu0 %v2113
        %2227 = vmatpush1.bf16.msra.mxu0 %v2112
        %2228 = vmatprep.subr.bf16.mxu0 %v2163
        %2229 = vmatpush1.bf16.msra.mxu0 %v2160
        %2230 = vmatprep.subr.bf16.mxu0 0
        %2231 = vmatpush1.bf16.msra.mxu0 0
        %2232 = vmatprep.subr.bf16.mxu0 0
        %2233 = vmatpush1.bf16.msra.mxu0 0
        %2234 = vmatprep.subr.bf16.mxu0 0
        %2235 = vmatpush1.bf16.msra.mxu0 0
        %2236 = vmatprep.subr.bf16.mxu0 0
        %2237 = vmatpush1.bf16.msra.mxu0 0
        %2238 = vmatprep.subr.bf16.mxu0 0
        %2239 = vmatpush1.bf16.msra.mxu0 0
        %2240 = vmatprep.subr.bf16.mxu0 0
        %2241 = vmatpush1.bf16.msra.mxu0 0
        %2242 = vmatprep.subr.bf16.mxu0 0
        %2243 = vmatpush1.bf16.msra.mxu0 0
        %2244 = vmatprep.subr.bf16.mxu0 0
        %2245 = vmatpush1.bf16.msra.mxu0 0
        %2246 = vmatprep.subr.bf16.mxu0 0
        %2247 = vmatpush1.bf16.msra.mxu0 0
        %2248 = vmatprep.subr.bf16.mxu0 0
        %2249 = vmatpush1.bf16.msra.mxu0 0
        %2250 = vmatprep.subr.bf16.mxu0 0
        %2251 = vmatpush1.bf16.msra.mxu0 0
        %2252 = vmatprep.subr.bf16.mxu0 0
        %2253 = vmatpush1.bf16.msra.mxu0 0
        %2254 = vmatprep.subr.bf16.mxu0 0
        %2255 = vmatpush1.bf16.msra.mxu0 0
        %2256 = vmatprep.mubr.bf16.mxu0 0
        %2257 = vmatmul.mubr.bf16.gmra.mrb[0].mxu0 %v2151
        %v2258 = vpop.f32.mrb[0].mxu0
        %v2259 = vadd.f32 0.0, %v2258
        %v2260 = vpop.f32.mrb[0].mxu0
        %v2261 = vadd.f32 0.0, %v2260
        %v2262 = vpop.f32.mrb[0].mxu0
        %v2263 = vpop.f32.mrb[0].mxu0
        %2264 = vdwg.mxu0
        %2265 = vmatprep.subr.bf16.mxu0 %v2105
        %2266 = vmatpush1.bf16.msra.mxu0 %v2104
        %2267 = vmatprep.subr.bf16.mxu0 %v2115
        %2268 = vmatpush1.bf16.msra.mxu0 %v2114
        %2269 = vmatprep.subr.bf16.mxu0 %v2169
        %2270 = vmatpush1.bf16.msra.mxu0 %v2166
        %2271 = vmatprep.subr.bf16.mxu0 0
        %2272 = vmatpush1.bf16.msra.mxu0 0
        %2273 = vmatprep.subr.bf16.mxu0 0
        %2274 = vmatpush1.bf16.msra.mxu0 0
        %2275 = vmatprep.subr.bf16.mxu0 0
        %2276 = vmatpush1.bf16.msra.mxu0 0
        %2277 = vmatprep.subr.bf16.mxu0 0
        %2278 = vmatpush1.bf16.msra.mxu0 0
        %2279 = vmatprep.subr.bf16.mxu0 0
        %2280 = vmatpush1.bf16.msra.mxu0 0
        %2281 = vmatprep.subr.bf16.mxu0 0
        %2282 = vmatpush1.bf16.msra.mxu0 0
        %2283 = vmatprep.subr.bf16.mxu0 0
        %2284 = vmatpush1.bf16.msra.mxu0 0
        %2285 = vmatprep.subr.bf16.mxu0 0
        %2286 = vmatpush1.bf16.msra.mxu0 0
        %2287 = vmatprep.subr.bf16.mxu0 0
        %2288 = vmatpush1.bf16.msra.mxu0 0
        %2289 = vmatprep.subr.bf16.mxu0 0
        %2290 = vmatpush1.bf16.msra.mxu0 0
        %2291 = vmatprep.subr.bf16.mxu0 0
        %2292 = vmatpush1.bf16.msra.mxu0 0
        %2293 = vmatprep.subr.bf16.mxu0 0
        %2294 = vmatpush1.bf16.msra.mxu0 0
        %2295 = vmatprep.subr.bf16.mxu0 0
        %2296 = vmatpush1.bf16.msra.mxu0 0
        %2297 = vmatprep.mubr.bf16.mxu0 0
        %2298 = vmatmul.mubr.bf16.gmra.mrb[0].mxu0 %v2151
        %v2299 = vpop.f32.mrb[0].mxu0
        %v2300 = vadd.f32 0.0, %v2299
        %v2301 = vpop.f32.mrb[0].mxu0
        %v2302 = vadd.f32 0.0, %v2301
        %v2303 = vpop.f32.mrb[0].mxu0
        %v2304 = vpop.f32.mrb[0].mxu0
        %2305 = vdwg.mxu0
        %2306 = vmatprep.subr.bf16.mxu0 %v2107
        %2307 = vmatpush1.bf16.msra.mxu0 %v2106
        %2308 = vmatprep.subr.bf16.mxu0 %v2117
        %2309 = vmatpush1.bf16.msra.mxu0 %v2116
        %2310 = vmatprep.subr.bf16.mxu0 %v2175
        %2311 = vmatpush1.bf16.msra.mxu0 %v2172
        %2312 = vmatprep.subr.bf16.mxu0 0
        %2313 = vmatpush1.bf16.msra.mxu0 0
        %2314 = vmatprep.subr.bf16.mxu0 0
        %2315 = vmatpush1.bf16.msra.mxu0 0
        %2316 = vmatprep.subr.bf16.mxu0 0
        %2317 = vmatpush1.bf16.msra.mxu0 0
        %2318 = vmatprep.subr.bf16.mxu0 0
        %2319 = vmatpush1.bf16.msra.mxu0 0
        %2320 = vmatprep.subr.bf16.mxu0 0
        %2321 = vmatpush1.bf16.msra.mxu0 0
        %2322 = vmatprep.subr.bf16.mxu0 0
        %2323 = vmatpush1.bf16.msra.mxu0 0
        %2324 = vmatprep.subr.bf16.mxu0 0
        %2325 = vmatpush1.bf16.msra.mxu0 0
        %2326 = vmatprep.subr.bf16.mxu0 0
        %2327 = vmatpush1.bf16.msra.mxu0 0
        %2328 = vmatprep.subr.bf16.mxu0 0
        %2329 = vmatpush1.bf16.msra.mxu0 0
        %2330 = vmatprep.subr.bf16.mxu0 0
        %2331 = vmatpush1.bf16.msra.mxu0 0
        %2332 = vmatprep.subr.bf16.mxu0 0
        %2333 = vmatpush1.bf16.msra.mxu0 0
        %2334 = vmatprep.subr.bf16.mxu0 0
        %2335 = vmatpush1.bf16.msra.mxu0 0
        %2336 = vmatprep.subr.bf16.mxu0 0
        %2337 = vmatpush1.bf16.msra.mxu0 0
        %2338 = vmatprep.mubr.bf16.mxu0 0
        %2339 = vmatmul.mubr.bf16.gmra.mrb[0].mxu0 %v2151
        %v2340 = vpop.f32.mrb[0].mxu0
        %v2341 = vadd.f32 0.0, %v2340
        %v2342 = vpop.f32.mrb[0].mxu0
        %v2343 = vadd.f32 0.0, %v2342
        %v2344 = vpop.f32.mrb[0].mxu0
        %v2345 = vpop.f32.mrb[0].mxu0
        %2346 = vdwg.mxu0
        %2347 = vmatprep.subr.bf16.mxu0 %v2109
        %2348 = vmatpush1.bf16.msra.mxu0 %v2108
        %2349 = vmatprep.subr.bf16.mxu0 %v2119
        %2350 = vmatpush1.bf16.msra.mxu0 %v2118
        %2351 = vmatprep.subr.bf16.mxu0 %v2181
        %2352 = vmatpush1.bf16.msra.mxu0 %v2178
        %2353 = vmatprep.subr.bf16.mxu0 0
        %2354 = vmatpush1.bf16.msra.mxu0 0
        %2355 = vmatprep.subr.bf16.mxu0 0
        %2356 = vmatpush1.bf16.msra.mxu0 0
        %2357 = vmatprep.subr.bf16.mxu0 0
        %2358 = vmatpush1.bf16.msra.mxu0 0
        %2359 = vmatprep.subr.bf16.mxu0 0
        %2360 = vmatpush1.bf16.msra.mxu0 0
        %2361 = vmatprep.subr.bf16.mxu0 0
        %2362 = vmatpush1.bf16.msra.mxu0 0
        %2363 = vmatprep.subr.bf16.mxu0 0
        %2364 = vmatpush1.bf16.msra.mxu0 0
        %2365 = vmatprep.subr.bf16.mxu0 0
        %2366 = vmatpush1.bf16.msra.mxu0 0
        %2367 = vmatprep.subr.bf16.mxu0 0
        %2368 = vmatpush1.bf16.msra.mxu0 0
        %2369 = vmatprep.subr.bf16.mxu0 0
        %2370 = vmatpush1.bf16.msra.mxu0 0
        %2371 = vmatprep.subr.bf16.mxu0 0
        %2372 = vmatpush1.bf16.msra.mxu0 0
        %2373 = vmatprep.subr.bf16.mxu0 0
        %2374 = vmatpush1.bf16.msra.mxu0 0
        %2375 = vmatprep.subr.bf16.mxu0 0
        %2376 = vmatpush1.bf16.msra.mxu0 0
        %2377 = vmatprep.subr.bf16.mxu0 0
        %2378 = vmatpush1.bf16.msra.mxu0 0
        %2379 = vmatprep.mubr.bf16.mxu0 0
        %2380 = vmatmul.mubr.bf16.gmra.mrb[0].mxu0 %v2151
        %v2381 = vpop.f32.mrb[0].mxu0
        %v2382 = vadd.f32 0.0, %v2381
        %v2383 = vpop.f32.mrb[0].mxu0
        %v2384 = vadd.f32 0.0, %v2383
        %v2385 = vpop.f32.mrb[0].mxu0
        %v2386 = vpop.f32.mrb[0].mxu0
        %2387 = vdwg.mxu0
        %v2388 = vadd.f32 %v1828, %v2218
        %v2389 = vadd.f32 %v1830, %v2220
        %v2390 = vadd.f32 %v1869, %v2259
        %v2391 = vadd.f32 %v1871, %v2261
        %v2392 = vadd.f32 %v1910, %v2300
        %v2393 = vadd.f32 %v1912, %v2302
        %v2394 = vadd.f32 %v1951, %v2341
        %v2395 = vadd.f32 %v1953, %v2343
        %v2396 = vadd.f32 %v1992, %v2382
        %v2397 = vadd.f32 %v1994, %v2384
        %2399 = vset.pattern.permute.xlu0 0
        %2400 = vperm.xlu0 %2399, %v300
        %v2401 = vpop.permute.xlu0 %2400
        %v2403 = vadd.f32 %v2388, %v2401
        %v2404 = vadd.f32 %v2389, %v2401
        %v2405 = vadd.f32 %v2390, %v2401
        %v2406 = vadd.f32 %v2391, %v2401
        %v2407 = vadd.f32 %v2392, %v2401
        %v2408 = vadd.f32 %v2393, %v2401
        %v2409 = vadd.f32 %v2394, %v2401
        %v2410 = vadd.f32 %v2395, %v2401
        %v2411 = vadd.f32 %v2396, %v2401
        %v2412 = vadd.f32 %v2397, %v2401
        %v2413 = vsel %vm298, 1, 0
        %v2414 = vsel %vm299, 1, 0
        %v2415 = vlaneseq
        %v2416 = vshrl.u32 %v2415, 7
        %v2417 = vsub.s32 0, %v2416
        %v2418 = vrot.slane %v2413, %v2417
        %v2419 = vlaneseq
        %v2420 = vshrl.u32 %v2419, 7
        %v2421 = vsub.s32 1, %v2420
        %v2422 = vrot.slane %v2413, %v2421
        %v2423 = vlaneseq
        %v2424 = vshrl.u32 %v2423, 7
        %v2425 = vsub.s32 2, %v2424
        %v2426 = vrot.slane %v2413, %v2425
        %v2427 = vlaneseq
        %v2428 = vshrl.u32 %v2427, 7
        %v2429 = vsub.s32 3, %v2428
        %v2430 = vrot.slane %v2413, %v2429
        %v2431 = vlaneseq
        %v2432 = vshrl.u32 %v2431, 7
        %v2433 = vsub.s32 4, %v2432
        %v2434 = vrot.slane %v2413, %v2433
        %v2435 = vlaneseq
        %v2436 = vshrl.u32 %v2435, 7
        %v2437 = vsub.s32 5, %v2436
        %v2438 = vrot.slane %v2413, %v2437
        %v2439 = vlaneseq
        %v2440 = vshrl.u32 %v2439, 7
        %v2441 = vsub.s32 6, %v2440
        %v2442 = vrot.slane %v2413, %v2441
        %v2443 = vlaneseq
        %v2444 = vshrl.u32 %v2443, 7
        %v2445 = vsub.s32 7, %v2444
        %v2446 = vrot.slane %v2413, %v2445
        %v2447 = vlaneseq
        %v2448 = vshrl.u32 %v2447, 7
        %v2449 = vsub.s32 0, %v2448
        %v2450 = vrot.slane %v2414, %v2449
        %v2451 = vlaneseq
        %v2452 = vshrl.u32 %v2451, 7
        %v2453 = vsub.s32 1, %v2452
        %v2454 = vrot.slane %v2414, %v2453
        %vm2455 = vcmp.eq.s32.totalorder %v2418, 1
        %vm2456 = vcmp.eq.s32.totalorder %v2422, 1
        %vm2457 = vcmp.eq.s32.totalorder %v2426, 1
        %vm2458 = vcmp.eq.s32.totalorder %v2430, 1
        %vm2459 = vcmp.eq.s32.totalorder %v2434, 1
        %vm2460 = vcmp.eq.s32.totalorder %v2438, 1
        %vm2461 = vcmp.eq.s32.totalorder %v2442, 1
        %vm2462 = vcmp.eq.s32.totalorder %v2446, 1
        %vm2463 = vcmp.eq.s32.totalorder %v2450, 1
        %vm2464 = vcmp.eq.s32.totalorder %v2454, 1
        %v2465 = vsel %vm2455, %v2403, 0.0
        %v2466 = vsel %vm2456, %v2404, 0.0
        %v2467 = vsel %vm2457, %v2405, 0.0
        %v2468 = vsel %vm2458, %v2406, 0.0
        %v2469 = vsel %vm2459, %v2407, 0.0
        %v2470 = vsel %vm2460, %v2408, 0.0
        %v2471 = vsel %vm2461, %v2409, 0.0
        %v2472 = vsel %vm2462, %v2410, 0.0
        %v2473 = vsel %vm2463, %v2411, 0.0
        %v2474 = vsel %vm2464, %v2412, 0.0
        %v2475 = vadd.f32 %v2465, %v2466
        %v2476 = vadd.f32 %v2475, %v2467
        %v2477 = vadd.f32 %v2476, %v2468
        %v2478 = vadd.f32 %v2477, %v2469
        %v2479 = vadd.f32 %v2478, %v2470
        %v2480 = vadd.f32 %v2479, %v2471
        %v2481 = vadd.f32 %v2480, %v2472
        %v2482 = vadd.f32 %v2481, %v2473
        %v2483 = vadd.f32 %v2482, %v2474
        %2484 = vadd.xlane.f32.xlu0 %v2483
        %v2485 = vpop.xlane.xlu0 %2484
        %v2486 = vmul.f32 %v2465, %v2465
        %v2487 = vmul.f32 %v2466, %v2466
        %v2488 = vmul.f32 %v2467, %v2467
        %v2489 = vmul.f32 %v2468, %v2468
        %v2490 = vmul.f32 %v2469, %v2469
        %v2491 = vmul.f32 %v2470, %v2470
        %v2492 = vmul.f32 %v2471, %v2471
        %v2493 = vmul.f32 %v2472, %v2472
        %v2494 = vmul.f32 %v2473, %v2473
        %v2495 = vmul.f32 %v2474, %v2474
        %v2496 = vadd.f32 %v2486, %v2487
        %v2497 = vadd.f32 %v2496, %v2488
        %v2498 = vadd.f32 %v2497, %v2489
        %v2499 = vadd.f32 %v2498, %v2490
        %v2500 = vadd.f32 %v2499, %v2491
        %v2501 = vadd.f32 %v2500, %v2492
        %v2502 = vadd.f32 %v2501, %v2493
        %v2503 = vadd.f32 %v2502, %v2494
        %v2504 = vadd.f32 %v2503, %v2495
        %2505 = vadd.xlane.f32.xlu0 %v2504
        %v2506 = vpop.xlane.xlu0 %2505
        %v2507 = vmul.f32 %v2485, 0.001953125
        %v2508 = vmul.f32 %v2506, 0.001953125
        %v2509 = vmul.f32 %v2507, %v2507
        %v2510 = vsub.f32 %v2508, %v2509
        %v2511 = vmax.f32 %v2510, 0.0
        %v2512 = vsub.f32 %v2403, %v2507
        %v2513 = vsub.f32 %v2404, %v2507
        %v2514 = vsub.f32 %v2405, %v2507
        %v2515 = vsub.f32 %v2406, %v2507
        %v2516 = vsub.f32 %v2407, %v2507
        %v2517 = vsub.f32 %v2408, %v2507
        %v2518 = vsub.f32 %v2409, %v2507
        %v2519 = vsub.f32 %v2410, %v2507
        %v2520 = vsub.f32 %v2411, %v2507
        %v2521 = vsub.f32 %v2412, %v2507
        %v2522 = vadd.f32 %v2511, 1e-05
        %v2523 = vrsqrt.pop %v2522
        %v2524 = vmul.f32 %v2512, %v2523
        %v2525 = vmul.f32 %v2513, %v2523
        %v2526 = vmul.f32 %v2514, %v2523
        %v2527 = vmul.f32 %v2515, %v2523
        %v2528 = vmul.f32 %v2516, %v2523
        %v2529 = vmul.f32 %v2517, %v2523
        %v2530 = vmul.f32 %v2518, %v2523
        %v2531 = vmul.f32 %v2519, %v2523
        %v2532 = vmul.f32 %v2520, %v2523
        %v2533 = vmul.f32 %v2521, %v2523
        %2534 = vset.pattern.permute.xlu0 1
        %2535 = vperm.xlu0 %2534, %v300
        %v2536 = vpop.permute.xlu0 %2535
        %v2538 = vmul.f32 %v2524, %v2536
        %v2539 = vmul.f32 %v2525, %v2536
        %v2540 = vmul.f32 %v2526, %v2536
        %v2541 = vmul.f32 %v2527, %v2536
        %v2542 = vmul.f32 %v2528, %v2536
        %v2543 = vmul.f32 %v2529, %v2536
        %v2544 = vmul.f32 %v2530, %v2536
        %v2545 = vmul.f32 %v2531, %v2536
        %v2546 = vmul.f32 %v2532, %v2536
        %v2547 = vmul.f32 %v2533, %v2536
        %2548 = vset.pattern.permute.xlu0 2
        %2549 = vperm.xlu0 %2548, %v300
        %v2550 = vpop.permute.xlu0 %2549
        %v2552 = vadd.f32 %v2538, %v2550
        %v2553 = vadd.f32 %v2539, %v2550
        %v2554 = vadd.f32 %v2540, %v2550
        %v2555 = vadd.f32 %v2541, %v2550
        %v2556 = vadd.f32 %v2542, %v2550
        %v2557 = vadd.f32 %v2543, %v2550
        %v2558 = vadd.f32 %v2544, %v2550
        %v2559 = vadd.f32 %v2545, %v2550
        %v2560 = vadd.f32 %v2546, %v2550
        %v2561 = vadd.f32 %v2547, %v2550
        %vm2562 = vcmp.gt.f32.partialorder %v2552, 0.0
        %vm2563 = vcmp.gt.f32.partialorder %v2553, 0.0
        %vm2564 = vcmp.gt.f32.partialorder %v2554, 0.0
        %vm2565 = vcmp.gt.f32.partialorder %v2555, 0.0
        %vm2566 = vcmp.gt.f32.partialorder %v2556, 0.0
        %vm2567 = vcmp.gt.f32.partialorder %v2557, 0.0
        %vm2568 = vcmp.gt.f32.partialorder %v2558, 0.0
        %vm2569 = vcmp.gt.f32.partialorder %v2559, 0.0
        %vm2570 = vcmp.gt.f32.partialorder %v2560, 0.0
        %vm2571 = vcmp.gt.f32.partialorder %v2561, 0.0
        %v2572 = vmul.f32 %v2552, 0.01
        %v2573 = vmul.f32 %v2553, 0.01
        %v2574 = vmul.f32 %v2554, 0.01
        %v2575 = vmul.f32 %v2555, 0.01
        %v2576 = vmul.f32 %v2556, 0.01
        %v2577 = vmul.f32 %v2557, 0.01
        %v2578 = vmul.f32 %v2558, 0.01
        %v2579 = vmul.f32 %v2559, 0.01
        %v2580 = vmul.f32 %v2560, 0.01
        %v2581 = vmul.f32 %v2561, 0.01
        %v2582 = vsel %vm2562, %v2552, %v2572
        %v2583 = vsel %vm2563, %v2553, %v2573
        %v2584 = vsel %vm2564, %v2554, %v2574
        %v2585 = vsel %vm2565, %v2555, %v2575
        %v2586 = vsel %vm2566, %v2556, %v2576
        %v2587 = vsel %vm2567, %v2557, %v2577
        %v2588 = vsel %vm2568, %v2558, %v2578
        %v2589 = vsel %vm2569, %v2559, %v2579
        %v2590 = vsel %vm2570, %v2560, %v2580
        %v2591 = vsel %vm2571, %v2561, %v2581
        %v2592 = vsel %vm2455, %v2582, 0.0
        %v2593 = vsel %vm2456, %v2583, 0.0
        %v2594 = vsel %vm2457, %v2584, 0.0
        %v2595 = vsel %vm2458, %v2585, 0.0
        %v2596 = vsel %vm2459, %v2586, 0.0
        %v2597 = vsel %vm2460, %v2587, 0.0
        %v2598 = vsel %vm2461, %v2588, 0.0
        %v2599 = vsel %vm2462, %v2589, 0.0
        %v2600 = vsel %vm2463, %v2590, 0.0
        %v2601 = vsel %vm2464, %v2591, 0.0
        %v2602 = vpack.c.bf16 %v2592, %v2592
        %v2603 = vpack.c.bf16 %v2593, %v2593
        %v2604 = vpack.c.bf16 %v2594, %v2594
        %v2605 = vpack.c.bf16 %v2595, %v2595
        %v2606 = vpack.c.bf16 %v2596, %v2596
        %v2607 = vpack.c.bf16 %v2597, %v2597
        %v2608 = vpack.c.bf16 %v2598, %v2598
        %v2609 = vpack.c.bf16 %v2599, %v2599
        %v2610 = vpack.c.bf16 %v2600, %v2600
        %v2611 = vpack.c.bf16 %v2601, %v2601
        %v2622 = vunpack.c.l.b16 %v2602
        %v2623 = vunpack.c.l.b16 %v2603
        %v2624 = vunpack.c.l.b16 %v2604
        %v2625 = vunpack.c.l.b16 %v2605
        %v2626 = vunpack.c.l.b16 %v2606
        %v2627 = vunpack.c.l.b16 %v2607
        %v2628 = vunpack.c.l.b16 %v2608
        %v2629 = vunpack.c.l.b16 %v2609
        %v2630 = vunpack.c.l.b16 %v2610
        %v2631 = vunpack.c.l.b16 %v2611
        %v2632 = vpack.c.b16 %v2623, %v2622
        %v2633 = vpack.c.b16 %v2625, %v2624
        %v2634 = vpack.c.b16 %v2627, %v2626
        %v2635 = vpack.c.b16 %v2629, %v2628
        %v2636 = vpack.c.b16 %v2631, %v2630
        %2642 = vst [vmem:[#allocation2 + $0x8] sm:$0xff] %v2632
        %2643 = vst [vmem:[#allocation2 + $0x10] sm:$0xff] %v2633
        %2644 = vst [vmem:[#allocation2 + $0x18] sm:$0xff] %v2634
        %2645 = vst [vmem:[#allocation2 + $0x20] sm:$0xff] %v2635
        %2646 = vst [vmem:[#allocation2 + $0x28] sm:$0xff] %v2636
        %v2647 = vld [vmem:[#allocation2] sm:$0xff]
        %v2648 = vld [vmem:[#allocation2 + $0x8] sm:$0xff]
        %v2649 = vld [vmem:[#allocation2 + $0x10] sm:$0xff]
        %v2650 = vld [vmem:[#allocation2 + $0x18] sm:$0xff]
        %v2651 = vld [vmem:[#allocation2 + $0x20] sm:$0xff]
        %v2652 = vld [vmem:[#allocation2 + $0x28] sm:$0xff]
        %v2653 = vld [vmem:[#allocation2 + $0x30] sm:$0xf]
        %2661 = vrot.lane.b32.xlu0 %v2647, 11
        %v2662 = vpop.permute.xlu0 %2661
        %2663 = vrot.lane.b32.xlu0 %v2648, 11
        %v2664 = vpop.permute.xlu0 %2663
        %2665 = vrot.lane.b32.xlu0 %v2649, 11
        %v2666 = vpop.permute.xlu0 %2665
        %2667 = vrot.lane.b32.xlu0 %v2650, 11
        %v2668 = vpop.permute.xlu0 %2667
        %2669 = vrot.lane.b32.xlu0 %v2651, 11
        %v2670 = vpop.permute.xlu0 %2669
        %2671 = vrot.lane.b32.xlu0 %v2652, 11
        %v2672 = vpop.permute.xlu0 %2671
        %2673 = vrot.lane.b32.xlu0 %v2653, 11
        %v2674 = vpop.permute.xlu0 %2673
        %v2675 = vrot.slane %v2662, 4
        %v2676 = vrot.slane %v2664, 4
        %v2677 = vrot.slane %v2666, 4
        %v2678 = vrot.slane %v2668, 4
        %v2679 = vrot.slane %v2670, 4
        %v2680 = vrot.slane %v2672, 4
        %v2681 = vrot.slane %v2674, 4
        %v2682 = vsel %vm382, %v2675, %v2676
        %v2683 = vsel %vm384, %v2662, %v2682
        %v2684 = vsel %vm382, %v2676, %v2677
        %v2685 = vsel %vm384, %v2664, %v2684
        %v2686 = vsel %vm382, %v2677, %v2678
        %v2687 = vsel %vm384, %v2666, %v2686
        %v2688 = vsel %vm382, %v2678, %v2679
        %v2689 = vsel %vm384, %v2668, %v2688
        %v2690 = vsel %vm382, %v2679, %v2680
        %v2691 = vsel %vm384, %v2670, %v2690
        %v2692 = vsel %vm382, %v2680, %v2681
        %v2693 = vsel %vm384, %v2672, %v2692
        %2700 = vst [vmem:[#allocation3] sm:$0xff] %v2683
        %2701 = vst [vmem:[#allocation3 + $0x8] sm:$0xff] %v2685
        %2702 = vst [vmem:[#allocation3 + $0x10] sm:$0xff] %v2687
        %2703 = vst [vmem:[#allocation3 + $0x18] sm:$0xff] %v2689
        %2704 = vst [vmem:[#allocation3 + $0x20] sm:$0xff] %v2691
        %2705 = vst [vmem:[#allocation3 + $0x28] sm:$0xff] %v2693
        %v2706 = vld [vmem:[#allocation2] sm:$0xff]
        %v2707 = vld [vmem:[#allocation2 + $0x8] sm:$0xff]
        %v2708 = vld [vmem:[#allocation2 + $0x10] sm:$0xff]
        %v2709 = vld [vmem:[#allocation2 + $0x18] sm:$0xff]
        %v2710 = vld [vmem:[#allocation2 + $0x20] sm:$0xff]
        %v2711 = vld [vmem:[#allocation2 + $0x28] sm:$0xff]
        %v2712 = vld [vmem:[#allocation2 + $0x30] sm:$0xf]
        %2720 = vrot.lane.b32.xlu0 %v2706, 10
        %v2721 = vpop.permute.xlu0 %2720
        %2722 = vrot.lane.b32.xlu0 %v2707, 10
        %v2723 = vpop.permute.xlu0 %2722
        %2724 = vrot.lane.b32.xlu0 %v2708, 10
        %v2725 = vpop.permute.xlu0 %2724
        %2726 = vrot.lane.b32.xlu0 %v2709, 10
        %v2727 = vpop.permute.xlu0 %2726
        %2728 = vrot.lane.b32.xlu0 %v2710, 10
        %v2729 = vpop.permute.xlu0 %2728
        %2730 = vrot.lane.b32.xlu0 %v2711, 10
        %v2731 = vpop.permute.xlu0 %2730
        %2732 = vrot.lane.b32.xlu0 %v2712, 10
        %v2733 = vpop.permute.xlu0 %2732
        %v2734 = vrot.slane %v2721, 4
        %v2735 = vrot.slane %v2723, 4
        %v2736 = vrot.slane %v2725, 4
        %v2737 = vrot.slane %v2727, 4
        %v2738 = vrot.slane %v2729, 4
        %v2739 = vrot.slane %v2731, 4
        %v2740 = vrot.slane %v2733, 4
        %v2741 = vsel %vm382, %v2734, %v2735
        %v2742 = vsel %vm491, %v2721, %v2741
        %v2743 = vsel %vm382, %v2735, %v2736
        %v2744 = vsel %vm491, %v2723, %v2743
        %v2745 = vsel %vm382, %v2736, %v2737
        %v2746 = vsel %vm491, %v2725, %v2745
        %v2747 = vsel %vm382, %v2737, %v2738
        %v2748 = vsel %vm491, %v2727, %v2747
        %v2749 = vsel %vm382, %v2738, %v2739
        %v2750 = vsel %vm491, %v2729, %v2749
        %v2751 = vsel %vm382, %v2739, %v2740
        %v2752 = vsel %vm491, %v2731, %v2751
        %2759 = vst [vmem:[#allocation3 + $0x30] sm:$0xff] %v2742
        %2760 = vst [vmem:[#allocation3 + $0x38] sm:$0xff] %v2744
        %2761 = vst [vmem:[#allocation3 + $0x40] sm:$0xff] %v2746
        %2762 = vst [vmem:[#allocation3 + $0x48] sm:$0xff] %v2748
        %2763 = vst [vmem:[#allocation3 + $0x50] sm:$0xff] %v2750
        %2764 = vst [vmem:[#allocation3 + $0x58] sm:$0xff] %v2752
        %v2765 = vld [vmem:[#allocation2] sm:$0xff]
        %v2766 = vld [vmem:[#allocation2 + $0x8] sm:$0xff]
        %v2767 = vld [vmem:[#allocation2 + $0x10] sm:$0xff]
        %v2768 = vld [vmem:[#allocation2 + $0x18] sm:$0xff]
        %v2769 = vld [vmem:[#allocation2 + $0x20] sm:$0xff]
        %v2770 = vld [vmem:[#allocation2 + $0x28] sm:$0xff]
        %v2771 = vld [vmem:[#allocation2 + $0x30] sm:$0xf]
        %2779 = vrot.lane.b32.xlu0 %v2765, 9
        %v2780 = vpop.permute.xlu0 %2779
        %2781 = vrot.lane.b32.xlu0 %v2766, 9
        %v2782 = vpop.permute.xlu0 %2781
        %2783 = vrot.lane.b32.xlu0 %v2767, 9
        %v2784 = vpop.permute.xlu0 %2783
        %2785 = vrot.lane.b32.xlu0 %v2768, 9
        %v2786 = vpop.permute.xlu0 %2785
        %2787 = vrot.lane.b32.xlu0 %v2769, 9
        %v2788 = vpop.permute.xlu0 %2787
        %2789 = vrot.lane.b32.xlu0 %v2770, 9
        %v2790 = vpop.permute.xlu0 %2789
        %2791 = vrot.lane.b32.xlu0 %v2771, 9
        %v2792 = vpop.permute.xlu0 %2791
        %v2793 = vrot.slane %v2780, 4
        %v2794 = vrot.slane %v2782, 4
        %v2795 = vrot.slane %v2784, 4
        %v2796 = vrot.slane %v2786, 4
        %v2797 = vrot.slane %v2788, 4
        %v2798 = vrot.slane %v2790, 4
        %v2799 = vrot.slane %v2792, 4
        %v2800 = vsel %vm382, %v2793, %v2794
        %v2801 = vsel %vm597, %v2780, %v2800
        %v2802 = vsel %vm382, %v2794, %v2795
        %v2803 = vsel %vm597, %v2782, %v2802
        %v2804 = vsel %vm382, %v2795, %v2796
        %v2805 = vsel %vm597, %v2784, %v2804
        %v2806 = vsel %vm382, %v2796, %v2797
        %v2807 = vsel %vm597, %v2786, %v2806
        %v2808 = vsel %vm382, %v2797, %v2798
        %v2809 = vsel %vm597, %v2788, %v2808
        %v2810 = vsel %vm382, %v2798, %v2799
        %v2811 = vsel %vm597, %v2790, %v2810
        %2818 = vst [vmem:[#allocation3 + $0x60] sm:$0xff] %v2801
        %2819 = vst [vmem:[#allocation3 + $0x68] sm:$0xff] %v2803
        %2820 = vst [vmem:[#allocation3 + $0x70] sm:$0xff] %v2805
        %2821 = vst [vmem:[#allocation3 + $0x78] sm:$0xff] %v2807
        %2822 = vst [vmem:[#allocation3 + $0x80] sm:$0xff] %v2809
        %2823 = vst [vmem:[#allocation3 + $0x88] sm:$0xff] %v2811
        %v2824 = vld [vmem:[#allocation2] sm:$0xff]
        %v2825 = vld [vmem:[#allocation2 + $0x8] sm:$0xff]
        %v2826 = vld [vmem:[#allocation2 + $0x10] sm:$0xff]
        %v2827 = vld [vmem:[#allocation2 + $0x18] sm:$0xff]
        %v2828 = vld [vmem:[#allocation2 + $0x20] sm:$0xff]
        %v2829 = vld [vmem:[#allocation2 + $0x28] sm:$0xff]
        %v2830 = vld [vmem:[#allocation2 + $0x30] sm:$0xf]
        %2838 = vrot.lane.b32.xlu0 %v2824, 1
        %v2839 = vpop.permute.xlu0 %2838
        %2840 = vrot.lane.b32.xlu0 %v2825, 1
        %v2841 = vpop.permute.xlu0 %2840
        %2842 = vrot.lane.b32.xlu0 %v2826, 1
        %v2843 = vpop.permute.xlu0 %2842
        %2844 = vrot.lane.b32.xlu0 %v2827, 1
        %v2845 = vpop.permute.xlu0 %2844
        %2846 = vrot.lane.b32.xlu0 %v2828, 1
        %v2847 = vpop.permute.xlu0 %2846
        %2848 = vrot.lane.b32.xlu0 %v2829, 1
        %v2849 = vpop.permute.xlu0 %2848
        %2850 = vrot.lane.b32.xlu0 %v2830, 1
        %v2851 = vpop.permute.xlu0 %2850
        %v2852 = vrot.slane %v2839, 4
        %v2853 = vrot.slane %v2841, 4
        %v2854 = vrot.slane %v2843, 4
        %v2855 = vrot.slane %v2845, 4
        %v2856 = vrot.slane %v2847, 4
        %v2857 = vrot.slane %v2849, 4
        %v2858 = vrot.slane %v2851, 4
        %v2859 = vsel %vm382, %v2852, %v2853
        %v2860 = vsel %vm704, %v2839, %v2859
        %v2861 = vsel %vm382, %v2853, %v2854
        %v2862 = vsel %vm704, %v2841, %v2861
        %v2863 = vsel %vm382, %v2854, %v2855
        %v2864 = vsel %vm704, %v2843, %v2863
        %v2865 = vsel %vm382, %v2855, %v2856
        %v2866 = vsel %vm704, %v2845, %v2865
        %v2867 = vsel %vm382, %v2856, %v2857
        %v2868 = vsel %vm704, %v2847, %v2867
        %v2869 = vsel %vm382, %v2857, %v2858
        %v2870 = vsel %vm704, %v2849, %v2869
        %2877 = vst [vmem:[#allocation3 + $0x90] sm:$0xff] %v2860
        %2878 = vst [vmem:[#allocation3 + $0x98] sm:$0xff] %v2862
        %2879 = vst [vmem:[#allocation3 + $0xa0] sm:$0xff] %v2864
        %2880 = vst [vmem:[#allocation3 + $0xa8] sm:$0xff] %v2866
        %2881 = vst [vmem:[#allocation3 + $0xb0] sm:$0xff] %v2868
        %2882 = vst [vmem:[#allocation3 + $0xb8] sm:$0xff] %v2870
        %v2883 = vld [vmem:[#allocation2 + $0x4] sm:$0xff]
        %v2884 = vld [vmem:[#allocation2 + $0xc] sm:$0xff]
        %v2885 = vld [vmem:[#allocation2 + $0x14] sm:$0xff]
        %v2886 = vld [vmem:[#allocation2 + $0x1c] sm:$0xff]
        %v2887 = vld [vmem:[#allocation2 + $0x24] sm:$0xff]
        %v2888 = vld [vmem:[#allocation2 + $0x2c] sm:$0xff]
        %2889 = vst [vmem:[#allocation3 + $0xc0] sm:$0xff] %v2883
        %2890 = vst [vmem:[#allocation3 + $0xc8] sm:$0xff] %v2884
        %2891 = vst [vmem:[#allocation3 + $0xd0] sm:$0xff] %v2885
        %2892 = vst [vmem:[#allocation3 + $0xd8] sm:$0xff] %v2886
        %2893 = vst [vmem:[#allocation3 + $0xe0] sm:$0xff] %v2887
        %2894 = vst [vmem:[#allocation3 + $0xe8] sm:$0xff] %v2888
        %v2895 = vld [vmem:[#allocation2 + $0x4] sm:$0xff]
        %v2896 = vld [vmem:[#allocation2 + $0xc] sm:$0xff]
        %v2897 = vld [vmem:[#allocation2 + $0x14] sm:$0xff]
        %v2898 = vld [vmem:[#allocation2 + $0x1c] sm:$0xff]
        %v2899 = vld [vmem:[#allocation2 + $0x24] sm:$0xff]
        %v2900 = vld [vmem:[#allocation2 + $0x2c] sm:$0xff]
        %v2901 = vld [vmem:[#allocation2 + $0x34] sm:$0xf]
        %2909 = vrot.lane.b32.xlu0 %v2895, 127
        %v2910 = vpop.permute.xlu0 %2909
        %2911 = vrot.lane.b32.xlu0 %v2896, 127
        %v2912 = vpop.permute.xlu0 %2911
        %2913 = vrot.lane.b32.xlu0 %v2897, 127
        %v2914 = vpop.permute.xlu0 %2913
        %2915 = vrot.lane.b32.xlu0 %v2898, 127
        %v2916 = vpop.permute.xlu0 %2915
        %2917 = vrot.lane.b32.xlu0 %v2899, 127
        %v2918 = vpop.permute.xlu0 %2917
        %2919 = vrot.lane.b32.xlu0 %v2900, 127
        %v2920 = vpop.permute.xlu0 %2919
        %2921 = vrot.lane.b32.xlu0 %v2901, 127
        %v2922 = vpop.permute.xlu0 %2921
        %v2923 = vrot.slane %v2910, 4
        %v2924 = vrot.slane %v2912, 4
        %v2925 = vrot.slane %v2914, 4
        %v2926 = vrot.slane %v2916, 4
        %v2927 = vrot.slane %v2918, 4
        %v2928 = vrot.slane %v2920, 4
        %v2929 = vrot.slane %v2922, 4
        %v2930 = vsel %vm382, %v2923, %v2924
        %v2931 = vsel %vm874, %v2910, %v2930
        %v2932 = vsel %vm382, %v2924, %v2925
        %v2933 = vsel %vm874, %v2912, %v2932
        %v2934 = vsel %vm382, %v2925, %v2926
        %v2935 = vsel %vm874, %v2914, %v2934
        %v2936 = vsel %vm382, %v2926, %v2927
        %v2937 = vsel %vm874, %v2916, %v2936
        %v2938 = vsel %vm382, %v2927, %v2928
        %v2939 = vsel %vm874, %v2918, %v2938
        %v2940 = vsel %vm382, %v2928, %v2929
        %v2941 = vsel %vm874, %v2920, %v2940
        %2948 = vst [vmem:[#allocation3 + $0xf0] sm:$0xff] %v2931
        %2949 = vst [vmem:[#allocation3 + $0xf8] sm:$0xff] %v2933
        %2950 = vst [vmem:[#allocation3 + $0x100] sm:$0xff] %v2935
        %2951 = vst [vmem:[#allocation3 + $0x108] sm:$0xff] %v2937
        %2952 = vst [vmem:[#allocation3 + $0x110] sm:$0xff] %v2939
        %2953 = vst [vmem:[#allocation3 + $0x118] sm:$0xff] %v2941
        %v2954 = vld [vmem:[#allocation2 + $0x4] sm:$0xff]
        %v2955 = vld [vmem:[#allocation2 + $0xc] sm:$0xff]
        %v2956 = vld [vmem:[#allocation2 + $0x14] sm:$0xff]
        %v2957 = vld [vmem:[#allocation2 + $0x1c] sm:$0xff]
        %v2958 = vld [vmem:[#allocation2 + $0x24] sm:$0xff]
        %v2959 = vld [vmem:[#allocation2 + $0x2c] sm:$0xff]
        %v2960 = vld [vmem:[#allocation2 + $0x34] sm:$0xf]
        %2968 = vrot.lane.b32.xlu0 %v2954, 119
        %v2969 = vpop.permute.xlu0 %2968
        %2970 = vrot.lane.b32.xlu0 %v2955, 119
        %v2971 = vpop.permute.xlu0 %2970
        %2972 = vrot.lane.b32.xlu0 %v2956, 119
        %v2973 = vpop.permute.xlu0 %2972
        %2974 = vrot.lane.b32.xlu0 %v2957, 119
        %v2975 = vpop.permute.xlu0 %2974
        %2976 = vrot.lane.b32.xlu0 %v2958, 119
        %v2977 = vpop.permute.xlu0 %2976
        %2978 = vrot.lane.b32.xlu0 %v2959, 119
        %v2979 = vpop.permute.xlu0 %2978
        %2980 = vrot.lane.b32.xlu0 %v2960, 119
        %v2981 = vpop.permute.xlu0 %2980
        %v2982 = vrot.slane %v2969, 4
        %v2983 = vrot.slane %v2971, 4
        %v2984 = vrot.slane %v2973, 4
        %v2985 = vrot.slane %v2975, 4
        %v2986 = vrot.slane %v2977, 4
        %v2987 = vrot.slane %v2979, 4
        %v2988 = vrot.slane %v2981, 4
        %v2989 = vsel %vm382, %v2982, %v2983
        %v2990 = vsel %vm980, %v2969, %v2989
        %v2991 = vsel %vm382, %v2983, %v2984
        %v2992 = vsel %vm980, %v2971, %v2991
        %v2993 = vsel %vm382, %v2984, %v2985
        %v2994 = vsel %vm980, %v2973, %v2993
        %v2995 = vsel %vm382, %v2985, %v2986
        %v2996 = vsel %vm980, %v2975, %v2995
        %v2997 = vsel %vm382, %v2986, %v2987
        %v2998 = vsel %vm980, %v2977, %v2997
        %v2999 = vsel %vm382, %v2987, %v2988
        %v3000 = vsel %vm980, %v2979, %v2999
        %3007 = vst [vmem:[#allocation3 + $0x120] sm:$0xff] %v2990
        %3008 = vst [vmem:[#allocation3 + $0x128] sm:$0xff] %v2992
        %3009 = vst [vmem:[#allocation3 + $0x130] sm:$0xff] %v2994
        %3010 = vst [vmem:[#allocation3 + $0x138] sm:$0xff] %v2996
        %3011 = vst [vmem:[#allocation3 + $0x140] sm:$0xff] %v2998
        %3012 = vst [vmem:[#allocation3 + $0x148] sm:$0xff] %v3000
        %v3013 = vld [vmem:[#allocation2 + $0x4] sm:$0xff]
        %v3014 = vld [vmem:[#allocation2 + $0xc] sm:$0xff]
        %v3015 = vld [vmem:[#allocation2 + $0x14] sm:$0xff]
        %v3016 = vld [vmem:[#allocation2 + $0x1c] sm:$0xff]
        %v3017 = vld [vmem:[#allocation2 + $0x24] sm:$0xff]
        %v3018 = vld [vmem:[#allocation2 + $0x2c] sm:$0xff]
        %v3019 = vld [vmem:[#allocation2 + $0x34] sm:$0xf]
        %3027 = vrot.lane.b32.xlu0 %v3013, 118
        %v3028 = vpop.permute.xlu0 %3027
        %3029 = vrot.lane.b32.xlu0 %v3014, 118
        %v3030 = vpop.permute.xlu0 %3029
        %3031 = vrot.lane.b32.xlu0 %v3015, 118
        %v3032 = vpop.permute.xlu0 %3031
        %3033 = vrot.lane.b32.xlu0 %v3016, 118
        %v3034 = vpop.permute.xlu0 %3033
        %3035 = vrot.lane.b32.xlu0 %v3017, 118
        %v3036 = vpop.permute.xlu0 %3035
        %3037 = vrot.lane.b32.xlu0 %v3018, 118
        %v3038 = vpop.permute.xlu0 %3037
        %3039 = vrot.lane.b32.xlu0 %v3019, 118
        %v3040 = vpop.permute.xlu0 %3039
        %v3041 = vrot.slane %v3028, 4
        %v3042 = vrot.slane %v3030, 4
        %v3043 = vrot.slane %v3032, 4
        %v3044 = vrot.slane %v3034, 4
        %v3045 = vrot.slane %v3036, 4
        %v3046 = vrot.slane %v3038, 4
        %v3047 = vrot.slane %v3040, 4
        %v3048 = vsel %vm382, %v3041, %v3042
        %v3049 = vsel %vm1087, %v3028, %v3048
        %v3050 = vsel %vm382, %v3042, %v3043
        %v3051 = vsel %vm1087, %v3030, %v3050
        %v3052 = vsel %vm382, %v3043, %v3044
        %v3053 = vsel %vm1087, %v3032, %v3052
        %v3054 = vsel %vm382, %v3044, %v3045
        %v3055 = vsel %vm1087, %v3034, %v3054
        %v3056 = vsel %vm382, %v3045, %v3046
        %v3057 = vsel %vm1087, %v3036, %v3056
        %v3058 = vsel %vm382, %v3046, %v3047
        %v3059 = vsel %vm1087, %v3038, %v3058
        %3066 = vst [vmem:[#allocation3 + $0x150] sm:$0xff] %v3049
        %3067 = vst [vmem:[#allocation3 + $0x158] sm:$0xff] %v3051
        %3068 = vst [vmem:[#allocation3 + $0x160] sm:$0xff] %v3053
        %3069 = vst [vmem:[#allocation3 + $0x168] sm:$0xff] %v3055
        %3070 = vst [vmem:[#allocation3 + $0x170] sm:$0xff] %v3057
        %3071 = vst [vmem:[#allocation3 + $0x178] sm:$0xff] %v3059
        %v3072 = vld [vmem:[#allocation2 + $0x4] sm:$0xff]
        %v3073 = vld [vmem:[#allocation2 + $0xc] sm:$0xff]
        %v3074 = vld [vmem:[#allocation2 + $0x14] sm:$0xff]
        %v3075 = vld [vmem:[#allocation2 + $0x1c] sm:$0xff]
        %v3076 = vld [vmem:[#allocation2 + $0x24] sm:$0xff]
        %v3077 = vld [vmem:[#allocation2 + $0x2c] sm:$0xff]
        %v3078 = vld [vmem:[#allocation2 + $0x34] sm:$0xf]
        %3086 = vrot.lane.b32.xlu0 %v3072, 117
        %v3087 = vpop.permute.xlu0 %3086
        %3088 = vrot.lane.b32.xlu0 %v3073, 117
        %v3089 = vpop.permute.xlu0 %3088
        %3090 = vrot.lane.b32.xlu0 %v3074, 117
        %v3091 = vpop.permute.xlu0 %3090
        %3092 = vrot.lane.b32.xlu0 %v3075, 117
        %v3093 = vpop.permute.xlu0 %3092
        %3094 = vrot.lane.b32.xlu0 %v3076, 117
        %v3095 = vpop.permute.xlu0 %3094
        %3096 = vrot.lane.b32.xlu0 %v3077, 117
        %v3097 = vpop.permute.xlu0 %3096
        %3098 = vrot.lane.b32.xlu0 %v3078, 117
        %v3099 = vpop.permute.xlu0 %3098
        %v3100 = vrot.slane %v3087, 4
        %v3101 = vrot.slane %v3089, 4
        %v3102 = vrot.slane %v3091, 4
        %v3103 = vrot.slane %v3093, 4
        %v3104 = vrot.slane %v3095, 4
        %v3105 = vrot.slane %v3097, 4
        %v3106 = vrot.slane %v3099, 4
        %v3107 = vsel %vm382, %v3100, %v3101
        %v3108 = vsel %vm1193, %v3087, %v3107
        %v3109 = vsel %vm382, %v3101, %v3102
        %v3110 = vsel %vm1193, %v3089, %v3109
        %v3111 = vsel %vm382, %v3102, %v3103
        %v3112 = vsel %vm1193, %v3091, %v3111
        %v3113 = vsel %vm382, %v3103, %v3104
        %v3114 = vsel %vm1193, %v3093, %v3113
        %v3115 = vsel %vm382, %v3104, %v3105
        %v3116 = vsel %vm1193, %v3095, %v3115
        %v3117 = vsel %vm382, %v3105, %v3106
        %v3118 = vsel %vm1193, %v3097, %v3117
        %3125 = vst [vmem:[#allocation3 + $0x180] sm:$0xff] %v3108
        %3126 = vst [vmem:[#allocation3 + $0x188] sm:$0xff] %v3110
        %3127 = vst [vmem:[#allocation3 + $0x190] sm:$0xff] %v3112
        %3128 = vst [vmem:[#allocation3 + $0x198] sm:$0xff] %v3114
        %3129 = vst [vmem:[#allocation3 + $0x1a0] sm:$0xff] %v3116
        %3130 = vst [vmem:[#allocation3 + $0x1a8] sm:$0xff] %v3118
        %v3131 = vld [vmem:[#allocation9] sm:$0xf]
        %v3132 = vld [vmem:[#allocation3] sm:$0xff]
        %v3133 = vld [vmem:[#allocation3 + $0x8] sm:$0xff]
        %v3134 = vld [vmem:[#allocation3 + $0x10] sm:$0xff]
        %v3135 = vld [vmem:[#allocation3 + $0x18] sm:$0xff]
        %v3136 = vld [vmem:[#allocation3 + $0x20] sm:$0xff]
        %v3137 = vld [vmem:[#allocation3 + $0x30] sm:$0xff]
        %v3138 = vld [vmem:[#allocation3 + $0x38] sm:$0xff]
        %v3139 = vld [vmem:[#allocation3 + $0x40] sm:$0xff]
        %v3140 = vld [vmem:[#allocation3 + $0x48] sm:$0xff]
        %v3141 = vld [vmem:[#allocation3 + $0x50] sm:$0xff]
        %v3142 = vld [vmem:[#allocation3 + $0x60] sm:$0xff]
        %v3143 = vld [vmem:[#allocation3 + $0x68] sm:$0xff]
        %v3144 = vld [vmem:[#allocation3 + $0x70] sm:$0xff]
        %v3145 = vld [vmem:[#allocation3 + $0x78] sm:$0xff]
        %v3146 = vld [vmem:[#allocation3 + $0x80] sm:$0xff]
        %v3147 = vld [vmem:[#allocation3 + $0x90] sm:$0xff]
        %v3148 = vld [vmem:[#allocation3 + $0x98] sm:$0xff]
        %v3149 = vld [vmem:[#allocation3 + $0xa0] sm:$0xff]
        %v3150 = vld [vmem:[#allocation3 + $0xa8] sm:$0xff]
        %v3151 = vld [vmem:[#allocation3 + $0xb0] sm:$0xff]
        %v3152 = vld [vmem:[#allocation3 + $0xc0] sm:$0xff]
        %v3153 = vld [vmem:[#allocation3 + $0xc8] sm:$0xff]
        %v3154 = vld [vmem:[#allocation3 + $0xd0] sm:$0xff]
        %v3155 = vld [vmem:[#allocation3 + $0xd8] sm:$0xff]
        %v3156 = vld [vmem:[#allocation3 + $0xe0] sm:$0xff]
        %v3157 = vld [vmem:[#allocation3 + $0xf0] sm:$0xff]
        %v3158 = vld [vmem:[#allocation3 + $0xf8] sm:$0xff]
        %v3159 = vld [vmem:[#allocation3 + $0x100] sm:$0xff]
        %v3160 = vld [vmem:[#allocation3 + $0x108] sm:$0xff]
        %v3161 = vld [vmem:[#allocation3 + $0x110] sm:$0xff]
        %v3162 = vld [vmem:[#allocation3 + $0x120] sm:$0xff]
        %v3163 = vld [vmem:[#allocation3 + $0x128] sm:$0xff]
        %v3164 = vld [vmem:[#allocation3 + $0x130] sm:$0xff]
        %v3165 = vld [vmem:[#allocation3 + $0x138] sm:$0xff]
        %v3166 = vld [vmem:[#allocation3 + $0x140] sm:$0xff]
        %v3167 = vld [vmem:[#allocation3 + $0x150] sm:$0xff]
        %v3168 = vld [vmem:[#allocation3 + $0x158] sm:$0xff]
        %v3169 = vld [vmem:[#allocation3 + $0x160] sm:$0xff]
        %v3170 = vld [vmem:[#allocation3 + $0x168] sm:$0xff]
        %v3171 = vld [vmem:[#allocation3 + $0x170] sm:$0xff]
        %v3172 = vld [vmem:[#allocation3 + $0x180] sm:$0xff]
        %v3173 = vld [vmem:[#allocation3 + $0x188] sm:$0xff]
        %v3174 = vld [vmem:[#allocation3 + $0x190] sm:$0xff]
        %v3175 = vld [vmem:[#allocation3 + $0x198] sm:$0xff]
        %v3176 = vld [vmem:[#allocation3 + $0x1a0] sm:$0xff]
        %s3177 = scalar_lea.vmem [#allocation9], 4
        %v3178 = vld [vmem:[%s3177] sm:$0xf]
        %v3179 = vld [vmem:[#allocation3 + $0x4] sm:$0xff]
        %v3180 = vld [vmem:[#allocation3 + $0xc] sm:$0xff]
        %v3181 = vld [vmem:[#allocation3 + $0x14] sm:$0xff]
        %v3182 = vld [vmem:[#allocation3 + $0x1c] sm:$0xff]
        %v3183 = vld [vmem:[#allocation3 + $0x24] sm:$0xff]
        %v3184 = vld [vmem:[#allocation3 + $0x34] sm:$0xff]
        %v3185 = vld [vmem:[#allocation3 + $0x3c] sm:$0xff]
        %v3186 = vld [vmem:[#allocation3 + $0x44] sm:$0xff]
        %v3187 = vld [vmem:[#allocation3 + $0x4c] sm:$0xff]
        %v3188 = vld [vmem:[#allocation3 + $0x54] sm:$0xff]
        %v3189 = vld [vmem:[#allocation3 + $0x64] sm:$0xff]
        %v3190 = vld [vmem:[#allocation3 + $0x6c] sm:$0xff]
        %v3191 = vld [vmem:[#allocation3 + $0x74] sm:$0xff]
        %v3192 = vld [vmem:[#allocation3 + $0x7c] sm:$0xff]
        %v3193 = vld [vmem:[#allocation3 + $0x84] sm:$0xff]
        %v3194 = vld [vmem:[#allocation3 + $0x94] sm:$0xff]
        %v3195 = vld [vmem:[#allocation3 + $0x9c] sm:$0xff]
        %v3196 = vld [vmem:[#allocation3 + $0xa4] sm:$0xff]
        %v3197 = vld [vmem:[#allocation3 + $0xac] sm:$0xff]
        %v3198 = vld [vmem:[#allocation3 + $0xb4] sm:$0xff]
        %v3199 = vld [vmem:[#allocation3 + $0xc4] sm:$0xff]
        %v3200 = vld [vmem:[#allocation3 + $0xcc] sm:$0xff]
        %v3201 = vld [vmem:[#allocation3 + $0xd4] sm:$0xff]
        %v3202 = vld [vmem:[#allocation3 + $0xdc] sm:$0xff]
        %v3203 = vld [vmem:[#allocation3 + $0xe4] sm:$0xff]
        %v3204 = vld [vmem:[#allocation3 + $0xf4] sm:$0xff]
        %v3205 = vld [vmem:[#allocation3 + $0xfc] sm:$0xff]
        %v3206 = vld [vmem:[#allocation3 + $0x104] sm:$0xff]
        %v3207 = vld [vmem:[#allocation3 + $0x10c] sm:$0xff]
        %v3208 = vld [vmem:[#allocation3 + $0x114] sm:$0xff]
        %v3209 = vld [vmem:[#allocation3 + $0x124] sm:$0xff]
        %v3210 = vld [vmem:[#allocation3 + $0x12c] sm:$0xff]
        %v3211 = vld [vmem:[#allocation3 + $0x134] sm:$0xff]
        %v3212 = vld [vmem:[#allocation3 + $0x13c] sm:$0xff]
        %v3213 = vld [vmem:[#allocation3 + $0x144] sm:$0xff]
        %v3214 = vld [vmem:[#allocation3 + $0x154] sm:$0xff]
        %v3215 = vld [vmem:[#allocation3 + $0x15c] sm:$0xff]
        %v3216 = vld [vmem:[#allocation3 + $0x164] sm:$0xff]
        %v3217 = vld [vmem:[#allocation3 + $0x16c] sm:$0xff]
        %v3218 = vld [vmem:[#allocation3 + $0x174] sm:$0xff]
        %v3219 = vld [vmem:[#allocation3 + $0x184] sm:$0xff]
        %v3220 = vld [vmem:[#allocation3 + $0x18c] sm:$0xff]
        %v3221 = vld [vmem:[#allocation3 + $0x194] sm:$0xff]
        %v3222 = vld [vmem:[#allocation3 + $0x19c] sm:$0xff]
        %v3223 = vld [vmem:[#allocation3 + $0x1a4] sm:$0xff]
        %v3269 = vunpack.c.l.b16 %v3179
        %v3270 = vunpack.c.h.b16 %v3179
        %v3271 = vunpack.c.l.b16 %v3180
        %v3272 = vunpack.c.h.b16 %v3180
        %v3273 = vunpack.c.l.b16 %v3181
        %v3274 = vunpack.c.h.b16 %v3181
        %v3275 = vunpack.c.l.b16 %v3182
        %v3276 = vunpack.c.h.b16 %v3182
        %v3277 = vunpack.c.l.b16 %v3183
        %v3278 = vunpack.c.h.b16 %v3183
        %v3279 = vunpack.c.l.b16 %v3184
        %v3280 = vunpack.c.h.b16 %v3184
        %v3281 = vunpack.c.l.b16 %v3185
        %v3282 = vunpack.c.h.b16 %v3185
        %v3283 = vunpack.c.l.b16 %v3186
        %v3284 = vunpack.c.h.b16 %v3186
        %v3285 = vunpack.c.l.b16 %v3187
        %v3286 = vunpack.c.h.b16 %v3187
        %v3287 = vunpack.c.l.b16 %v3188
        %v3288 = vunpack.c.h.b16 %v3188
        %v3289 = vunpack.c.l.b16 %v3189
        %v3290 = vunpack.c.h.b16 %v3189
        %v3291 = vunpack.c.l.b16 %v3190
        %v3292 = vunpack.c.h.b16 %v3190
        %v3293 = vunpack.c.l.b16 %v3191
        %v3294 = vunpack.c.h.b16 %v3191
        %v3295 = vunpack.c.l.b16 %v3192
        %v3296 = vunpack.c.h.b16 %v3192
        %v3297 = vunpack.c.l.b16 %v3193
        %v3298 = vunpack.c.h.b16 %v3193
        %v3299 = vunpack.c.l.b16 %v3194
        %v3300 = vunpack.c.h.b16 %v3194
        %v3301 = vunpack.c.l.b16 %v3195
        %v3302 = vunpack.c.h.b16 %v3195
        %v3303 = vunpack.c.l.b16 %v3196
        %v3304 = vunpack.c.h.b16 %v3196
        %v3305 = vunpack.c.l.b16 %v3197
        %v3306 = vunpack.c.h.b16 %v3197
        %v3307 = vunpack.c.l.b16 %v3198
        %v3308 = vunpack.c.h.b16 %v3198
        %v3309 = vunpack.c.l.b16 %v3199
        %v3310 = vunpack.c.h.b16 %v3199
        %v3311 = vunpack.c.l.b16 %v3200
        %v3312 = vunpack.c.h.b16 %v3200
        %v3313 = vunpack.c.l.b16 %v3201
        %v3314 = vunpack.c.h.b16 %v3201
        %v3315 = vunpack.c.l.b16 %v3202
        %v3316 = vunpack.c.h.b16 %v3202
        %v3317 = vunpack.c.l.b16 %v3203
        %v3318 = vunpack.c.h.b16 %v3203
        %v3319 = vunpack.c.l.b16 %v3204
        %v3320 = vunpack.c.h.b16 %v3204
        %v3321 = vunpack.c.l.b16 %v3205
        %v3322 = vunpack.c.h.b16 %v3205
        %v3323 = vunpack.c.l.b16 %v3206
        %v3324 = vunpack.c.h.b16 %v3206
        %v3325 = vunpack.c.l.b16 %v3207
        %v3326 = vunpack.c.h.b16 %v3207
        %v3327 = vunpack.c.l.b16 %v3208
        %v3328 = vunpack.c.h.b16 %v3208
        %v3329 = vunpack.c.l.b16 %v3209
        %v3330 = vunpack.c.h.b16 %v3209
        %v3331 = vunpack.c.l.b16 %v3210
        %v3332 = vunpack.c.h.b16 %v3210
        %v3333 = vunpack.c.l.b16 %v3211
        %v3334 = vunpack.c.h.b16 %v3211
        %v3335 = vunpack.c.l.b16 %v3212
        %v3336 = vunpack.c.h.b16 %v3212
        %v3337 = vunpack.c.l.b16 %v3213
        %v3338 = vunpack.c.h.b16 %v3213
        %v3339 = vunpack.c.l.b16 %v3214
        %v3340 = vunpack.c.h.b16 %v3214
        %v3341 = vunpack.c.l.b16 %v3215
        %v3342 = vunpack.c.h.b16 %v3215
        %v3343 = vunpack.c.l.b16 %v3216
        %v3344 = vunpack.c.h.b16 %v3216
        %v3345 = vunpack.c.l.b16 %v3217
        %v3346 = vunpack.c.h.b16 %v3217
        %v3347 = vunpack.c.l.b16 %v3218
        %v3348 = vunpack.c.h.b16 %v3218
        %v3349 = vunpack.c.l.b16 %v3219
        %v3350 = vunpack.c.h.b16 %v3219
        %v3351 = vunpack.c.l.b16 %v3220
        %v3352 = vunpack.c.h.b16 %v3220
        %v3353 = vunpack.c.l.b16 %v3221
        %v3354 = vunpack.c.h.b16 %v3221
        %v3355 = vunpack.c.l.b16 %v3222
        %v3356 = vunpack.c.h.b16 %v3222
        %v3357 = vunpack.c.l.b16 %v3223
        %v3358 = vunpack.c.h.b16 %v3223
        %v3359 = vpack.c.b16 %v3279, %v3269
        %v3360 = vpack.c.b16 %v3280, %v3270
        %v3361 = vpack.c.b16 %v3281, %v3271
        %v3362 = vpack.c.b16 %v3282, %v3272
        %v3363 = vpack.c.b16 %v3283, %v3273
        %v3364 = vpack.c.b16 %v3284, %v3274
        %v3365 = vpack.c.b16 %v3285, %v3275
        %v3366 = vpack.c.b16 %v3286, %v3276
        %v3367 = vpack.c.b16 %v3287, %v3277
        %v3368 = vpack.c.b16 %v3288, %v3278
        %v3369 = vpack.c.b16 %v3299, %v3289
        %v3370 = vpack.c.b16 %v3300, %v3290
        %v3371 = vpack.c.b16 %v3301, %v3291
        %v3372 = vpack.c.b16 %v3302, %v3292
        %v3373 = vpack.c.b16 %v3303, %v3293
        %v3374 = vpack.c.b16 %v3304, %v3294
        %v3375 = vpack.c.b16 %v3305, %v3295
        %v3376 = vpack.c.b16 %v3306, %v3296
        %v3377 = vpack.c.b16 %v3307, %v3297
        %v3378 = vpack.c.b16 %v3308, %v3298
        %v3379 = vpack.c.b16 %v3319, %v3309
        %v3380 = vpack.c.b16 %v3320, %v3310
        %v3381 = vpack.c.b16 %v3321, %v3311
        %v3382 = vpack.c.b16 %v3322, %v3312
        %v3383 = vpack.c.b16 %v3323, %v3313
        %v3384 = vpack.c.b16 %v3324, %v3314
        %v3385 = vpack.c.b16 %v3325, %v3315
        %v3386 = vpack.c.b16 %v3326, %v3316
        %v3387 = vpack.c.b16 %v3327, %v3317
        %v3388 = vpack.c.b16 %v3328, %v3318
        %v3389 = vpack.c.b16 %v3339, %v3329
        %v3390 = vpack.c.b16 %v3340, %v3330
        %v3391 = vpack.c.b16 %v3341, %v3331
        %v3392 = vpack.c.b16 %v3342, %v3332
        %v3393 = vpack.c.b16 %v3343, %v3333
        %v3394 = vpack.c.b16 %v3344, %v3334
        %v3395 = vpack.c.b16 %v3345, %v3335
        %v3396 = vpack.c.b16 %v3346, %v3336
        %v3397 = vpack.c.b16 %v3347, %v3337
        %v3398 = vpack.c.b16 %v3348, %v3338
        %v3399 = vpack.c.b16 %v3349, %v3349
        %v3400 = vpack.c.b16 %v3350, %v3350
        %v3401 = vpack.c.b16 %v3351, %v3351
        %v3402 = vpack.c.b16 %v3352, %v3352
        %v3403 = vpack.c.b16 %v3353, %v3353
        %v3404 = vpack.c.b16 %v3354, %v3354
        %v3405 = vpack.c.b16 %v3355, %v3355
        %v3406 = vpack.c.b16 %v3356, %v3356
        %v3407 = vpack.c.b16 %v3357, %v3357
        %v3408 = vpack.c.b16 %v3358, %v3358
        %vm3449 = vcmask 588800
        %v3451 = vsel %vm3449, %v3178, 0
        %vm3453 = vcmask 1043456
        %v3455 = vsel %vm3453, %v3399, 0
        %v3458 = vsel %vm3453, %v3400, 0
        %v3461 = vsel %vm3453, %v3401, 0
        %v3464 = vsel %vm3453, %v3402, 0
        %v3467 = vsel %vm3453, %v3403, 0
        %v3470 = vsel %vm3453, %v3404, 0
        %v3473 = vsel %vm3453, %v3405, 0
        %v3476 = vsel %vm3453, %v3406, 0
        %v3479 = vsel %vm3453, %v3407, 0
        %v3482 = vsel %vm3453, %v3408, 0
        %3484 = vmatprep.subr.bf16.mxu0 %v3360
        %3485 = vmatpush1.bf16.msra.mxu0 %v3359
        %3486 = vmatprep.subr.bf16.mxu0 %v3370
        %3487 = vmatpush1.bf16.msra.mxu0 %v3369
        %3488 = vmatprep.subr.bf16.mxu0 %v3380
        %3489 = vmatpush1.bf16.msra.mxu0 %v3379
        %3490 = vmatprep.subr.bf16.mxu0 %v3390
        %3491 = vmatpush1.bf16.msra.mxu0 %v3389
        %3492 = vmatprep.subr.bf16.mxu0 %v3458
        %3493 = vmatpush1.bf16.msra.mxu0 %v3455
        %3494 = vmatprep.subr.bf16.mxu0 0
        %3495 = vmatpush1.bf16.msra.mxu0 0
        %3496 = vmatprep.subr.bf16.mxu0 0
        %3497 = vmatpush1.bf16.msra.mxu0 0
        %3498 = vmatprep.subr.bf16.mxu0 0
        %3499 = vmatpush1.bf16.msra.mxu0 0
        %3500 = vmatprep.subr.bf16.mxu0 0
        %3501 = vmatpush1.bf16.msra.mxu0 0
        %3502 = vmatprep.subr.bf16.mxu0 0
        %3503 = vmatpush1.bf16.msra.mxu0 0
        %3504 = vmatprep.subr.bf16.mxu0 0
        %3505 = vmatpush1.bf16.msra.mxu0 0
        %3506 = vmatprep.subr.bf16.mxu0 0
        %3507 = vmatpush1.bf16.msra.mxu0 0
        %3508 = vmatprep.subr.bf16.mxu0 0
        %3509 = vmatpush1.bf16.msra.mxu0 0
        %3510 = vmatprep.subr.bf16.mxu0 0
        %3511 = vmatpush1.bf16.msra.mxu0 0
        %3512 = vmatprep.subr.bf16.mxu0 0
        %3513 = vmatpush1.bf16.msra.mxu0 0
        %3514 = vmatprep.subr.bf16.mxu0 0
        %3515 = vmatpush1.bf16.msra.mxu0 0
        %3516 = vmatprep.mubr.bf16.mxu0 0
        %3517 = vmatmul.mubr.bf16.gmra.mrb[0].mxu0 %v3451
        %v3518 = vpop.f32.mrb[0].mxu0
        %v3519 = vadd.f32 0.0, %v3518
        %v3520 = vpop.f32.mrb[0].mxu0
        %v3521 = vadd.f32 0.0, %v3520
        %v3522 = vpop.f32.mrb[0].mxu0
        %v3523 = vpop.f32.mrb[0].mxu0
        %3524 = vdwg.mxu0
        %3525 = vmatprep.subr.bf16.mxu0 %v3362
        %3526 = vmatpush1.bf16.msra.mxu0 %v3361
        %3527 = vmatprep.subr.bf16.mxu0 %v3372
        %3528 = vmatpush1.bf16.msra.mxu0 %v3371
        %3529 = vmatprep.subr.bf16.mxu0 %v3382
        %3530 = vmatpush1.bf16.msra.mxu0 %v3381
        %3531 = vmatprep.subr.bf16.mxu0 %v3392
        %3532 = vmatpush1.bf16.msra.mxu0 %v3391
        %3533 = vmatprep.subr.bf16.mxu0 %v3464
        %3534 = vmatpush1.bf16.msra.mxu0 %v3461
        %3535 = vmatprep.subr.bf16.mxu0 0
        %3536 = vmatpush1.bf16.msra.mxu0 0
        %3537 = vmatprep.subr.bf16.mxu0 0
        %3538 = vmatpush1.bf16.msra.mxu0 0
        %3539 = vmatprep.subr.bf16.mxu0 0
        %3540 = vmatpush1.bf16.msra.mxu0 0
        %3541 = vmatprep.subr.bf16.mxu0 0
        %3542 = vmatpush1.bf16.msra.mxu0 0
        %3543 = vmatprep.subr.bf16.mxu0 0
        %3544 = vmatpush1.bf16.msra.mxu0 0
        %3545 = vmatprep.subr.bf16.mxu0 0
        %3546 = vmatpush1.bf16.msra.mxu0 0
        %3547 = vmatprep.subr.bf16.mxu0 0
        %3548 = vmatpush1.bf16.msra.mxu0 0
        %3549 = vmatprep.subr.bf16.mxu0 0
        %3550 = vmatpush1.bf16.msra.mxu0 0
        %3551 = vmatprep.subr.bf16.mxu0 0
        %3552 = vmatpush1.bf16.msra.mxu0 0
        %3553 = vmatprep.subr.bf16.mxu0 0
        %3554 = vmatpush1.bf16.msra.mxu0 0
        %3555 = vmatprep.subr.bf16.mxu0 0
        %3556 = vmatpush1.bf16.msra.mxu0 0
        %3557 = vmatprep.mubr.bf16.mxu0 0
        %3558 = vmatmul.mubr.bf16.gmra.mrb[0].mxu0 %v3451
        %v3559 = vpop.f32.mrb[0].mxu0
        %v3560 = vadd.f32 0.0, %v3559
        %v3561 = vpop.f32.mrb[0].mxu0
        %v3562 = vadd.f32 0.0, %v3561
        %v3563 = vpop.f32.mrb[0].mxu0
        %v3564 = vpop.f32.mrb[0].mxu0
        %3565 = vdwg.mxu0
        %3566 = vmatprep.subr.bf16.mxu0 %v3364
        %3567 = vmatpush1.bf16.msra.mxu0 %v3363
        %3568 = vmatprep.subr.bf16.mxu0 %v3374
        %3569 = vmatpush1.bf16.msra.mxu0 %v3373
        %3570 = vmatprep.subr.bf16.mxu0 %v3384
        %3571 = vmatpush1.bf16.msra.mxu0 %v3383
        %3572 = vmatprep.subr.bf16.mxu0 %v3394
        %3573 = vmatpush1.bf16.msra.mxu0 %v3393
        %3574 = vmatprep.subr.bf16.mxu0 %v3470
        %3575 = vmatpush1.bf16.msra.mxu0 %v3467
        %3576 = vmatprep.subr.bf16.mxu0 0
        %3577 = vmatpush1.bf16.msra.mxu0 0
        %3578 = vmatprep.subr.bf16.mxu0 0
        %3579 = vmatpush1.bf16.msra.mxu0 0
        %3580 = vmatprep.subr.bf16.mxu0 0
        %3581 = vmatpush1.bf16.msra.mxu0 0
        %3582 = vmatprep.subr.bf16.mxu0 0
        %3583 = vmatpush1.bf16.msra.mxu0 0
        %3584 = vmatprep.subr.bf16.mxu0 0
        %3585 = vmatpush1.bf16.msra.mxu0 0
        %3586 = vmatprep.subr.bf16.mxu0 0
        %3587 = vmatpush1.bf16.msra.mxu0 0
        %3588 = vmatprep.subr.bf16.mxu0 0
        %3589 = vmatpush1.bf16.msra.mxu0 0
        %3590 = vmatprep.subr.bf16.mxu0 0
        %3591 = vmatpush1.bf16.msra.mxu0 0
        %3592 = vmatprep.subr.bf16.mxu0 0
        %3593 = vmatpush1.bf16.msra.mxu0 0
        %3594 = vmatprep.subr.bf16.mxu0 0
        %3595 = vmatpush1.bf16.msra.mxu0 0
        %3596 = vmatprep.subr.bf16.mxu0 0
        %3597 = vmatpush1.bf16.msra.mxu0 0
        %3598 = vmatprep.mubr.bf16.mxu0 0
        %3599 = vmatmul.mubr.bf16.gmra.mrb[0].mxu0 %v3451
        %v3600 = vpop.f32.mrb[0].mxu0
        %v3601 = vadd.f32 0.0, %v3600
        %v3602 = vpop.f32.mrb[0].mxu0
        %v3603 = vadd.f32 0.0, %v3602
        %v3604 = vpop.f32.mrb[0].mxu0
        %v3605 = vpop.f32.mrb[0].mxu0
        %3606 = vdwg.mxu0
        %3607 = vmatprep.subr.bf16.mxu0 %v3366
        %3608 = vmatpush1.bf16.msra.mxu0 %v3365
        %3609 = vmatprep.subr.bf16.mxu0 %v3376
        %3610 = vmatpush1.bf16.msra.mxu0 %v3375
        %3611 = vmatprep.subr.bf16.mxu0 %v3386
        %3612 = vmatpush1.bf16.msra.mxu0 %v3385
        %3613 = vmatprep.subr.bf16.mxu0 %v3396
        %3614 = vmatpush1.bf16.msra.mxu0 %v3395
        %3615 = vmatprep.subr.bf16.mxu0 %v3476
        %3616 = vmatpush1.bf16.msra.mxu0 %v3473
        %3617 = vmatprep.subr.bf16.mxu0 0
        %3618 = vmatpush1.bf16.msra.mxu0 0
        %3619 = vmatprep.subr.bf16.mxu0 0
        %3620 = vmatpush1.bf16.msra.mxu0 0
        %3621 = vmatprep.subr.bf16.mxu0 0
        %3622 = vmatpush1.bf16.msra.mxu0 0
        %3623 = vmatprep.subr.bf16.mxu0 0
        %3624 = vmatpush1.bf16.msra.mxu0 0
        %3625 = vmatprep.subr.bf16.mxu0 0
        %3626 = vmatpush1.bf16.msra.mxu0 0
        %3627 = vmatprep.subr.bf16.mxu0 0
        %3628 = vmatpush1.bf16.msra.mxu0 0
        %3629 = vmatprep.subr.bf16.mxu0 0
        %3630 = vmatpush1.bf16.msra.mxu0 0
        %3631 = vmatprep.subr.bf16.mxu0 0
        %3632 = vmatpush1.bf16.msra.mxu0 0
        %3633 = vmatprep.subr.bf16.mxu0 0
        %3634 = vmatpush1.bf16.msra.mxu0 0
        %3635 = vmatprep.subr.bf16.mxu0 0
        %3636 = vmatpush1.bf16.msra.mxu0 0
        %3637 = vmatprep.subr.bf16.mxu0 0
        %3638 = vmatpush1.bf16.msra.mxu0 0
        %3639 = vmatprep.mubr.bf16.mxu0 0
        %3640 = vmatmul.mubr.bf16.gmra.mrb[0].mxu0 %v3451
        %v3641 = vpop.f32.mrb[0].mxu0
        %v3642 = vadd.f32 0.0, %v3641
        %v3643 = vpop.f32.mrb[0].mxu0
        %v3644 = vadd.f32 0.0, %v3643
        %v3645 = vpop.f32.mrb[0].mxu0
        %v3646 = vpop.f32.mrb[0].mxu0
        %3647 = vdwg.mxu0
        %3648 = vmatprep.subr.bf16.mxu0 %v3368
        %3649 = vmatpush1.bf16.msra.mxu0 %v3367
        %3650 = vmatprep.subr.bf16.mxu0 %v3378
        %3651 = vmatpush1.bf16.msra.mxu0 %v3377
        %3652 = vmatprep.subr.bf16.mxu0 %v3388
        %3653 = vmatpush1.bf16.msra.mxu0 %v3387
        %3654 = vmatprep.subr.bf16.mxu0 %v3398
        %3655 = vmatpush1.bf16.msra.mxu0 %v3397
        %3656 = vmatprep.subr.bf16.mxu0 %v3482
        %3657 = vmatpush1.bf16.msra.mxu0 %v3479
        %3658 = vmatprep.subr.bf16.mxu0 0
        %3659 = vmatpush1.bf16.msra.mxu0 0
        %3660 = vmatprep.subr.bf16.mxu0 0
        %3661 = vmatpush1.bf16.msra.mxu0 0
        %3662 = vmatprep.subr.bf16.mxu0 0
        %3663 = vmatpush1.bf16.msra.mxu0 0
        %3664 = vmatprep.subr.bf16.mxu0 0
        %3665 = vmatpush1.bf16.msra.mxu0 0
        %3666 = vmatprep.subr.bf16.mxu0 0
        %3667 = vmatpush1.bf16.msra.mxu0 0
        %3668 = vmatprep.subr.bf16.mxu0 0
        %3669 = vmatpush1.bf16.msra.mxu0 0
        %3670 = vmatprep.subr.bf16.mxu0 0
        %3671 = vmatpush1.bf16.msra.mxu0 0
        %3672 = vmatprep.subr.bf16.mxu0 0
        %3673 = vmatpush1.bf16.msra.mxu0 0
        %3674 = vmatprep.subr.bf16.mxu0 0
        %3675 = vmatpush1.bf16.msra.mxu0 0
        %3676 = vmatprep.subr.bf16.mxu0 0
        %3677 = vmatpush1.bf16.msra.mxu0 0
        %3678 = vmatprep.subr.bf16.mxu0 0
        %3679 = vmatpush1.bf16.msra.mxu0 0
        %3680 = vmatprep.mubr.bf16.mxu0 0
        %3681 = vmatmul.mubr.bf16.gmra.mrb[0].mxu0 %v3451
        %v3682 = vpop.f32.mrb[0].mxu0
        %v3683 = vadd.f32 0.0, %v3682
        %v3684 = vpop.f32.mrb[0].mxu0
        %v3685 = vadd.f32 0.0, %v3684
        %v3686 = vpop.f32.mrb[0].mxu0
        %v3687 = vpop.f32.mrb[0].mxu0
        %3688 = vdwg.mxu0
        %v3734 = vunpack.c.l.b16 %v3132
        %v3735 = vunpack.c.h.b16 %v3132
        %v3736 = vunpack.c.l.b16 %v3133
        %v3737 = vunpack.c.h.b16 %v3133
        %v3738 = vunpack.c.l.b16 %v3134
        %v3739 = vunpack.c.h.b16 %v3134
        %v3740 = vunpack.c.l.b16 %v3135
        %v3741 = vunpack.c.h.b16 %v3135
        %v3742 = vunpack.c.l.b16 %v3136
        %v3743 = vunpack.c.h.b16 %v3136
        %v3744 = vunpack.c.l.b16 %v3137
        %v3745 = vunpack.c.h.b16 %v3137
        %v3746 = vunpack.c.l.b16 %v3138
        %v3747 = vunpack.c.h.b16 %v3138
        %v3748 = vunpack.c.l.b16 %v3139
        %v3749 = vunpack.c.h.b16 %v3139
        %v3750 = vunpack.c.l.b16 %v3140
        %v3751 = vunpack.c.h.b16 %v3140
        %v3752 = vunpack.c.l.b16 %v3141
        %v3753 = vunpack.c.h.b16 %v3141
        %v3754 = vunpack.c.l.b16 %v3142
        %v3755 = vunpack.c.h.b16 %v3142
        %v3756 = vunpack.c.l.b16 %v3143
        %v3757 = vunpack.c.h.b16 %v3143
        %v3758 = vunpack.c.l.b16 %v3144
        %v3759 = vunpack.c.h.b16 %v3144
        %v3760 = vunpack.c.l.b16 %v3145
        %v3761 = vunpack.c.h.b16 %v3145
        %v3762 = vunpack.c.l.b16 %v3146
        %v3763 = vunpack.c.h.b16 %v3146
        %v3764 = vunpack.c.l.b16 %v3147
        %v3765 = vunpack.c.h.b16 %v3147
        %v3766 = vunpack.c.l.b16 %v3148
        %v3767 = vunpack.c.h.b16 %v3148
        %v3768 = vunpack.c.l.b16 %v3149
        %v3769 = vunpack.c.h.b16 %v3149
        %v3770 = vunpack.c.l.b16 %v3150
        %v3771 = vunpack.c.h.b16 %v3150
        %v3772 = vunpack.c.l.b16 %v3151
        %v3773 = vunpack.c.h.b16 %v3151
        %v3774 = vunpack.c.l.b16 %v3152
        %v3775 = vunpack.c.h.b16 %v3152
        %v3776 = vunpack.c.l.b16 %v3153
        %v3777 = vunpack.c.h.b16 %v3153
        %v3778 = vunpack.c.l.b16 %v3154
        %v3779 = vunpack.c.h.b16 %v3154
        %v3780 = vunpack.c.l.b16 %v3155
        %v3781 = vunpack.c.h.b16 %v3155
        %v3782 = vunpack.c.l.b16 %v3156
        %v3783 = vunpack.c.h.b16 %v3156
        %v3784 = vunpack.c.l.b16 %v3157
        %v3785 = vunpack.c.h.b16 %v3157
        %v3786 = vunpack.c.l.b16 %v3158
        %v3787 = vunpack.c.h.b16 %v3158
        %v3788 = vunpack.c.l.b16 %v3159
        %v3789 = vunpack.c.h.b16 %v3159
        %v3790 = vunpack.c.l.b16 %v3160
        %v3791 = vunpack.c.h.b16 %v3160
        %v3792 = vunpack.c.l.b16 %v3161
        %v3793 = vunpack.c.h.b16 %v3161
        %v3794 = vunpack.c.l.b16 %v3162
        %v3795 = vunpack.c.h.b16 %v3162
        %v3796 = vunpack.c.l.b16 %v3163
        %v3797 = vunpack.c.h.b16 %v3163
        %v3798 = vunpack.c.l.b16 %v3164
        %v3799 = vunpack.c.h.b16 %v3164
        %v3800 = vunpack.c.l.b16 %v3165
        %v3801 = vunpack.c.h.b16 %v3165
        %v3802 = vunpack.c.l.b16 %v3166
        %v3803 = vunpack.c.h.b16 %v3166
        %v3804 = vunpack.c.l.b16 %v3167
        %v3805 = vunpack.c.h.b16 %v3167
        %v3806 = vunpack.c.l.b16 %v3168
        %v3807 = vunpack.c.h.b16 %v3168
        %v3808 = vunpack.c.l.b16 %v3169
        %v3809 = vunpack.c.h.b16 %v3169
        %v3810 = vunpack.c.l.b16 %v3170
        %v3811 = vunpack.c.h.b16 %v3170
        %v3812 = vunpack.c.l.b16 %v3171
        %v3813 = vunpack.c.h.b16 %v3171
        %v3814 = vunpack.c.l.b16 %v3172
        %v3815 = vunpack.c.h.b16 %v3172
        %v3816 = vunpack.c.l.b16 %v3173
        %v3817 = vunpack.c.h.b16 %v3173
        %v3818 = vunpack.c.l.b16 %v3174
        %v3819 = vunpack.c.h.b16 %v3174
        %v3820 = vunpack.c.l.b16 %v3175
        %v3821 = vunpack.c.h.b16 %v3175
        %v3822 = vunpack.c.l.b16 %v3176
        %v3823 = vunpack.c.h.b16 %v3176
        %v3824 = vpack.c.b16 %v3744, %v3734
        %v3825 = vpack.c.b16 %v3745, %v3735
        %v3826 = vpack.c.b16 %v3746, %v3736
        %v3827 = vpack.c.b16 %v3747, %v3737
        %v3828 = vpack.c.b16 %v3748, %v3738
        %v3829 = vpack.c.b16 %v3749, %v3739
        %v3830 = vpack.c.b16 %v3750, %v3740
        %v3831 = vpack.c.b16 %v3751, %v3741
        %v3832 = vpack.c.b16 %v3752, %v3742
        %v3833 = vpack.c.b16 %v3753, %v3743
        %v3834 = vpack.c.b16 %v3764, %v3754
        %v3835 = vpack.c.b16 %v3765, %v3755
        %v3836 = vpack.c.b16 %v3766, %v3756
        %v3837 = vpack.c.b16 %v3767, %v3757
        %v3838 = vpack.c.b16 %v3768, %v3758
        %v3839 = vpack.c.b16 %v3769, %v3759
        %v3840 = vpack.c.b16 %v3770, %v3760
        %v3841 = vpack.c.b16 %v3771, %v3761
        %v3842 = vpack.c.b16 %v3772, %v3762
        %v3843 = vpack.c.b16 %v3773, %v3763
        %v3844 = vpack.c.b16 %v3784, %v3774
        %v3845 = vpack.c.b16 %v3785, %v3775
        %v3846 = vpack.c.b16 %v3786, %v3776
        %v3847 = vpack.c.b16 %v3787, %v3777
        %v3848 = vpack.c.b16 %v3788, %v3778
        %v3849 = vpack.c.b16 %v3789, %v3779
        %v3850 = vpack.c.b16 %v3790, %v3780
        %v3851 = vpack.c.b16 %v3791, %v3781
        %v3852 = vpack.c.b16 %v3792, %v3782
        %v3853 = vpack.c.b16 %v3793, %v3783
        %v3854 = vpack.c.b16 %v3804, %v3794
        %v3855 = vpack.c.b16 %v3805, %v3795
        %v3856 = vpack.c.b16 %v3806, %v3796
        %v3857 = vpack.c.b16 %v3807, %v3797
        %v3858 = vpack.c.b16 %v3808, %v3798
        %v3859 = vpack.c.b16 %v3809, %v3799
        %v3860 = vpack.c.b16 %v3810, %v3800
        %v3861 = vpack.c.b16 %v3811, %v3801
        %v3862 = vpack.c.b16 %v3812, %v3802
        %v3863 = vpack.c.b16 %v3813, %v3803
        %v3864 = vpack.c.b16 %v3814, %v3814
        %v3865 = vpack.c.b16 %v3815, %v3815
        %v3866 = vpack.c.b16 %v3816, %v3816
        %v3867 = vpack.c.b16 %v3817, %v3817
        %v3868 = vpack.c.b16 %v3818, %v3818
        %v3869 = vpack.c.b16 %v3819, %v3819
        %v3870 = vpack.c.b16 %v3820, %v3820
        %v3871 = vpack.c.b16 %v3821, %v3821
        %v3872 = vpack.c.b16 %v3822, %v3822
        %v3873 = vpack.c.b16 %v3823, %v3823
        %v3915 = vsel %vm3449, %v3131, 0
        %v3918 = vsel %vm3453, %v3864, 0
        %v3921 = vsel %vm3453, %v3865, 0
        %v3924 = vsel %vm3453, %v3866, 0
        %v3927 = vsel %vm3453, %v3867, 0
        %v3930 = vsel %vm3453, %v3868, 0
        %v3933 = vsel %vm3453, %v3869, 0
        %v3936 = vsel %vm3453, %v3870, 0
        %v3939 = vsel %vm3453, %v3871, 0
        %v3942 = vsel %vm3453, %v3872, 0
        %v3945 = vsel %vm3453, %v3873, 0
        %3947 = vmatprep.subr.bf16.mxu0 %v3825
        %3948 = vmatpush1.bf16.msra.mxu0 %v3824
        %3949 = vmatprep.subr.bf16.mxu0 %v3835
        %3950 = vmatpush1.bf16.msra.mxu0 %v3834
        %3951 = vmatprep.subr.bf16.mxu0 %v3845
        %3952 = vmatpush1.bf16.msra.mxu0 %v3844
        %3953 = vmatprep.subr.bf16.mxu0 %v3855
        %3954 = vmatpush1.bf16.msra.mxu0 %v3854
        %3955 = vmatprep.subr.bf16.mxu0 %v3921
        %3956 = vmatpush1.bf16.msra.mxu0 %v3918
        %3957 = vmatprep.subr.bf16.mxu0 0
        %3958 = vmatpush1.bf16.msra.mxu0 0
        %3959 = vmatprep.subr.bf16.mxu0 0
        %3960 = vmatpush1.bf16.msra.mxu0 0
        %3961 = vmatprep.subr.bf16.mxu0 0
        %3962 = vmatpush1.bf16.msra.mxu0 0
        %3963 = vmatprep.subr.bf16.mxu0 0
        %3964 = vmatpush1.bf16.msra.mxu0 0
        %3965 = vmatprep.subr.bf16.mxu0 0
        %3966 = vmatpush1.bf16.msra.mxu0 0
        %3967 = vmatprep.subr.bf16.mxu0 0
        %3968 = vmatpush1.bf16.msra.mxu0 0
        %3969 = vmatprep.subr.bf16.mxu0 0
        %3970 = vmatpush1.bf16.msra.mxu0 0
        %3971 = vmatprep.subr.bf16.mxu0 0
        %3972 = vmatpush1.bf16.msra.mxu0 0
        %3973 = vmatprep.subr.bf16.mxu0 0
        %3974 = vmatpush1.bf16.msra.mxu0 0
        %3975 = vmatprep.subr.bf16.mxu0 0
        %3976 = vmatpush1.bf16.msra.mxu0 0
        %3977 = vmatprep.subr.bf16.mxu0 0
        %3978 = vmatpush1.bf16.msra.mxu0 0
        %3979 = vmatprep.mubr.bf16.mxu0 0
        %3980 = vmatmul.mubr.bf16.gmra.mrb[0].mxu0 %v3915
        %v3981 = vpop.f32.mrb[0].mxu0
        %v3982 = vadd.f32 %v3519, %v3981
        %v3983 = vpop.f32.mrb[0].mxu0
        %v3984 = vadd.f32 %v3521, %v3983
        %v3985 = vpop.f32.mrb[0].mxu0
        %v3986 = vpop.f32.mrb[0].mxu0
        %3987 = vdwg.mxu0
        %3988 = vmatprep.subr.bf16.mxu0 %v3827
        %3989 = vmatpush1.bf16.msra.mxu0 %v3826
        %3990 = vmatprep.subr.bf16.mxu0 %v3837
        %3991 = vmatpush1.bf16.msra.mxu0 %v3836
        %3992 = vmatprep.subr.bf16.mxu0 %v3847
        %3993 = vmatpush1.bf16.msra.mxu0 %v3846
        %3994 = vmatprep.subr.bf16.mxu0 %v3857
        %3995 = vmatpush1.bf16.msra.mxu0 %v3856
        %3996 = vmatprep.subr.bf16.mxu0 %v3927
        %3997 = vmatpush1.bf16.msra.mxu0 %v3924
        %3998 = vmatprep.subr.bf16.mxu0 0
        %3999 = vmatpush1.bf16.msra.mxu0 0
        %4000 = vmatprep.subr.bf16.mxu0 0
        %4001 = vmatpush1.bf16.msra.mxu0 0
        %4002 = vmatprep.subr.bf16.mxu0 0
        %4003 = vmatpush1.bf16.msra.mxu0 0
        %4004 = vmatprep.subr.bf16.mxu0 0
        %4005 = vmatpush1.bf16.msra.mxu0 0
        %4006 = vmatprep.subr.bf16.mxu0 0
        %4007 = vmatpush1.bf16.msra.mxu0 0
        %4008 = vmatprep.subr.bf16.mxu0 0
        %4009 = vmatpush1.bf16.msra.mxu0 0
        %4010 = vmatprep.subr.bf16.mxu0 0
        %4011 = vmatpush1.bf16.msra.mxu0 0
        %4012 = vmatprep.subr.bf16.mxu0 0
        %4013 = vmatpush1.bf16.msra.mxu0 0
        %4014 = vmatprep.subr.bf16.mxu0 0
        %4015 = vmatpush1.bf16.msra.mxu0 0
        %4016 = vmatprep.subr.bf16.mxu0 0
        %4017 = vmatpush1.bf16.msra.mxu0 0
        %4018 = vmatprep.subr.bf16.mxu0 0
        %4019 = vmatpush1.bf16.msra.mxu0 0
        %4020 = vmatprep.mubr.bf16.mxu0 0
        %4021 = vmatmul.mubr.bf16.gmra.mrb[0].mxu0 %v3915
        %v4022 = vpop.f32.mrb[0].mxu0
        %v4023 = vadd.f32 %v3560, %v4022
        %v4024 = vpop.f32.mrb[0].mxu0
        %v4025 = vadd.f32 %v3562, %v4024
        %v4026 = vpop.f32.mrb[0].mxu0
        %v4027 = vpop.f32.mrb[0].mxu0
        %4028 = vdwg.mxu0
        %4029 = vmatprep.subr.bf16.mxu0 %v3829
        %4030 = vmatpush1.bf16.msra.mxu0 %v3828
        %4031 = vmatprep.subr.bf16.mxu0 %v3839
        %4032 = vmatpush1.bf16.msra.mxu0 %v3838
        %4033 = vmatprep.subr.bf16.mxu0 %v3849
        %4034 = vmatpush1.bf16.msra.mxu0 %v3848
        %4035 = vmatprep.subr.bf16.mxu0 %v3859
        %4036 = vmatpush1.bf16.msra.mxu0 %v3858
        %4037 = vmatprep.subr.bf16.mxu0 %v3933
        %4038 = vmatpush1.bf16.msra.mxu0 %v3930
        %4039 = vmatprep.subr.bf16.mxu0 0
        %4040 = vmatpush1.bf16.msra.mxu0 0
        %4041 = vmatprep.subr.bf16.mxu0 0
        %4042 = vmatpush1.bf16.msra.mxu0 0
        %4043 = vmatprep.subr.bf16.mxu0 0
        %4044 = vmatpush1.bf16.msra.mxu0 0
        %4045 = vmatprep.subr.bf16.mxu0 0
        %4046 = vmatpush1.bf16.msra.mxu0 0
        %4047 = vmatprep.subr.bf16.mxu0 0
        %4048 = vmatpush1.bf16.msra.mxu0 0
        %4049 = vmatprep.subr.bf16.mxu0 0
        %4050 = vmatpush1.bf16.msra.mxu0 0
        %4051 = vmatprep.subr.bf16.mxu0 0
        %4052 = vmatpush1.bf16.msra.mxu0 0
        %4053 = vmatprep.subr.bf16.mxu0 0
        %4054 = vmatpush1.bf16.msra.mxu0 0
        %4055 = vmatprep.subr.bf16.mxu0 0
        %4056 = vmatpush1.bf16.msra.mxu0 0
        %4057 = vmatprep.subr.bf16.mxu0 0
        %4058 = vmatpush1.bf16.msra.mxu0 0
        %4059 = vmatprep.subr.bf16.mxu0 0
        %4060 = vmatpush1.bf16.msra.mxu0 0
        %4061 = vmatprep.mubr.bf16.mxu0 0
        %4062 = vmatmul.mubr.bf16.gmra.mrb[0].mxu0 %v3915
        %v4063 = vpop.f32.mrb[0].mxu0
        %v4064 = vadd.f32 %v3601, %v4063
        %v4065 = vpop.f32.mrb[0].mxu0
        %v4066 = vadd.f32 %v3603, %v4065
        %v4067 = vpop.f32.mrb[0].mxu0
        %v4068 = vpop.f32.mrb[0].mxu0
        %4069 = vdwg.mxu0
        %4070 = vmatprep.subr.bf16.mxu0 %v3831
        %4071 = vmatpush1.bf16.msra.mxu0 %v3830
        %4072 = vmatprep.subr.bf16.mxu0 %v3841
        %4073 = vmatpush1.bf16.msra.mxu0 %v3840
        %4074 = vmatprep.subr.bf16.mxu0 %v3851
        %4075 = vmatpush1.bf16.msra.mxu0 %v3850
        %4076 = vmatprep.subr.bf16.mxu0 %v3861
        %4077 = vmatpush1.bf16.msra.mxu0 %v3860
        %4078 = vmatprep.subr.bf16.mxu0 %v3939
        %4079 = vmatpush1.bf16.msra.mxu0 %v3936
        %4080 = vmatprep.subr.bf16.mxu0 0
        %4081 = vmatpush1.bf16.msra.mxu0 0
        %4082 = vmatprep.subr.bf16.mxu0 0
        %4083 = vmatpush1.bf16.msra.mxu0 0
        %4084 = vmatprep.subr.bf16.mxu0 0
        %4085 = vmatpush1.bf16.msra.mxu0 0
        %4086 = vmatprep.subr.bf16.mxu0 0
        %4087 = vmatpush1.bf16.msra.mxu0 0
        %4088 = vmatprep.subr.bf16.mxu0 0
        %4089 = vmatpush1.bf16.msra.mxu0 0
        %4090 = vmatprep.subr.bf16.mxu0 0
        %4091 = vmatpush1.bf16.msra.mxu0 0
        %4092 = vmatprep.subr.bf16.mxu0 0
        %4093 = vmatpush1.bf16.msra.mxu0 0
        %4094 = vmatprep.subr.bf16.mxu0 0
        %4095 = vmatpush1.bf16.msra.mxu0 0
        %4096 = vmatprep.subr.bf16.mxu0 0
        %4097 = vmatpush1.bf16.msra.mxu0 0
        %4098 = vmatprep.subr.bf16.mxu0 0
        %4099 = vmatpush1.bf16.msra.mxu0 0
        %4100 = vmatprep.subr.bf16.mxu0 0
        %4101 = vmatpush1.bf16.msra.mxu0 0
        %4102 = vmatprep.mubr.bf16.mxu0 0
        %4103 = vmatmul.mubr.bf16.gmra.mrb[0].mxu0 %v3915
        %v4104 = vpop.f32.mrb[0].mxu0
        %v4105 = vadd.f32 %v3642, %v4104
        %v4106 = vpop.f32.mrb[0].mxu0
        %v4107 = vadd.f32 %v3644, %v4106
        %v4108 = vpop.f32.mrb[0].mxu0
        %v4109 = vpop.f32.mrb[0].mxu0
        %4110 = vdwg.mxu0
        %4111 = vmatprep.subr.bf16.mxu0 %v3833
        %4112 = vmatpush1.bf16.msra.mxu0 %v3832
        %4113 = vmatprep.subr.bf16.mxu0 %v3843
        %4114 = vmatpush1.bf16.msra.mxu0 %v3842
        %4115 = vmatprep.subr.bf16.mxu0 %v3853
        %4116 = vmatpush1.bf16.msra.mxu0 %v3852
        %4117 = vmatprep.subr.bf16.mxu0 %v3863
        %4118 = vmatpush1.bf16.msra.mxu0 %v3862
        %4119 = vmatprep.subr.bf16.mxu0 %v3945
        %4120 = vmatpush1.bf16.msra.mxu0 %v3942
        %4121 = vmatprep.subr.bf16.mxu0 0
        %4122 = vmatpush1.bf16.msra.mxu0 0
        %4123 = vmatprep.subr.bf16.mxu0 0
        %4124 = vmatpush1.bf16.msra.mxu0 0
        %4125 = vmatprep.subr.bf16.mxu0 0
        %4126 = vmatpush1.bf16.msra.mxu0 0
        %4127 = vmatprep.subr.bf16.mxu0 0
        %4128 = vmatpush1.bf16.msra.mxu0 0
        %4129 = vmatprep.subr.bf16.mxu0 0
        %4130 = vmatpush1.bf16.msra.mxu0 0
        %4131 = vmatprep.subr.bf16.mxu0 0
        %4132 = vmatpush1.bf16.msra.mxu0 0
        %4133 = vmatprep.subr.bf16.mxu0 0
        %4134 = vmatpush1.bf16.msra.mxu0 0
        %4135 = vmatprep.subr.bf16.mxu0 0
        %4136 = vmatpush1.bf16.msra.mxu0 0
        %4137 = vmatprep.subr.bf16.mxu0 0
        %4138 = vmatpush1.bf16.msra.mxu0 0
        %4139 = vmatprep.subr.bf16.mxu0 0
        %4140 = vmatpush1.bf16.msra.mxu0 0
        %4141 = vmatprep.subr.bf16.mxu0 0
        %4142 = vmatpush1.bf16.msra.mxu0 0
        %4143 = vmatprep.mubr.bf16.mxu0 0
        %4144 = vmatmul.mubr.bf16.gmra.mrb[0].mxu0 %v3915
        %v4145 = vpop.f32.mrb[0].mxu0
        %v4146 = vadd.f32 %v3683, %v4145
        %v4147 = vpop.f32.mrb[0].mxu0
        %v4148 = vadd.f32 %v3685, %v4147
        %v4149 = vpop.f32.mrb[0].mxu0
        %v4150 = vpop.f32.mrb[0].mxu0
        %4151 = vdwg.mxu0
        %s4152 = scalar_lea.vmem [#allocation9], 8
        %v4153 = vld [vmem:[%s4152] sm:$0xf]
        %v4154 = vld [vmem:[#allocation3 + $0x8] sm:$0xff]
        %v4155 = vld [vmem:[#allocation3 + $0x10] sm:$0xff]
        %v4156 = vld [vmem:[#allocation3 + $0x18] sm:$0xff]
        %v4157 = vld [vmem:[#allocation3 + $0x20] sm:$0xff]
        %v4158 = vld [vmem:[#allocation3 + $0x28] sm:$0xff]
        %v4159 = vld [vmem:[#allocation3 + $0x38] sm:$0xff]
        %v4160 = vld [vmem:[#allocation3 + $0x40] sm:$0xff]
        %v4161 = vld [vmem:[#allocation3 + $0x48] sm:$0xff]
        %v4162 = vld [vmem:[#allocation3 + $0x50] sm:$0xff]
        %v4163 = vld [vmem:[#allocation3 + $0x58] sm:$0xff]
        %v4164 = vld [vmem:[#allocation3 + $0x68] sm:$0xff]
        %v4165 = vld [vmem:[#allocation3 + $0x70] sm:$0xff]
        %v4166 = vld [vmem:[#allocation3 + $0x78] sm:$0xff]
        %v4167 = vld [vmem:[#allocation3 + $0x80] sm:$0xff]
        %v4168 = vld [vmem:[#allocation3 + $0x88] sm:$0xff]
        %v4169 = vld [vmem:[#allocation3 + $0x98] sm:$0xff]
        %v4170 = vld [vmem:[#allocation3 + $0xa0] sm:$0xff]
        %v4171 = vld [vmem:[#allocation3 + $0xa8] sm:$0xff]
        %v4172 = vld [vmem:[#allocation3 + $0xb0] sm:$0xff]
        %v4173 = vld [vmem:[#allocation3 + $0xb8] sm:$0xff]
        %v4174 = vld [vmem:[#allocation3 + $0xc8] sm:$0xff]
        %v4175 = vld [vmem:[#allocation3 + $0xd0] sm:$0xff]
        %v4176 = vld [vmem:[#allocation3 + $0xd8] sm:$0xff]
        %v4177 = vld [vmem:[#allocation3 + $0xe0] sm:$0xff]
        %v4178 = vld [vmem:[#allocation3 + $0xe8] sm:$0xff]
        %v4179 = vld [vmem:[#allocation3 + $0xf8] sm:$0xff]
        %v4180 = vld [vmem:[#allocation3 + $0x100] sm:$0xff]
        %v4181 = vld [vmem:[#allocation3 + $0x108] sm:$0xff]
        %v4182 = vld [vmem:[#allocation3 + $0x110] sm:$0xff]
        %v4183 = vld [vmem:[#allocation3 + $0x118] sm:$0xff]
        %v4184 = vld [vmem:[#allocation3 + $0x128] sm:$0xff]
        %v4185 = vld [vmem:[#allocation3 + $0x130] sm:$0xff]
        %v4186 = vld [vmem:[#allocation3 + $0x138] sm:$0xff]
        %v4187 = vld [vmem:[#allocation3 + $0x140] sm:$0xff]
        %v4188 = vld [vmem:[#allocation3 + $0x148] sm:$0xff]
        %v4189 = vld [vmem:[#allocation3 + $0x158] sm:$0xff]
        %v4190 = vld [vmem:[#allocation3 + $0x160] sm:$0xff]
        %v4191 = vld [vmem:[#allocation3 + $0x168] sm:$0xff]
        %v4192 = vld [vmem:[#allocation3 + $0x170] sm:$0xff]
        %v4193 = vld [vmem:[#allocation3 + $0x178] sm:$0xff]
        %v4194 = vld [vmem:[#allocation3 + $0x188] sm:$0xff]
        %v4195 = vld [vmem:[#allocation3 + $0x190] sm:$0xff]
        %v4196 = vld [vmem:[#allocation3 + $0x198] sm:$0xff]
        %v4197 = vld [vmem:[#allocation3 + $0x1a0] sm:$0xff]
        %v4198 = vld [vmem:[#allocation3 + $0x1a8] sm:$0xff]
        %v4244 = vunpack.c.l.b16 %v4154
        %v4245 = vunpack.c.h.b16 %v4154
        %v4246 = vunpack.c.l.b16 %v4155
        %v4247 = vunpack.c.h.b16 %v4155
        %v4248 = vunpack.c.l.b16 %v4156
        %v4249 = vunpack.c.h.b16 %v4156
        %v4250 = vunpack.c.l.b16 %v4157
        %v4251 = vunpack.c.h.b16 %v4157
        %v4252 = vunpack.c.l.b16 %v4158
        %v4253 = vunpack.c.h.b16 %v4158
        %v4254 = vunpack.c.l.b16 %v4159
        %v4255 = vunpack.c.h.b16 %v4159
        %v4256 = vunpack.c.l.b16 %v4160
        %v4257 = vunpack.c.h.b16 %v4160
        %v4258 = vunpack.c.l.b16 %v4161
        %v4259 = vunpack.c.h.b16 %v4161
        %v4260 = vunpack.c.l.b16 %v4162
        %v4261 = vunpack.c.h.b16 %v4162
        %v4262 = vunpack.c.l.b16 %v4163
        %v4263 = vunpack.c.h.b16 %v4163
        %v4264 = vunpack.c.l.b16 %v4164
        %v4265 = vunpack.c.h.b16 %v4164
        %v4266 = vunpack.c.l.b16 %v4165
        %v4267 = vunpack.c.h.b16 %v4165
        %v4268 = vunpack.c.l.b16 %v4166
        %v4269 = vunpack.c.h.b16 %v4166
        %v4270 = vunpack.c.l.b16 %v4167
        %v4271 = vunpack.c.h.b16 %v4167
        %v4272 = vunpack.c.l.b16 %v4168
        %v4273 = vunpack.c.h.b16 %v4168
        %v4274 = vunpack.c.l.b16 %v4169
        %v4275 = vunpack.c.h.b16 %v4169
        %v4276 = vunpack.c.l.b16 %v4170
        %v4277 = vunpack.c.h.b16 %v4170
        %v4278 = vunpack.c.l.b16 %v4171
        %v4279 = vunpack.c.h.b16 %v4171
        %v4280 = vunpack.c.l.b16 %v4172
        %v4281 = vunpack.c.h.b16 %v4172
        %v4282 = vunpack.c.l.b16 %v4173
        %v4283 = vunpack.c.h.b16 %v4173
        %v4284 = vunpack.c.l.b16 %v4174
        %v4285 = vunpack.c.h.b16 %v4174
        %v4286 = vunpack.c.l.b16 %v4175
        %v4287 = vunpack.c.h.b16 %v4175
        %v4288 = vunpack.c.l.b16 %v4176
        %v4289 = vunpack.c.h.b16 %v4176
        %v4290 = vunpack.c.l.b16 %v4177
        %v4291 = vunpack.c.h.b16 %v4177
        %v4292 = vunpack.c.l.b16 %v4178
        %v4293 = vunpack.c.h.b16 %v4178
        %v4294 = vunpack.c.l.b16 %v4179
        %v4295 = vunpack.c.h.b16 %v4179
        %v4296 = vunpack.c.l.b16 %v4180
        %v4297 = vunpack.c.h.b16 %v4180
        %v4298 = vunpack.c.l.b16 %v4181
        %v4299 = vunpack.c.h.b16 %v4181
        %v4300 = vunpack.c.l.b16 %v4182
        %v4301 = vunpack.c.h.b16 %v4182
        %v4302 = vunpack.c.l.b16 %v4183
        %v4303 = vunpack.c.h.b16 %v4183
        %v4304 = vunpack.c.l.b16 %v4184
        %v4305 = vunpack.c.h.b16 %v4184
        %v4306 = vunpack.c.l.b16 %v4185
        %v4307 = vunpack.c.h.b16 %v4185
        %v4308 = vunpack.c.l.b16 %v4186
        %v4309 = vunpack.c.h.b16 %v4186
        %v4310 = vunpack.c.l.b16 %v4187
        %v4311 = vunpack.c.h.b16 %v4187
        %v4312 = vunpack.c.l.b16 %v4188
        %v4313 = vunpack.c.h.b16 %v4188
        %v4314 = vunpack.c.l.b16 %v4189
        %v4315 = vunpack.c.h.b16 %v4189
        %v4316 = vunpack.c.l.b16 %v4190
        %v4317 = vunpack.c.h.b16 %v4190
        %v4318 = vunpack.c.l.b16 %v4191
        %v4319 = vunpack.c.h.b16 %v4191
        %v4320 = vunpack.c.l.b16 %v4192
        %v4321 = vunpack.c.h.b16 %v4192
        %v4322 = vunpack.c.l.b16 %v4193
        %v4323 = vunpack.c.h.b16 %v4193
        %v4324 = vunpack.c.l.b16 %v4194
        %v4325 = vunpack.c.h.b16 %v4194
        %v4326 = vunpack.c.l.b16 %v4195
        %v4327 = vunpack.c.h.b16 %v4195
        %v4328 = vunpack.c.l.b16 %v4196
        %v4329 = vunpack.c.h.b16 %v4196
        %v4330 = vunpack.c.l.b16 %v4197
        %v4331 = vunpack.c.h.b16 %v4197
        %v4332 = vunpack.c.l.b16 %v4198
        %v4333 = vunpack.c.h.b16 %v4198
        %v4334 = vpack.c.b16 %v4254, %v4244
        %v4335 = vpack.c.b16 %v4255, %v4245
        %v4336 = vpack.c.b16 %v4256, %v4246
        %v4337 = vpack.c.b16 %v4257, %v4247
        %v4338 = vpack.c.b16 %v4258, %v4248
        %v4339 = vpack.c.b16 %v4259, %v4249
        %v4340 = vpack.c.b16 %v4260, %v4250
        %v4341 = vpack.c.b16 %v4261, %v4251
        %v4342 = vpack.c.b16 %v4262, %v4252
        %v4343 = vpack.c.b16 %v4263, %v4253
        %v4344 = vpack.c.b16 %v4274, %v4264
        %v4345 = vpack.c.b16 %v4275, %v4265
        %v4346 = vpack.c.b16 %v4276, %v4266
        %v4347 = vpack.c.b16 %v4277, %v4267
        %v4348 = vpack.c.b16 %v4278, %v4268
        %v4349 = vpack.c.b16 %v4279, %v4269
        %v4350 = vpack.c.b16 %v4280, %v4270
        %v4351 = vpack.c.b16 %v4281, %v4271
        %v4352 = vpack.c.b16 %v4282, %v4272
        %v4353 = vpack.c.b16 %v4283, %v4273
        %v4354 = vpack.c.b16 %v4294, %v4284
        %v4355 = vpack.c.b16 %v4295, %v4285
        %v4356 = vpack.c.b16 %v4296, %v4286
        %v4357 = vpack.c.b16 %v4297, %v4287
        %v4358 = vpack.c.b16 %v4298, %v4288
        %v4359 = vpack.c.b16 %v4299, %v4289
        %v4360 = vpack.c.b16 %v4300, %v4290
        %v4361 = vpack.c.b16 %v4301, %v4291
        %v4362 = vpack.c.b16 %v4302, %v4292
        %v4363 = vpack.c.b16 %v4303, %v4293
        %v4364 = vpack.c.b16 %v4314, %v4304
        %v4365 = vpack.c.b16 %v4315, %v4305
        %v4366 = vpack.c.b16 %v4316, %v4306
        %v4367 = vpack.c.b16 %v4317, %v4307
        %v4368 = vpack.c.b16 %v4318, %v4308
        %v4369 = vpack.c.b16 %v4319, %v4309
        %v4370 = vpack.c.b16 %v4320, %v4310
        %v4371 = vpack.c.b16 %v4321, %v4311
        %v4372 = vpack.c.b16 %v4322, %v4312
        %v4373 = vpack.c.b16 %v4323, %v4313
        %v4374 = vpack.c.b16 %v4324, %v4324
        %v4375 = vpack.c.b16 %v4325, %v4325
        %v4376 = vpack.c.b16 %v4326, %v4326
        %v4377 = vpack.c.b16 %v4327, %v4327
        %v4378 = vpack.c.b16 %v4328, %v4328
        %v4379 = vpack.c.b16 %v4329, %v4329
        %v4380 = vpack.c.b16 %v4330, %v4330
        %v4381 = vpack.c.b16 %v4331, %v4331
        %v4382 = vpack.c.b16 %v4332, %v4332
        %v4383 = vpack.c.b16 %v4333, %v4333
        %v4425 = vsel %vm3449, %v4153, 0
        %v4428 = vsel %vm3453, %v4374, 0
        %v4431 = vsel %vm3453, %v4375, 0
        %v4434 = vsel %vm3453, %v4376, 0
        %v4437 = vsel %vm3453, %v4377, 0
        %v4440 = vsel %vm3453, %v4378, 0
        %v4443 = vsel %vm3453, %v4379, 0
        %v4446 = vsel %vm3453, %v4380, 0
        %v4449 = vsel %vm3453, %v4381, 0
        %v4452 = vsel %vm3453, %v4382, 0
        %v4455 = vsel %vm3453, %v4383, 0
        %4457 = vmatprep.subr.bf16.mxu0 %v4335
        %4458 = vmatpush1.bf16.msra.mxu0 %v4334
        %4459 = vmatprep.subr.bf16.mxu0 %v4345
        %4460 = vmatpush1.bf16.msra.mxu0 %v4344
        %4461 = vmatprep.subr.bf16.mxu0 %v4355
        %4462 = vmatpush1.bf16.msra.mxu0 %v4354
        %4463 = vmatprep.subr.bf16.mxu0 %v4365
        %4464 = vmatpush1.bf16.msra.mxu0 %v4364
        %4465 = vmatprep.subr.bf16.mxu0 %v4431
        %4466 = vmatpush1.bf16.msra.mxu0 %v4428
        %4467 = vmatprep.subr.bf16.mxu0 0
        %4468 = vmatpush1.bf16.msra.mxu0 0
        %4469 = vmatprep.subr.bf16.mxu0 0
        %4470 = vmatpush1.bf16.msra.mxu0 0
        %4471 = vmatprep.subr.bf16.mxu0 0
        %4472 = vmatpush1.bf16.msra.mxu0 0
        %4473 = vmatprep.subr.bf16.mxu0 0
        %4474 = vmatpush1.bf16.msra.mxu0 0
        %4475 = vmatprep.subr.bf16.mxu0 0
        %4476 = vmatpush1.bf16.msra.mxu0 0
        %4477 = vmatprep.subr.bf16.mxu0 0
        %4478 = vmatpush1.bf16.msra.mxu0 0
        %4479 = vmatprep.subr.bf16.mxu0 0
        %4480 = vmatpush1.bf16.msra.mxu0 0
        %4481 = vmatprep.subr.bf16.mxu0 0
        %4482 = vmatpush1.bf16.msra.mxu0 0
        %4483 = vmatprep.subr.bf16.mxu0 0
        %4484 = vmatpush1.bf16.msra.mxu0 0
        %4485 = vmatprep.subr.bf16.mxu0 0
        %4486 = vmatpush1.bf16.msra.mxu0 0
        %4487 = vmatprep.subr.bf16.mxu0 0
        %4488 = vmatpush1.bf16.msra.mxu0 0
        %4489 = vmatprep.mubr.bf16.mxu0 0
        %4490 = vmatmul.mubr.bf16.gmra.mrb[0].mxu0 %v4425
        %v4491 = vpop.f32.mrb[0].mxu0
        %v4492 = vadd.f32 0.0, %v4491
        %v4493 = vpop.f32.mrb[0].mxu0
        %v4494 = vadd.f32 0.0, %v4493
        %v4495 = vpop.f32.mrb[0].mxu0
        %v4496 = vpop.f32.mrb[0].mxu0
        %4497 = vdwg.mxu0
        %4498 = vmatprep.subr.bf16.mxu0 %v4337
        %4499 = vmatpush1.bf16.msra.mxu0 %v4336
        %4500 = vmatprep.subr.bf16.mxu0 %v4347
        %4501 = vmatpush1.bf16.msra.mxu0 %v4346
        %4502 = vmatprep.subr.bf16.mxu0 %v4357
        %4503 = vmatpush1.bf16.msra.mxu0 %v4356
        %4504 = vmatprep.subr.bf16.mxu0 %v4367
        %4505 = vmatpush1.bf16.msra.mxu0 %v4366
        %4506 = vmatprep.subr.bf16.mxu0 %v4437
        %4507 = vmatpush1.bf16.msra.mxu0 %v4434
        %4508 = vmatprep.subr.bf16.mxu0 0
        %4509 = vmatpush1.bf16.msra.mxu0 0
        %4510 = vmatprep.subr.bf16.mxu0 0
        %4511 = vmatpush1.bf16.msra.mxu0 0
        %4512 = vmatprep.subr.bf16.mxu0 0
        %4513 = vmatpush1.bf16.msra.mxu0 0
        %4514 = vmatprep.subr.bf16.mxu0 0
        %4515 = vmatpush1.bf16.msra.mxu0 0
        %4516 = vmatprep.subr.bf16.mxu0 0
        %4517 = vmatpush1.bf16.msra.mxu0 0
        %4518 = vmatprep.subr.bf16.mxu0 0
        %4519 = vmatpush1.bf16.msra.mxu0 0
        %4520 = vmatprep.subr.bf16.mxu0 0
        %4521 = vmatpush1.bf16.msra.mxu0 0
        %4522 = vmatprep.subr.bf16.mxu0 0
        %4523 = vmatpush1.bf16.msra.mxu0 0
        %4524 = vmatprep.subr.bf16.mxu0 0
        %4525 = vmatpush1.bf16.msra.mxu0 0
        %4526 = vmatprep.subr.bf16.mxu0 0
        %4527 = vmatpush1.bf16.msra.mxu0 0
        %4528 = vmatprep.subr.bf16.mxu0 0
        %4529 = vmatpush1.bf16.msra.mxu0 0
        %4530 = vmatprep.mubr.bf16.mxu0 0
        %4531 = vmatmul.mubr.bf16.gmra.mrb[0].mxu0 %v4425
        %v4532 = vpop.f32.mrb[0].mxu0
        %v4533 = vadd.f32 0.0, %v4532
        %v4534 = vpop.f32.mrb[0].mxu0
        %v4535 = vadd.f32 0.0, %v4534
        %v4536 = vpop.f32.mrb[0].mxu0
        %v4537 = vpop.f32.mrb[0].mxu0
        %4538 = vdwg.mxu0
        %4539 = vmatprep.subr.bf16.mxu0 %v4339
        %4540 = vmatpush1.bf16.msra.mxu0 %v4338
        %4541 = vmatprep.subr.bf16.mxu0 %v4349
        %4542 = vmatpush1.bf16.msra.mxu0 %v4348
        %4543 = vmatprep.subr.bf16.mxu0 %v4359
        %4544 = vmatpush1.bf16.msra.mxu0 %v4358
        %4545 = vmatprep.subr.bf16.mxu0 %v4369
        %4546 = vmatpush1.bf16.msra.mxu0 %v4368
        %4547 = vmatprep.subr.bf16.mxu0 %v4443
        %4548 = vmatpush1.bf16.msra.mxu0 %v4440
        %4549 = vmatprep.subr.bf16.mxu0 0
        %4550 = vmatpush1.bf16.msra.mxu0 0
        %4551 = vmatprep.subr.bf16.mxu0 0
        %4552 = vmatpush1.bf16.msra.mxu0 0
        %4553 = vmatprep.subr.bf16.mxu0 0
        %4554 = vmatpush1.bf16.msra.mxu0 0
        %4555 = vmatprep.subr.bf16.mxu0 0
        %4556 = vmatpush1.bf16.msra.mxu0 0
        %4557 = vmatprep.subr.bf16.mxu0 0
        %4558 = vmatpush1.bf16.msra.mxu0 0
        %4559 = vmatprep.subr.bf16.mxu0 0
        %4560 = vmatpush1.bf16.msra.mxu0 0
        %4561 = vmatprep.subr.bf16.mxu0 0
        %4562 = vmatpush1.bf16.msra.mxu0 0
        %4563 = vmatprep.subr.bf16.mxu0 0
        %4564 = vmatpush1.bf16.msra.mxu0 0
        %4565 = vmatprep.subr.bf16.mxu0 0
        %4566 = vmatpush1.bf16.msra.mxu0 0
        %4567 = vmatprep.subr.bf16.mxu0 0
        %4568 = vmatpush1.bf16.msra.mxu0 0
        %4569 = vmatprep.subr.bf16.mxu0 0
        %4570 = vmatpush1.bf16.msra.mxu0 0
        %4571 = vmatprep.mubr.bf16.mxu0 0
        %4572 = vmatmul.mubr.bf16.gmra.mrb[0].mxu0 %v4425
        %v4573 = vpop.f32.mrb[0].mxu0
        %v4574 = vadd.f32 0.0, %v4573
        %v4575 = vpop.f32.mrb[0].mxu0
        %v4576 = vadd.f32 0.0, %v4575
        %v4577 = vpop.f32.mrb[0].mxu0
        %v4578 = vpop.f32.mrb[0].mxu0
        %4579 = vdwg.mxu0
        %4580 = vmatprep.subr.bf16.mxu0 %v4341
        %4581 = vmatpush1.bf16.msra.mxu0 %v4340
        %4582 = vmatprep.subr.bf16.mxu0 %v4351
        %4583 = vmatpush1.bf16.msra.mxu0 %v4350
        %4584 = vmatprep.subr.bf16.mxu0 %v4361
        %4585 = vmatpush1.bf16.msra.mxu0 %v4360
        %4586 = vmatprep.subr.bf16.mxu0 %v4371
        %4587 = vmatpush1.bf16.msra.mxu0 %v4370
        %4588 = vmatprep.subr.bf16.mxu0 %v4449
        %4589 = vmatpush1.bf16.msra.mxu0 %v4446
        %4590 = vmatprep.subr.bf16.mxu0 0
        %4591 = vmatpush1.bf16.msra.mxu0 0
        %4592 = vmatprep.subr.bf16.mxu0 0
        %4593 = vmatpush1.bf16.msra.mxu0 0
        %4594 = vmatprep.subr.bf16.mxu0 0
        %4595 = vmatpush1.bf16.msra.mxu0 0
        %4596 = vmatprep.subr.bf16.mxu0 0
        %4597 = vmatpush1.bf16.msra.mxu0 0
        %4598 = vmatprep.subr.bf16.mxu0 0
        %4599 = vmatpush1.bf16.msra.mxu0 0
        %4600 = vmatprep.subr.bf16.mxu0 0
        %4601 = vmatpush1.bf16.msra.mxu0 0
        %4602 = vmatprep.subr.bf16.mxu0 0
        %4603 = vmatpush1.bf16.msra.mxu0 0
        %4604 = vmatprep.subr.bf16.mxu0 0
        %4605 = vmatpush1.bf16.msra.mxu0 0
        %4606 = vmatprep.subr.bf16.mxu0 0
        %4607 = vmatpush1.bf16.msra.mxu0 0
        %4608 = vmatprep.subr.bf16.mxu0 0
        %4609 = vmatpush1.bf16.msra.mxu0 0
        %4610 = vmatprep.subr.bf16.mxu0 0
        %4611 = vmatpush1.bf16.msra.mxu0 0
        %4612 = vmatprep.mubr.bf16.mxu0 0
        %4613 = vmatmul.mubr.bf16.gmra.mrb[0].mxu0 %v4425
        %v4614 = vpop.f32.mrb[0].mxu0
        %v4615 = vadd.f32 0.0, %v4614
        %v4616 = vpop.f32.mrb[0].mxu0
        %v4617 = vadd.f32 0.0, %v4616
        %v4618 = vpop.f32.mrb[0].mxu0
        %v4619 = vpop.f32.mrb[0].mxu0
        %4620 = vdwg.mxu0
        %4621 = vmatprep.subr.bf16.mxu0 %v4343
        %4622 = vmatpush1.bf16.msra.mxu0 %v4342
        %4623 = vmatprep.subr.bf16.mxu0 %v4353
        %4624 = vmatpush1.bf16.msra.mxu0 %v4352
        %4625 = vmatprep.subr.bf16.mxu0 %v4363
        %4626 = vmatpush1.bf16.msra.mxu0 %v4362
        %4627 = vmatprep.subr.bf16.mxu0 %v4373
        %4628 = vmatpush1.bf16.msra.mxu0 %v4372
        %4629 = vmatprep.subr.bf16.mxu0 %v4455
        %4630 = vmatpush1.bf16.msra.mxu0 %v4452
        %4631 = vmatprep.subr.bf16.mxu0 0
        %4632 = vmatpush1.bf16.msra.mxu0 0
        %4633 = vmatprep.subr.bf16.mxu0 0
        %4634 = vmatpush1.bf16.msra.mxu0 0
        %4635 = vmatprep.subr.bf16.mxu0 0
        %4636 = vmatpush1.bf16.msra.mxu0 0
        %4637 = vmatprep.subr.bf16.mxu0 0
        %4638 = vmatpush1.bf16.msra.mxu0 0
        %4639 = vmatprep.subr.bf16.mxu0 0
        %4640 = vmatpush1.bf16.msra.mxu0 0
        %4641 = vmatprep.subr.bf16.mxu0 0
        %4642 = vmatpush1.bf16.msra.mxu0 0
        %4643 = vmatprep.subr.bf16.mxu0 0
        %4644 = vmatpush1.bf16.msra.mxu0 0
        %4645 = vmatprep.subr.bf16.mxu0 0
        %4646 = vmatpush1.bf16.msra.mxu0 0
        %4647 = vmatprep.subr.bf16.mxu0 0
        %4648 = vmatpush1.bf16.msra.mxu0 0
        %4649 = vmatprep.subr.bf16.mxu0 0
        %4650 = vmatpush1.bf16.msra.mxu0 0
        %4651 = vmatprep.subr.bf16.mxu0 0
        %4652 = vmatpush1.bf16.msra.mxu0 0
        %4653 = vmatprep.mubr.bf16.mxu0 0
        %4654 = vmatmul.mubr.bf16.gmra.mrb[0].mxu0 %v4425
        %v4655 = vpop.f32.mrb[0].mxu0
        %v4656 = vadd.f32 0.0, %v4655
        %v4657 = vpop.f32.mrb[0].mxu0
        %v4658 = vadd.f32 0.0, %v4657
        %v4659 = vpop.f32.mrb[0].mxu0
        %v4660 = vpop.f32.mrb[0].mxu0
        %4661 = vdwg.mxu0
        %v4662 = vadd.f32 %v3982, %v4492
        %v4663 = vadd.f32 %v3984, %v4494
        %v4664 = vadd.f32 %v4023, %v4533
        %v4665 = vadd.f32 %v4025, %v4535
        %v4666 = vadd.f32 %v4064, %v4574
        %v4667 = vadd.f32 %v4066, %v4576
        %v4668 = vadd.f32 %v4105, %v4615
        %v4669 = vadd.f32 %v4107, %v4617
        %v4670 = vadd.f32 %v4146, %v4656
        %v4671 = vadd.f32 %v4148, %v4658
        %4672 = vset.pattern.permute.xlu0 3
        %4673 = vperm.xlu0 %4672, %v300
        %v4674 = vpop.permute.xlu0 %4673
        %v4676 = vadd.f32 %v4662, %v4674
        %v4677 = vadd.f32 %v4663, %v4674
        %v4678 = vadd.f32 %v4664, %v4674
        %v4679 = vadd.f32 %v4665, %v4674
        %v4680 = vadd.f32 %v4666, %v4674
        %v4681 = vadd.f32 %v4667, %v4674
        %v4682 = vadd.f32 %v4668, %v4674
        %v4683 = vadd.f32 %v4669, %v4674
        %v4684 = vadd.f32 %v4670, %v4674
        %v4685 = vadd.f32 %v4671, %v4674
        %v4686 = vsel %vm2455, %v4676, 0.0
        %v4687 = vsel %vm2456, %v4677, 0.0
        %v4688 = vsel %vm2457, %v4678, 0.0
        %v4689 = vsel %vm2458, %v4679, 0.0
        %v4690 = vsel %vm2459, %v4680, 0.0
        %v4691 = vsel %vm2460, %v4681, 0.0
        %v4692 = vsel %vm2461, %v4682, 0.0
        %v4693 = vsel %vm2462, %v4683, 0.0
        %v4694 = vsel %vm2463, %v4684, 0.0
        %v4695 = vsel %vm2464, %v4685, 0.0
        %v4696 = vadd.f32 %v4686, %v4687
        %v4697 = vadd.f32 %v4696, %v4688
        %v4698 = vadd.f32 %v4697, %v4689
        %v4699 = vadd.f32 %v4698, %v4690
        %v4700 = vadd.f32 %v4699, %v4691
        %v4701 = vadd.f32 %v4700, %v4692
        %v4702 = vadd.f32 %v4701, %v4693
        %v4703 = vadd.f32 %v4702, %v4694
        %v4704 = vadd.f32 %v4703, %v4695
        %4705 = vadd.xlane.f32.xlu0 %v4704
        %v4706 = vpop.xlane.xlu0 %4705
        %v4707 = vmul.f32 %v4686, %v4686
        %v4708 = vmul.f32 %v4687, %v4687
        %v4709 = vmul.f32 %v4688, %v4688
        %v4710 = vmul.f32 %v4689, %v4689
        %v4711 = vmul.f32 %v4690, %v4690
        %v4712 = vmul.f32 %v4691, %v4691
        %v4713 = vmul.f32 %v4692, %v4692
        %v4714 = vmul.f32 %v4693, %v4693
        %v4715 = vmul.f32 %v4694, %v4694
        %v4716 = vmul.f32 %v4695, %v4695
        %v4717 = vadd.f32 %v4707, %v4708
        %v4718 = vadd.f32 %v4717, %v4709
        %v4719 = vadd.f32 %v4718, %v4710
        %v4720 = vadd.f32 %v4719, %v4711
        %v4721 = vadd.f32 %v4720, %v4712
        %v4722 = vadd.f32 %v4721, %v4713
        %v4723 = vadd.f32 %v4722, %v4714
        %v4724 = vadd.f32 %v4723, %v4715
        %v4725 = vadd.f32 %v4724, %v4716
        %4726 = vadd.xlane.f32.xlu0 %v4725
        %v4727 = vpop.xlane.xlu0 %4726
        %v4728 = vmul.f32 %v4706, 0.001953125
        %v4729 = vmul.f32 %v4727, 0.001953125
        %v4730 = vmul.f32 %v4728, %v4728
        %v4731 = vsub.f32 %v4729, %v4730
        %v4732 = vmax.f32 %v4731, 0.0
        %v4733 = vsub.f32 %v4676, %v4728
        %v4734 = vsub.f32 %v4677, %v4728
        %v4735 = vsub.f32 %v4678, %v4728
        %v4736 = vsub.f32 %v4679, %v4728
        %v4737 = vsub.f32 %v4680, %v4728
        %v4738 = vsub.f32 %v4681, %v4728
        %v4739 = vsub.f32 %v4682, %v4728
        %v4740 = vsub.f32 %v4683, %v4728
        %v4741 = vsub.f32 %v4684, %v4728
        %v4742 = vsub.f32 %v4685, %v4728
        %v4743 = vadd.f32 %v4732, 1e-05
        %v4744 = vrsqrt.pop %v4743
        %v4745 = vmul.f32 %v4733, %v4744
        %v4746 = vmul.f32 %v4734, %v4744
        %v4747 = vmul.f32 %v4735, %v4744
        %v4748 = vmul.f32 %v4736, %v4744
        %v4749 = vmul.f32 %v4737, %v4744
        %v4750 = vmul.f32 %v4738, %v4744
        %v4751 = vmul.f32 %v4739, %v4744
        %v4752 = vmul.f32 %v4740, %v4744
        %v4753 = vmul.f32 %v4741, %v4744
        %v4754 = vmul.f32 %v4742, %v4744
        %4755 = vset.pattern.permute.xlu0 4
        %4756 = vperm.xlu0 %4755, %v300
        %v4757 = vpop.permute.xlu0 %4756
        %v4759 = vmul.f32 %v4745, %v4757
        %v4760 = vmul.f32 %v4746, %v4757
        %v4761 = vmul.f32 %v4747, %v4757
        %v4762 = vmul.f32 %v4748, %v4757
        %v4763 = vmul.f32 %v4749, %v4757
        %v4764 = vmul.f32 %v4750, %v4757
        %v4765 = vmul.f32 %v4751, %v4757
        %v4766 = vmul.f32 %v4752, %v4757
        %v4767 = vmul.f32 %v4753, %v4757
        %v4768 = vmul.f32 %v4754, %v4757
        %4769 = vset.pattern.permute.xlu0 5
        %4770 = vperm.xlu0 %4769, %v300
        %v4771 = vpop.permute.xlu0 %4770
        %v4773 = vadd.f32 %v4759, %v4771
        %v4774 = vadd.f32 %v4760, %v4771
        %v4775 = vadd.f32 %v4761, %v4771
        %v4776 = vadd.f32 %v4762, %v4771
        %v4777 = vadd.f32 %v4763, %v4771
        %v4778 = vadd.f32 %v4764, %v4771
        %v4779 = vadd.f32 %v4765, %v4771
        %v4780 = vadd.f32 %v4766, %v4771
        %v4781 = vadd.f32 %v4767, %v4771
        %v4782 = vadd.f32 %v4768, %v4771
        %vm4783 = vcmp.gt.f32.partialorder %v4773, 0.0
        %vm4784 = vcmp.gt.f32.partialorder %v4774, 0.0
        %vm4785 = vcmp.gt.f32.partialorder %v4775, 0.0
        %vm4786 = vcmp.gt.f32.partialorder %v4776, 0.0
        %vm4787 = vcmp.gt.f32.partialorder %v4777, 0.0
        %vm4788 = vcmp.gt.f32.partialorder %v4778, 0.0
        %vm4789 = vcmp.gt.f32.partialorder %v4779, 0.0
        %vm4790 = vcmp.gt.f32.partialorder %v4780, 0.0
        %vm4791 = vcmp.gt.f32.partialorder %v4781, 0.0
        %vm4792 = vcmp.gt.f32.partialorder %v4782, 0.0
        %v4793 = vmul.f32 %v4773, 0.01
        %v4794 = vmul.f32 %v4774, 0.01
        %v4795 = vmul.f32 %v4775, 0.01
        %v4796 = vmul.f32 %v4776, 0.01
        %v4797 = vmul.f32 %v4777, 0.01
        %v4798 = vmul.f32 %v4778, 0.01
        %v4799 = vmul.f32 %v4779, 0.01
        %v4800 = vmul.f32 %v4780, 0.01
        %v4801 = vmul.f32 %v4781, 0.01
        %v4802 = vmul.f32 %v4782, 0.01
        %v4803 = vsel %vm4783, %v4773, %v4793
        %v4804 = vsel %vm4784, %v4774, %v4794
        %v4805 = vsel %vm4785, %v4775, %v4795
        %v4806 = vsel %vm4786, %v4776, %v4796
        %v4807 = vsel %vm4787, %v4777, %v4797
        %v4808 = vsel %vm4788, %v4778, %v4798
        %v4809 = vsel %vm4789, %v4779, %v4799
        %v4810 = vsel %vm4790, %v4780, %v4800
        %v4811 = vsel %vm4791, %v4781, %v4801
        %v4812 = vsel %vm4792, %v4782, %v4802
        %v4813 = vld [vmem:[%s4] sm:$0xf]
        %v4814 = vld [vmem:[%s258 + $0x4] sm:$0xff]
        %v4815 = vld [vmem:[%s258 + $0xc] sm:$0xff]
        %v4816 = vld [vmem:[%s258 + $0x14] sm:$0xf]
        %4817 = vset.pattern.permute.xlu0 6
        %4818 = vperm.xlu0 %4817, %v300
        %v4819 = vpop.permute.xlu0 %4818
        %v4824 = vcombine.high %v4814, %v4814
        %v4826 = vunpack.c.l.s4 1983009808
        %v4827 = vunpack.c.0.s8 %v4826
        %v4828 = vlaneseq
        %v4829 = vshrl.u32 %v4828, 7
        %v4830 = vsub.s32 %v4827, %v4829
        %v4831 = vrot.slane %v4814, %v4830
        %v4833 = vunpack.c.l.s4 1983009808
        %v4834 = vunpack.c.0.s8 %v4833
        %v4835 = vlaneseq
        %v4836 = vshrl.u32 %v4835, 7
        %v4837 = vsub.s32 %v4834, %v4836
        %v4838 = vrot.slane %v4824, %v4837
        %v4839 = vcombine.high %v4831, %v4831
        %v4840 = vcombine.high %v4838, %v4838
        %v4841 = vcombine.high %v4815, %v4815
        %v4843 = vunpack.c.l.s4 1983009808
        %v4844 = vunpack.c.0.s8 %v4843
        %v4845 = vlaneseq
        %v4846 = vshrl.u32 %v4845, 7
        %v4847 = vsub.s32 %v4844, %v4846
        %v4848 = vrot.slane %v4815, %v4847
        %v4850 = vunpack.c.l.s4 1983009808
        %v4851 = vunpack.c.0.s8 %v4850
        %v4852 = vlaneseq
        %v4853 = vshrl.u32 %v4852, 7
        %v4854 = vsub.s32 %v4851, %v4853
        %v4855 = vrot.slane %v4841, %v4854
        %v4856 = vcombine.high %v4848, %v4848
        %v4857 = vcombine.high %v4855, %v4855
        %v4859 = vunpack.c.l.s4 1983009808
        %v4860 = vunpack.c.0.s8 %v4859
        %v4861 = vlaneseq
        %v4862 = vshrl.u32 %v4861, 7
        %v4863 = vsub.s32 %v4860, %v4862
        %v4864 = vrot.slane %v4816, %v4863
        %v4865 = vcombine.high %v4864, %v4864
        %vm4866 = vcmask 31744
        %v4868 = vsel %vm4866, %v4813, 0
        %v4871 = vsel %vm1399, %v4831, 0
        %v4874 = vsel %vm1399, %v4839, 0
        %v4877 = vsel %vm1399, %v4838, 0
        %v4880 = vsel %vm1399, %v4840, 0
        %v4883 = vsel %vm1399, %v4848, 0
        %v4886 = vsel %vm1399, %v4856, 0
        %v4889 = vsel %vm1399, %v4855, 0
        %v4892 = vsel %vm1399, %v4857, 0
        %v4895 = vsel %vm1399, %v4864, 0
        %v4898 = vsel %vm1399, %v4865, 0
        %4900 = vmatprep.subr.bf16.mxu0 %v4874
        %4901 = vmatpush1.bf16.msra.mxu0 %v4871
        %4902 = vmatprep.subr.bf16.mxu0 0
        %4903 = vmatpush1.bf16.msra.mxu0 0
        %4904 = vmatprep.subr.bf16.mxu0 0
        %4905 = vmatpush1.bf16.msra.mxu0 0
        %4906 = vmatprep.subr.bf16.mxu0 0
        %4907 = vmatpush1.bf16.msra.mxu0 0
        %4908 = vmatprep.subr.bf16.mxu0 0
        %4909 = vmatpush1.bf16.msra.mxu0 0
        %4910 = vmatprep.subr.bf16.mxu0 0
        %4911 = vmatpush1.bf16.msra.mxu0 0
        %4912 = vmatprep.subr.bf16.mxu0 0
        %4913 = vmatpush1.bf16.msra.mxu0 0
        %4914 = vmatprep.subr.bf16.mxu0 0
        %4915 = vmatpush1.bf16.msra.mxu0 0
        %4916 = vmatprep.subr.bf16.mxu0 0
        %4917 = vmatpush1.bf16.msra.mxu0 0
        %4918 = vmatprep.subr.bf16.mxu0 0
        %4919 = vmatpush1.bf16.msra.mxu0 0
        %4920 = vmatprep.subr.bf16.mxu0 0
        %4921 = vmatpush1.bf16.msra.mxu0 0
        %4922 = vmatprep.subr.bf16.mxu0 0
        %4923 = vmatpush1.bf16.msra.mxu0 0
        %4924 = vmatprep.subr.bf16.mxu0 0
        %4925 = vmatpush1.bf16.msra.mxu0 0
        %4926 = vmatprep.subr.bf16.mxu0 0
        %4927 = vmatpush1.bf16.msra.mxu0 0
        %4928 = vmatprep.subr.bf16.mxu0 0
        %4929 = vmatpush1.bf16.msra.mxu0 0
        %4930 = vmatprep.subr.bf16.mxu0 0
        %4931 = vmatpush1.bf16.msra.mxu0 0
        %4932 = vmatprep.mubr.bf16.mxu0 0
        %4933 = vmatmul.mubr.bf16.gmra.mrb[0].mxu0 %v4868
        %v4934 = vpop.f32.mrb[0].mxu0
        %v4935 = vadd.f32 %v4819, %v4934
        %v4936 = vpop.f32.mrb[0].mxu0
        %v4937 = vadd.f32 %v4819, %v4936
        %v4938 = vpop.f32.mrb[0].mxu0
        %v4939 = vpop.f32.mrb[0].mxu0
        %4940 = vdwg.mxu0
        %4941 = vmatprep.subr.bf16.mxu0 %v4880
        %4942 = vmatpush1.bf16.msra.mxu0 %v4877
        %4943 = vmatprep.subr.bf16.mxu0 0
        %4944 = vmatpush1.bf16.msra.mxu0 0
        %4945 = vmatprep.subr.bf16.mxu0 0
        %4946 = vmatpush1.bf16.msra.mxu0 0
        %4947 = vmatprep.subr.bf16.mxu0 0
        %4948 = vmatpush1.bf16.msra.mxu0 0
        %4949 = vmatprep.subr.bf16.mxu0 0
        %4950 = vmatpush1.bf16.msra.mxu0 0
        %4951 = vmatprep.subr.bf16.mxu0 0
        %4952 = vmatpush1.bf16.msra.mxu0 0
        %4953 = vmatprep.subr.bf16.mxu0 0
        %4954 = vmatpush1.bf16.msra.mxu0 0
        %4955 = vmatprep.subr.bf16.mxu0 0
        %4956 = vmatpush1.bf16.msra.mxu0 0
        %4957 = vmatprep.subr.bf16.mxu0 0
        %4958 = vmatpush1.bf16.msra.mxu0 0
        %4959 = vmatprep.subr.bf16.mxu0 0
        %4960 = vmatpush1.bf16.msra.mxu0 0
        %4961 = vmatprep.subr.bf16.mxu0 0
        %4962 = vmatpush1.bf16.msra.mxu0 0
        %4963 = vmatprep.subr.bf16.mxu0 0
        %4964 = vmatpush1.bf16.msra.mxu0 0
        %4965 = vmatprep.subr.bf16.mxu0 0
        %4966 = vmatpush1.bf16.msra.mxu0 0
        %4967 = vmatprep.subr.bf16.mxu0 0
        %4968 = vmatpush1.bf16.msra.mxu0 0
        %4969 = vmatprep.subr.bf16.mxu0 0
        %4970 = vmatpush1.bf16.msra.mxu0 0
        %4971 = vmatprep.subr.bf16.mxu0 0
        %4972 = vmatpush1.bf16.msra.mxu0 0
        %4973 = vmatprep.mubr.bf16.mxu0 0
        %4974 = vmatmul.mubr.bf16.gmra.mrb[0].mxu0 %v4868
        %v4975 = vpop.f32.mrb[0].mxu0
        %v4976 = vadd.f32 %v4819, %v4975
        %v4977 = vpop.f32.mrb[0].mxu0
        %v4978 = vadd.f32 %v4819, %v4977
        %v4979 = vpop.f32.mrb[0].mxu0
        %v4980 = vpop.f32.mrb[0].mxu0
        %4981 = vdwg.mxu0
        %4982 = vmatprep.subr.bf16.mxu0 %v4886
        %4983 = vmatpush1.bf16.msra.mxu0 %v4883
        %4984 = vmatprep.subr.bf16.mxu0 0
        %4985 = vmatpush1.bf16.msra.mxu0 0
        %4986 = vmatprep.subr.bf16.mxu0 0
        %4987 = vmatpush1.bf16.msra.mxu0 0
        %4988 = vmatprep.subr.bf16.mxu0 0
        %4989 = vmatpush1.bf16.msra.mxu0 0
        %4990 = vmatprep.subr.bf16.mxu0 0
        %4991 = vmatpush1.bf16.msra.mxu0 0
        %4992 = vmatprep.subr.bf16.mxu0 0
        %4993 = vmatpush1.bf16.msra.mxu0 0
        %4994 = vmatprep.subr.bf16.mxu0 0
        %4995 = vmatpush1.bf16.msra.mxu0 0
        %4996 = vmatprep.subr.bf16.mxu0 0
        %4997 = vmatpush1.bf16.msra.mxu0 0
        %4998 = vmatprep.subr.bf16.mxu0 0
        %4999 = vmatpush1.bf16.msra.mxu0 0
        %5000 = vmatprep.subr.bf16.mxu0 0
        %5001 = vmatpush1.bf16.msra.mxu0 0
        %5002 = vmatprep.subr.bf16.mxu0 0
        %5003 = vmatpush1.bf16.msra.mxu0 0
        %5004 = vmatprep.subr.bf16.mxu0 0
        %5005 = vmatpush1.bf16.msra.mxu0 0
        %5006 = vmatprep.subr.bf16.mxu0 0
        %5007 = vmatpush1.bf16.msra.mxu0 0
        %5008 = vmatprep.subr.bf16.mxu0 0
        %5009 = vmatpush1.bf16.msra.mxu0 0
        %5010 = vmatprep.subr.bf16.mxu0 0
        %5011 = vmatpush1.bf16.msra.mxu0 0
        %5012 = vmatprep.subr.bf16.mxu0 0
        %5013 = vmatpush1.bf16.msra.mxu0 0
        %5014 = vmatprep.mubr.bf16.mxu0 0
        %5015 = vmatmul.mubr.bf16.gmra.mrb[0].mxu0 %v4868
        %v5016 = vpop.f32.mrb[0].mxu0
        %v5017 = vadd.f32 %v4819, %v5016
        %v5018 = vpop.f32.mrb[0].mxu0
        %v5019 = vadd.f32 %v4819, %v5018
        %v5020 = vpop.f32.mrb[0].mxu0
        %v5021 = vpop.f32.mrb[0].mxu0
        %5022 = vdwg.mxu0
        %5023 = vmatprep.subr.bf16.mxu0 %v4892
        %5024 = vmatpush1.bf16.msra.mxu0 %v4889
        %5025 = vmatprep.subr.bf16.mxu0 0
        %5026 = vmatpush1.bf16.msra.mxu0 0
        %5027 = vmatprep.subr.bf16.mxu0 0
        %5028 = vmatpush1.bf16.msra.mxu0 0
        %5029 = vmatprep.subr.bf16.mxu0 0
        %5030 = vmatpush1.bf16.msra.mxu0 0
        %5031 = vmatprep.subr.bf16.mxu0 0
        %5032 = vmatpush1.bf16.msra.mxu0 0
        %5033 = vmatprep.subr.bf16.mxu0 0
        %5034 = vmatpush1.bf16.msra.mxu0 0
        %5035 = vmatprep.subr.bf16.mxu0 0
        %5036 = vmatpush1.bf16.msra.mxu0 0
        %5037 = vmatprep.subr.bf16.mxu0 0
        %5038 = vmatpush1.bf16.msra.mxu0 0
        %5039 = vmatprep.subr.bf16.mxu0 0
        %5040 = vmatpush1.bf16.msra.mxu0 0
        %5041 = vmatprep.subr.bf16.mxu0 0
        %5042 = vmatpush1.bf16.msra.mxu0 0
        %5043 = vmatprep.subr.bf16.mxu0 0
        %5044 = vmatpush1.bf16.msra.mxu0 0
        %5045 = vmatprep.subr.bf16.mxu0 0
        %5046 = vmatpush1.bf16.msra.mxu0 0
        %5047 = vmatprep.subr.bf16.mxu0 0
        %5048 = vmatpush1.bf16.msra.mxu0 0
        %5049 = vmatprep.subr.bf16.mxu0 0
        %5050 = vmatpush1.bf16.msra.mxu0 0
        %5051 = vmatprep.subr.bf16.mxu0 0
        %5052 = vmatpush1.bf16.msra.mxu0 0
        %5053 = vmatprep.subr.bf16.mxu0 0
        %5054 = vmatpush1.bf16.msra.mxu0 0
        %5055 = vmatprep.mubr.bf16.mxu0 0
        %5056 = vmatmul.mubr.bf16.gmra.mrb[0].mxu0 %v4868
        %v5057 = vpop.f32.mrb[0].mxu0
        %v5058 = vadd.f32 %v4819, %v5057
        %v5059 = vpop.f32.mrb[0].mxu0
        %v5060 = vadd.f32 %v4819, %v5059
        %v5061 = vpop.f32.mrb[0].mxu0
        %v5062 = vpop.f32.mrb[0].mxu0
        %5063 = vdwg.mxu0
        %5064 = vmatprep.subr.bf16.mxu0 %v4898
        %5065 = vmatpush1.bf16.msra.mxu0 %v4895
        %5066 = vmatprep.subr.bf16.mxu0 0
        %5067 = vmatpush1.bf16.msra.mxu0 0
        %5068 = vmatprep.subr.bf16.mxu0 0
        %5069 = vmatpush1.bf16.msra.mxu0 0
        %5070 = vmatprep.subr.bf16.mxu0 0
        %5071 = vmatpush1.bf16.msra.mxu0 0
        %5072 = vmatprep.subr.bf16.mxu0 0
        %5073 = vmatpush1.bf16.msra.mxu0 0
        %5074 = vmatprep.subr.bf16.mxu0 0
        %5075 = vmatpush1.bf16.msra.mxu0 0
        %5076 = vmatprep.subr.bf16.mxu0 0
        %5077 = vmatpush1.bf16.msra.mxu0 0
        %5078 = vmatprep.subr.bf16.mxu0 0
        %5079 = vmatpush1.bf16.msra.mxu0 0
        %5080 = vmatprep.subr.bf16.mxu0 0
        %5081 = vmatpush1.bf16.msra.mxu0 0
        %5082 = vmatprep.subr.bf16.mxu0 0
        %5083 = vmatpush1.bf16.msra.mxu0 0
        %5084 = vmatprep.subr.bf16.mxu0 0
        %5085 = vmatpush1.bf16.msra.mxu0 0
        %5086 = vmatprep.subr.bf16.mxu0 0
        %5087 = vmatpush1.bf16.msra.mxu0 0
        %5088 = vmatprep.subr.bf16.mxu0 0
        %5089 = vmatpush1.bf16.msra.mxu0 0
        %5090 = vmatprep.subr.bf16.mxu0 0
        %5091 = vmatpush1.bf16.msra.mxu0 0
        %5092 = vmatprep.subr.bf16.mxu0 0
        %5093 = vmatpush1.bf16.msra.mxu0 0
        %5094 = vmatprep.subr.bf16.mxu0 0
        %5095 = vmatpush1.bf16.msra.mxu0 0
        %5096 = vmatprep.mubr.bf16.mxu0 0
        %5097 = vmatmul.mubr.bf16.gmra.mrb[0].mxu0 %v4868
        %v5098 = vpop.f32.mrb[0].mxu0
        %v5099 = vadd.f32 %v4819, %v5098
        %v5100 = vpop.f32.mrb[0].mxu0
        %v5101 = vadd.f32 %v4819, %v5100
        %v5102 = vpop.f32.mrb[0].mxu0
        %v5103 = vpop.f32.mrb[0].mxu0
        %5104 = vdwg.mxu0
        %v5105 = vadd.f32 %v4803, %v4935
        %v5106 = vadd.f32 %v4804, %v4937
        %v5107 = vadd.f32 %v4805, %v4976
        %v5108 = vadd.f32 %v4806, %v4978
        %v5109 = vadd.f32 %v4807, %v5017
        %v5110 = vadd.f32 %v4808, %v5019
        %v5111 = vadd.f32 %v4809, %v5058
        %v5112 = vadd.f32 %v4810, %v5060
        %v5113 = vadd.f32 %v4811, %v5099
        %v5114 = vadd.f32 %v4812, %v5101
        %5115 = vst [vmem:[%s294] sm:$0xff] %v5105
        %5116 = vst [vmem:[%s294 + $0x8] sm:$0xff] %v5106
        %5117 = vst [vmem:[%s294 + $0x10] sm:$0xff] %v5107
        %5118 = vst [vmem:[%s294 + $0x18] sm:$0xff] %v5108
        %5119 = vst [vmem:[%s294 + $0x20] sm:$0xff] %v5109
        %5120 = vst [vmem:[%s294 + $0x28] sm:$0xff] %v5110
        %5121 = vst [vmem:[%s294 + $0x30] sm:$0xff] %v5111
        %5122 = vst [vmem:[%s294 + $0x38] sm:$0xff] %v5112
        %5123 = vst [vmem:[%s294 + $0x40] sm:$0xff] %v5113
        %5124 = vst [vmem:[%s294 + $0x48] sm:$0xff] %v5114
        %s5125 = sand.u32 %s163, 1
        %s5126 = scalar_lea.sflag [#allocation6], %s5125
        %s5127 = sand.u32 %s163, 1
        %s5128 = smul.addr %s5127, 80
        %s5129 = scalar_lea.vmem [#allocation10], %s5128
        // Predicated region
        $region57: #{tpu_custom_call.1} parent=43 // pred_check
          %p5130 = pneg %p173
        $region58: #{tpu_custom_call.1} parent=43 // pred_check_branch
          %5132 = sbr.rel (%p5130) target = $region60
        $region59: #{tpu_custom_call.1} parent=43 // pred_region
          %s5134 = ssub.s32 1280, 1280
          %5135 = vsyncadd %s5126, %s5134
          %s5136 = smul.addr %s24, 10
          %s5137 = smul.addr %s5136, 128
          %s5138 = scalar_lea.hbm %s6, %s5137
          %s5140 = sshll.u32 %s5129, 4
          %s5141 = int_to_ptr.vmem [resolvable:$true] %s5140
          %5143 = dma.vmem_to_hbm [thread:$0]  %s5141, 1280, %s5138, %s5126
        $region60: #{tpu_custom_call.1} parent=43 // pred_fallthru
          _
      $region44: #{tpu_custom_call.1} parent=5 // pred_fallthru
        _
      %p5144 = scmp.le.s32.totalorder 2, %s19
      // Predicated region
      $region61: #{tpu_custom_call.1} parent=5 // pred_check
        %p5145 = pneg %p5144
      $region62: #{tpu_custom_call.1} parent=5 // pred_check_branch
        %5147 = sbr.rel (%p5145) target = $region64
      $region63: #{tpu_custom_call.1} parent=5 // pred_region
        %s5148 = ssub.s32 %s19, 2
        // Predicated region
        $region65: #{tpu_custom_call.1} parent=63 // pred_check
          %p5149 = pneg %p179
        $region66: #{tpu_custom_call.1} parent=63 // pred_check_branch
          %5151 = sbr.rel (%p5149) target = $region68
        $region67: #{tpu_custom_call.1} parent=63 // pred_region
          %s5152 = sand.u32 %s164, 1
          %s5153 = scalar_lea.sflag [#allocation6], %s5152
          %s5154 = sand.u32 %s164, 1
          %s5155 = smul.addr %s5154, 80
          %s5156 = scalar_lea.vmem [#allocation10], %s5155
          %5157 = dma.done %s5153, 1280
        $region68: #{tpu_custom_call.1} parent=63 // pred_fallthru
          _
      $region64: #{tpu_custom_call.1} parent=5 // pred_fallthru
        _
    $region6: #{tpu_custom_call.1} parent=1 // loop_footer
      %s23 = sadd.s32 1, %s19
    $region7: #{tpu_custom_call.1} parent=1 // loop_footer_branch
      %18 = sbr.rel target = $region3
    $region8: #{tpu_custom_call.1} parent=1 // loop_exit
      _
    %5158 = vsyncpa [#allocation5], 1
    %s5159 = scalar_lea.sflag [#allocation5], 1
    %5160 = vsyncpa %s5159, 1
    %5161 = vsyncpa [#allocation8], 1
    %5162 = vsyncpa [#allocation6], 1
    %s5163 = scalar_lea.sflag [#allocation6], 1
    %5164 = vsyncpa %s5163, 1

</llo_original>
